<compile_context>
chip_gen: v6e
topology: v6e:2x2x1
jax: 0.10.0
libtpu: 0.0.40
codegen_flags: <defaults>
</compile_context>

<pallas_src>
import jax
import jax.numpy as jnp
from jax.scipy.linalg import block_diag
from jax.experimental import pallas as pl
from jax.experimental.pallas import tpu as pltpu

_INV_SQRT2 = 0.7071067811865476


def _gelu(x):
    # exact GELU, matches torch.nn.GELU(approximate='none')
    return 0.5 * x * (1.0 + jax.lax.erf(x * _INV_SQRT2))


def make_netl_kernel(n_nodes, layers, hidden, edge_softmax=True):
    N = n_nodes
    H = hidden

    def kernel(h_ref, bases_ref, mflat_ref, seg_ref, srcind_ref, *rest):
        *p_refs, out_ref = rest
        it = iter(p_refs)

        def lin(x):
            # Load weights at point of use (bounds vreg live ranges, avoids
            # keeping ~26 mostly-empty weight vregs alive across the kernel).
            w = next(it)[...]            # [in, out] (pre-transposed torch weight)
            b = next(it)[...]            # [1, out]
            return jnp.dot(x, w, preferred_element_type=jnp.float32) + b

        h = h_ref[...]                   # [N, Din]
        bflat = bases_ref[...]           # [N*N, B]   row j*N + i == edge (i -> j)
        mflat = mflat_ref[...]           # [N*N, 1]   per-edge mask (dst-major)
        seg = seg_ref[...]               # [N, N*N]   seg[j, j*N+i] = 1
        srcind = srcind_ref[...]         # [N*N, N]   srcind[j*N+i, i] = 1

        # ---- lin0 ----
        x = lin(h)                       # [N, H]

        # ---- edge_softmax over incoming edges of each destination (fused) ----
        if edge_softmax:
            lg = jnp.where(mflat > 0, bflat, jnp.float32(-1e30))
            lg3 = lg.reshape(N, N, -1)               # [dst, src, B]
            m3 = mflat.reshape(N, N, 1)              # [dst, src, 1]
            mx = jnp.max(lg3, axis=1, keepdims=True)
            e = jnp.exp(lg3 - mx) * m3
            s = jnp.sum(e, axis=1, keepdims=True)    # [dst, 1, B]
            s_safe = jnp.maximum(s, jnp.float32(1e-30))  # guard isolated dsts
            inv = pl.reciprocal(s_safe, approx=True)     # EUP slot (free-ish)
            inv = inv * (2.0 - s_safe * inv)             # one Newton step
            bflat = (e * inv).reshape(N * N, -1)         # [N*N, B]

        # ---- filter_encoder: layer-invariant -> hoisted and batched across
        #      layers (stage-1 weights concatenated, stage-2 block-diagonal) ----
        vcat = _gelu(lin(bflat))         # [N*N, L*H]
        vcat = _gelu(lin(vcat))          # [N*N, L*H]
        vcat = vcat * mflat              # mask non-edges once

        # ---- ConvL layers ----
        for l in range(layers):
            # pre_ffn: Linear + GELU   (preffn_dropout = identity in eval)
            px = _gelu(lin(x))                                   # [N, H]
            # tile px over destination groups via MXU: pxt[j*N+i] = px[i]
            pxt = jnp.dot(srcind, px, preferred_element_type=jnp.float32)
            # per-edge message (non-edges already zeroed in vcat)
            vm = vcat[:, l * H:(l + 1) * H] * pxt                # [N*N, H]
            # segment-sum per destination on the MXU
            aggr = jnp.dot(seg, vm, preferred_element_type=jnp.float32)  # [N, H]
            x = x + aggr
            # ffn: Linear+GELU, Linear+GELU          (ffn_dropout = identity)
            y = _gelu(lin(x))
            y = _gelu(lin(y))
            x = x + y

        # ---- JumpingKnowledge('L') -> last layer output (see TODO above) ----
        # ---- SumPooling over the (single) graph ----
        hg = jnp.sum(x, axis=0, keepdims=True)       # [1, H]
        # ---- lin1 + nonlinear (+ final_drop = identity) + lin2 ----
        hg = _gelu(lin(hg))
        out_ref[...] = lin(hg)                       # [1, out_dim]

    return kernel


def _prep_params(params, layers):
    """Reorder / batch the raw per-layer params for the kernel.

    Raw order (from init_params): lin0, then per layer
    [pre_ffn, fe1, fe2, ffn1, ffn2], then lin1, lin2.
    Kernel order: lin0, batched fe1 (concat), batched fe2 (block-diag),
    per layer [pre_ffn, ffn1, ffn2], lin1, lin2.
    """
    it = iter(params)

    def take():
        return next(it), next(it)

    W0, b0 = take()
    fe1_w, fe1_b, fe2_w, fe2_b, per_layer = [], [], [], [], []
    for _ in range(layers):
        Wp, bp = take()
        Wf1, bf1 = take()
        Wf2, bf2 = take()
        Wa, ba = take()
        Wb, bb = take()
        fe1_w.append(Wf1); fe1_b.append(bf1)
        fe2_w.append(Wf2); fe2_b.append(bf2)
        per_layer += [Wp, bp, Wa, ba, Wb, bb]
    W1, b1 = take()
    W2, b2 = take()
    Wfe1 = jnp.concatenate(fe1_w, axis=1)            # [B, L*H]
    bfe1 = jnp.concatenate(fe1_b, axis=1)            # [1, L*H]
    Wfe2 = block_diag(*fe2_w)                        # [L*H, L*H]
    bfe2 = jnp.concatenate(fe2_b, axis=1)            # [1, L*H]
    return [W0, b0, Wfe1, bfe1, Wfe2, bfe2] + per_layer + [W1, b1, W2, b2]


def netl_forward(h, bases_flat, mask_ds, params, *, layers, edge_softmax=True):
    N = h.shape[0]
    hidden = params[0].shape[1]
    out_dim = params[-1].shape[1]
    prepared = _prep_params(params, layers)

    # Host-side constants: per-edge mask (dst-major) and indicator matrices so
    # the in-kernel segment sum / broadcast run on the MXU.
    mflat = mask_ds.reshape(N * N, 1)
    seg = jnp.kron(jnp.eye(N, dtype=jnp.float32), jnp.ones((1, N), jnp.float32))
    srcind = jnp.tile(jnp.eye(N, dtype=jnp.float32), (N, 1))

    kernel = make_netl_kernel(N, layers, hidden, edge_softmax)
    args = (h, bases_flat, mflat, seg, srcind, *prepared)
    return pl.pallas_call(
        kernel,
        out_shape=jax.ShapeDtypeStruct((1, out_dim), jnp.float32),
        in_specs=[pl.BlockSpec(memory_space=pltpu.MemorySpace.VMEM)] * len(args),
        out_specs=pl.BlockSpec(memory_space=pltpu.MemorySpace.VMEM),
    )(*args)


def init_params(key, input_dim, hidden, num_basis, output_dim, layers):
    """Deterministic Linear params, stored as (W^T [in,out], b [1,out])."""
    dims = [(input_dim, hidden)]                              # lin0
    for _ in range(layers):
        dims += [(hidden, hidden),                            # pre_ffn
                 (num_basis, hidden), (hidden, hidden),       # filter_encoder
                 (hidden, hidden), (hidden, hidden)]          # ffn
    dims += [(hidden, hidden), (hidden, output_dim)]          # lin1, lin2
    params = []
    keys = jax.random.split(key, len(dims))
    for k, (fi, fo) in zip(keys, dims):
        kw, kb = jax.random.split(k)
        bound = 1.0 / float(fi) ** 0.5
        params.append(jax.random.uniform(kw, (fi, fo), jnp.float32, -bound, bound))
        params.append(jax.random.uniform(kb, (1, fo), jnp.float32, -bound, bound))
    return params


def netl_reference(h, bases_flat, mask_ds, params, *, layers, edge_softmax=True):
    """Pure-JAX reference of the same dense-graph forward (for validation)."""
    N = h.shape[0]
    it = iter(params)

    def lin(x):
        w = next(it)
        b = next(it)
        return x @ w + b

    x = lin(h)
    bflat = bases_flat
    if edge_softmax:
        b3 = bases_flat.reshape(N, N, -1)            # [dst, src, B]
        m3 = mask_ds[:, :, None]                     # [dst, src, 1]
        lg = jnp.where(m3 > 0, b3, -1e30)
        mx = jnp.max(lg, axis=1, keepdims=True)
        e = jnp.exp(lg - mx) * m3
        bflat = (e / jnp.sum(e, axis=1, keepdims=True)).reshape(N * N, -1)
    for _ in range(layers):
        px = _gelu(lin(x))
        v = _gelu(lin(bflat))
        v = _gelu(lin(v))
        v3 = v.reshape(N, N, -1)                     # [dst, src, H]
        aggr = jnp.sum(px[None, :, :] * v3 * mask_ds[:, :, None], axis=1)
        x = x + aggr
        y = _gelu(lin(x))
        y = _gelu(lin(y))
        x = x + y
    hg = jnp.sum(x, axis=0, keepdims=True)
    hg = _gelu(lin(hg))
    return lin(hg)


if __name__ == "__main__":
    N, input_dim, hidden, num_basis, output_dim, layers = 16, 16, 32, 8, 4, 2

    key = jax.random.PRNGKey(0)
    k_h, k_b, k_m, k_p = jax.random.split(key, 4)

    h = jax.random.normal(k_h, (N, input_dim), jnp.float32)
    # dense edge features, indexed [dst, src, basis]
    bases_dense = jax.random.normal(k_b, (N, N, num_basis), jnp.float32)
    # random adjacency + self loops; mask_ds[dst, src]
    mask_ds = (jax.random.uniform(k_m, (N, N)) < 0.3).astype(jnp.float32)
    mask_ds = jnp.maximum(mask_ds, jnp.eye(N, dtype=jnp.float32))

    bases_flat = bases_dense.reshape(N * N, num_basis)   # dst-major rows

    params = init_params(k_p, input_dim, hidden, num_basis, output_dim, layers)

    out = netl_forward(h, bases_flat, mask_ds, params, layers=layers)
    out = jax.block_until_ready(out)

    ref = netl_reference(h, bases_flat, mask_ds, params, layers=layers)
    assert out.shape == (1, output_dim)
    assert jnp.allclose(out, ref, rtol=1e-3, atol=1e-3), (out, ref)

    print("KERNEL_OK")
</pallas_src>

<mosaic_0001>
module attributes {stable_mosaic.version = 11 : i64} {
  func.func @kernel(%arg0: memref<16x16xf32, #tpu.memory_space<vmem>>, %arg1: memref<256x8xf32, #tpu.memory_space<vmem>>, %arg2: memref<256x1xf32, #tpu.memory_space<vmem>>, %arg3: memref<16x256xf32, #tpu.memory_space<vmem>>, %arg4: memref<256x16xf32, #tpu.memory_space<vmem>>, %arg5: memref<16x32xf32, #tpu.memory_space<vmem>>, %arg6: memref<1x32xf32, #tpu.memory_space<vmem>>, %arg7: memref<8x64xf32, #tpu.memory_space<vmem>>, %arg8: memref<1x64xf32, #tpu.memory_space<vmem>>, %arg9: memref<64x64xf32, #tpu.memory_space<vmem>>, %arg10: memref<1x64xf32, #tpu.memory_space<vmem>>, %arg11: memref<32x32xf32, #tpu.memory_space<vmem>>, %arg12: memref<1x32xf32, #tpu.memory_space<vmem>>, %arg13: memref<32x32xf32, #tpu.memory_space<vmem>>, %arg14: memref<1x32xf32, #tpu.memory_space<vmem>>, %arg15: memref<32x32xf32, #tpu.memory_space<vmem>>, %arg16: memref<1x32xf32, #tpu.memory_space<vmem>>, %arg17: memref<32x32xf32, #tpu.memory_space<vmem>>, %arg18: memref<1x32xf32, #tpu.memory_space<vmem>>, %arg19: memref<32x32xf32, #tpu.memory_space<vmem>>, %arg20: memref<1x32xf32, #tpu.memory_space<vmem>>, %arg21: memref<32x32xf32, #tpu.memory_space<vmem>>, %arg22: memref<1x32xf32, #tpu.memory_space<vmem>>, %arg23: memref<32x32xf32, #tpu.memory_space<vmem>>, %arg24: memref<1x32xf32, #tpu.memory_space<vmem>>, %arg25: memref<32x4xf32, #tpu.memory_space<vmem>>, %arg26: memref<1x4xf32, #tpu.memory_space<vmem>>, %arg27: memref<1x4xf32, #tpu.memory_space<vmem>>) attributes {dimension_semantics = [], scalar_prefetch = 0 : i64, scratch_operands = 0 : i64, tpu.core_type = #tpu.core_type<tc>} {
    %c0 = arith.constant 0 : index
    %c0_0 = arith.constant 0 : index
    %0 = vector.load %arg0[%c0, %c0_0] : memref<16x16xf32, #tpu.memory_space<vmem>>, vector<16x16xf32>
    %c0_1 = arith.constant 0 : index
    %c0_2 = arith.constant 0 : index
    %1 = vector.load %arg1[%c0_1, %c0_2] : memref<256x8xf32, #tpu.memory_space<vmem>>, vector<256x8xf32>
    %c0_3 = arith.constant 0 : index
    %c0_4 = arith.constant 0 : index
    %2 = vector.load %arg2[%c0_3, %c0_4] : memref<256x1xf32, #tpu.memory_space<vmem>>, vector<256x1xf32>
    %c0_5 = arith.constant 0 : index
    %c0_6 = arith.constant 0 : index
    %3 = vector.load %arg3[%c0_5, %c0_6] : memref<16x256xf32, #tpu.memory_space<vmem>>, vector<16x256xf32>
    %c0_7 = arith.constant 0 : index
    %c0_8 = arith.constant 0 : index
    %4 = vector.load %arg4[%c0_7, %c0_8] : memref<256x16xf32, #tpu.memory_space<vmem>>, vector<256x16xf32>
    %c0_9 = arith.constant 0 : index
    %c0_10 = arith.constant 0 : index
    %5 = vector.load %arg5[%c0_9, %c0_10] : memref<16x32xf32, #tpu.memory_space<vmem>>, vector<16x32xf32>
    %c0_11 = arith.constant 0 : index
    %c0_12 = arith.constant 0 : index
    %6 = vector.load %arg6[%c0_11, %c0_12] : memref<1x32xf32, #tpu.memory_space<vmem>>, vector<1x32xf32>
    %cst = arith.constant dense<0.000000e+00> : vector<16x32xf32>
    %7 = tpu.matmul %0, %5, %cst {dimension_numbers = #tpu.dot_dimension_numbers<[1], [0], [0], [1], [0, 0, 1, 1], [], []>} : vector<16x16xf32>, vector<16x32xf32>, vector<16x32xf32> -> vector<16x32xf32>
    %8 = vector.broadcast %6 : vector<1x32xf32> to vector<16x32xf32>
    %9 = arith.addf %7, %8 : vector<16x32xf32>
    %cst_13 = arith.constant 0.000000e+00 : f32
    %10 = vector.broadcast %cst_13 : f32 to vector<256x1xf32>
    %11 = arith.cmpf ogt, %2, %10 : vector<256x1xf32>
    %cst_14 = arith.constant -1.000000e+30 : f32
    %12 = vector.shape_cast %11 : vector<256x1xi1> to vector<256x1xi1>
    %13 = vector.broadcast %12 : vector<256x1xi1> to vector<256x8xi1>
    %14 = vector.broadcast %cst_14 : f32 to vector<256x8xf32>
    %15 = arith.select %13, %1, %14 : vector<256x8xi1>, vector<256x8xf32>
    %16 = vector.shape_cast %15 : vector<256x8xf32> to vector<16x16x8xf32>
    %17 = vector.shape_cast %2 : vector<256x1xf32> to vector<16x16x1xf32>
    %cst_15 = arith.constant dense<0xFF800000> : vector<16x8xf32>
    %18 = vector.multi_reduction <maximumf>, %16, %cst_15 [1] : vector<16x16x8xf32> to vector<16x8xf32>
    %19 = vector.shape_cast %18 : vector<16x8xf32> to vector<16x1x8xf32>
    %20 = vector.broadcast %19 : vector<16x1x8xf32> to vector<16x16x8xf32>
    %21 = arith.subf %16, %20 : vector<16x16x8xf32>
    %22 = math.exp %21 : vector<16x16x8xf32>
    %23 = vector.broadcast %17 : vector<16x16x1xf32> to vector<16x16x8xf32>
    %24 = arith.mulf %22, %23 : vector<16x16x8xf32>
    %cst_16 = arith.constant dense<0.000000e+00> : vector<16x8xf32>
    %25 = vector.multi_reduction <add>, %24, %cst_16 [1] : vector<16x16x8xf32> to vector<16x8xf32>
    %26 = vector.shape_cast %25 : vector<16x8xf32> to vector<16x1x8xf32>
    %cst_17 = arith.constant 1.000000e-30 : f32
    %27 = vector.broadcast %cst_17 : f32 to vector<16x1x8xf32>
    %28 = arith.maximumf %26, %27 : vector<16x1x8xf32>
    %29 = tpu.reciprocal %28 {approx = true} : vector<16x1x8xf32> -> vector<16x1x8xf32>
    %30 = arith.mulf %28, %29 : vector<16x1x8xf32>
    %cst_18 = arith.constant 2.000000e+00 : f32
    %31 = vector.broadcast %cst_18 : f32 to vector<16x1x8xf32>
    %32 = arith.subf %31, %30 : vector<16x1x8xf32>
    %33 = arith.mulf %29, %32 : vector<16x1x8xf32>
    %34 = vector.broadcast %33 : vector<16x1x8xf32> to vector<16x16x8xf32>
    %35 = arith.mulf %24, %34 : vector<16x16x8xf32>
    %36 = vector.shape_cast %35 : vector<16x16x8xf32> to vector<256x8xf32>
    %c0_19 = arith.constant 0 : index
    %c0_20 = arith.constant 0 : index
    %37 = vector.load %arg7[%c0_19, %c0_20] : memref<8x64xf32, #tpu.memory_space<vmem>>, vector<8x64xf32>
    %c0_21 = arith.constant 0 : index
    %c0_22 = arith.constant 0 : index
    %38 = vector.load %arg8[%c0_21, %c0_22] : memref<1x64xf32, #tpu.memory_space<vmem>>, vector<1x64xf32>
    %cst_23 = arith.constant dense<0.000000e+00> : vector<256x64xf32>
    %39 = tpu.matmul %36, %37, %cst_23 {dimension_numbers = #tpu.dot_dimension_numbers<[1], [0], [0], [1], [0, 0, 1, 1], [], []>} : vector<256x8xf32>, vector<8x64xf32>, vector<256x64xf32> -> vector<256x64xf32>
    %40 = vector.broadcast %38 : vector<1x64xf32> to vector<256x64xf32>
    %41 = arith.addf %39, %40 : vector<256x64xf32>
    %cst_24 = arith.constant 5.000000e-01 : f32
    %42 = vector.broadcast %cst_24 : f32 to vector<256x64xf32>
    %43 = arith.mulf %42, %41 : vector<256x64xf32>
    %cst_25 = arith.constant 0.707106769 : f32
    %44 = vector.broadcast %cst_25 : f32 to vector<256x64xf32>
    %45 = arith.mulf %41, %44 : vector<256x64xf32>
    %46 = math.erf %45 : vector<256x64xf32>
    %cst_26 = arith.constant 1.000000e+00 : f32
    %47 = vector.broadcast %cst_26 : f32 to vector<256x64xf32>
    %48 = arith.addf %47, %46 : vector<256x64xf32>
    %49 = arith.mulf %43, %48 : vector<256x64xf32>
    %c0_27 = arith.constant 0 : index
    %c0_28 = arith.constant 0 : index
    %50 = vector.load %arg9[%c0_27, %c0_28] : memref<64x64xf32, #tpu.memory_space<vmem>>, vector<64x64xf32>
    %c0_29 = arith.constant 0 : index
    %c0_30 = arith.constant 0 : index
    %51 = vector.load %arg10[%c0_29, %c0_30] : memref<1x64xf32, #tpu.memory_space<vmem>>, vector<1x64xf32>
    %cst_31 = arith.constant dense<0.000000e+00> : vector<256x64xf32>
    %52 = tpu.matmul %49, %50, %cst_31 {dimension_numbers = #tpu.dot_dimension_numbers<[1], [0], [0], [1], [0, 0, 1, 1], [], []>} : vector<256x64xf32>, vector<64x64xf32>, vector<256x64xf32> -> vector<256x64xf32>
    %53 = vector.broadcast %51 : vector<1x64xf32> to vector<256x64xf32>
    %54 = arith.addf %52, %53 : vector<256x64xf32>
    %cst_32 = arith.constant 5.000000e-01 : f32
    %55 = vector.broadcast %cst_32 : f32 to vector<256x64xf32>
    %56 = arith.mulf %55, %54 : vector<256x64xf32>
    %cst_33 = arith.constant 0.707106769 : f32
    %57 = vector.broadcast %cst_33 : f32 to vector<256x64xf32>
    %58 = arith.mulf %54, %57 : vector<256x64xf32>
    %59 = math.erf %58 : vector<256x64xf32>
    %cst_34 = arith.constant 1.000000e+00 : f32
    %60 = vector.broadcast %cst_34 : f32 to vector<256x64xf32>
    %61 = arith.addf %60, %59 : vector<256x64xf32>
    %62 = arith.mulf %56, %61 : vector<256x64xf32>
    %63 = vector.broadcast %2 : vector<256x1xf32> to vector<256x64xf32>
    %64 = arith.mulf %62, %63 : vector<256x64xf32>
    %c0_35 = arith.constant 0 : index
    %c0_36 = arith.constant 0 : index
    %65 = vector.load %arg11[%c0_35, %c0_36] : memref<32x32xf32, #tpu.memory_space<vmem>>, vector<32x32xf32>
    %c0_37 = arith.constant 0 : index
    %c0_38 = arith.constant 0 : index
    %66 = vector.load %arg12[%c0_37, %c0_38] : memref<1x32xf32, #tpu.memory_space<vmem>>, vector<1x32xf32>
    %cst_39 = arith.constant dense<0.000000e+00> : vector<16x32xf32>
    %67 = tpu.matmul %9, %65, %cst_39 {dimension_numbers = #tpu.dot_dimension_numbers<[1], [0], [0], [1], [0, 0, 1, 1], [], []>} : vector<16x32xf32>, vector<32x32xf32>, vector<16x32xf32> -> vector<16x32xf32>
    %68 = vector.broadcast %66 : vector<1x32xf32> to vector<16x32xf32>
    %69 = arith.addf %67, %68 : vector<16x32xf32>
    %cst_40 = arith.constant 5.000000e-01 : f32
    %70 = vector.broadcast %cst_40 : f32 to vector<16x32xf32>
    %71 = arith.mulf %70, %69 : vector<16x32xf32>
    %cst_41 = arith.constant 0.707106769 : f32
    %72 = vector.broadcast %cst_41 : f32 to vector<16x32xf32>
    %73 = arith.mulf %69, %72 : vector<16x32xf32>
    %74 = math.erf %73 : vector<16x32xf32>
    %cst_42 = arith.constant 1.000000e+00 : f32
    %75 = vector.broadcast %cst_42 : f32 to vector<16x32xf32>
    %76 = arith.addf %75, %74 : vector<16x32xf32>
    %77 = arith.mulf %71, %76 : vector<16x32xf32>
    %cst_43 = arith.constant dense<0.000000e+00> : vector<256x32xf32>
    %78 = tpu.matmul %4, %77, %cst_43 {dimension_numbers = #tpu.dot_dimension_numbers<[1], [0], [0], [1], [0, 0, 1, 1], [], []>} : vector<256x16xf32>, vector<16x32xf32>, vector<256x32xf32> -> vector<256x32xf32>
    %79 = vector.extract_strided_slice %64 {offsets = [0, 0], sizes = [256, 32], strides = [1, 1]} : vector<256x64xf32> to vector<256x32xf32>
    %80 = arith.mulf %79, %78 : vector<256x32xf32>
    %cst_44 = arith.constant dense<0.000000e+00> : vector<16x32xf32>
    %81 = tpu.matmul %3, %80, %cst_44 {dimension_numbers = #tpu.dot_dimension_numbers<[1], [0], [0], [1], [0, 0, 1, 1], [], []>} : vector<16x256xf32>, vector<256x32xf32>, vector<16x32xf32> -> vector<16x32xf32>
    %82 = arith.addf %9, %81 : vector<16x32xf32>
    %c0_45 = arith.constant 0 : index
    %c0_46 = arith.constant 0 : index
    %83 = vector.load %arg13[%c0_45, %c0_46] : memref<32x32xf32, #tpu.memory_space<vmem>>, vector<32x32xf32>
    %c0_47 = arith.constant 0 : index
    %c0_48 = arith.constant 0 : index
    %84 = vector.load %arg14[%c0_47, %c0_48] : memref<1x32xf32, #tpu.memory_space<vmem>>, vector<1x32xf32>
    %cst_49 = arith.constant dense<0.000000e+00> : vector<16x32xf32>
    %85 = tpu.matmul %82, %83, %cst_49 {dimension_numbers = #tpu.dot_dimension_numbers<[1], [0], [0], [1], [0, 0, 1, 1], [], []>} : vector<16x32xf32>, vector<32x32xf32>, vector<16x32xf32> -> vector<16x32xf32>
    %86 = vector.broadcast %84 : vector<1x32xf32> to vector<16x32xf32>
    %87 = arith.addf %85, %86 : vector<16x32xf32>
    %cst_50 = arith.constant 5.000000e-01 : f32
    %88 = vector.broadcast %cst_50 : f32 to vector<16x32xf32>
    %89 = arith.mulf %88, %87 : vector<16x32xf32>
    %cst_51 = arith.constant 0.707106769 : f32
    %90 = vector.broadcast %cst_51 : f32 to vector<16x32xf32>
    %91 = arith.mulf %87, %90 : vector<16x32xf32>
    %92 = math.erf %91 : vector<16x32xf32>
    %cst_52 = arith.constant 1.000000e+00 : f32
    %93 = vector.broadcast %cst_52 : f32 to vector<16x32xf32>
    %94 = arith.addf %93, %92 : vector<16x32xf32>
    %95 = arith.mulf %89, %94 : vector<16x32xf32>
    %c0_53 = arith.constant 0 : index
    %c0_54 = arith.constant 0 : index
    %96 = vector.load %arg15[%c0_53, %c0_54] : memref<32x32xf32, #tpu.memory_space<vmem>>, vector<32x32xf32>
    %c0_55 = arith.constant 0 : index
    %c0_56 = arith.constant 0 : index
    %97 = vector.load %arg16[%c0_55, %c0_56] : memref<1x32xf32, #tpu.memory_space<vmem>>, vector<1x32xf32>
    %cst_57 = arith.constant dense<0.000000e+00> : vector<16x32xf32>
    %98 = tpu.matmul %95, %96, %cst_57 {dimension_numbers = #tpu.dot_dimension_numbers<[1], [0], [0], [1], [0, 0, 1, 1], [], []>} : vector<16x32xf32>, vector<32x32xf32>, vector<16x32xf32> -> vector<16x32xf32>
    %99 = vector.broadcast %97 : vector<1x32xf32> to vector<16x32xf32>
    %100 = arith.addf %98, %99 : vector<16x32xf32>
    %cst_58 = arith.constant 5.000000e-01 : f32
    %101 = vector.broadcast %cst_58 : f32 to vector<16x32xf32>
    %102 = arith.mulf %101, %100 : vector<16x32xf32>
    %cst_59 = arith.constant 0.707106769 : f32
    %103 = vector.broadcast %cst_59 : f32 to vector<16x32xf32>
    %104 = arith.mulf %100, %103 : vector<16x32xf32>
    %105 = math.erf %104 : vector<16x32xf32>
    %cst_60 = arith.constant 1.000000e+00 : f32
    %106 = vector.broadcast %cst_60 : f32 to vector<16x32xf32>
    %107 = arith.addf %106, %105 : vector<16x32xf32>
    %108 = arith.mulf %102, %107 : vector<16x32xf32>
    %109 = arith.addf %82, %108 : vector<16x32xf32>
    %c0_61 = arith.constant 0 : index
    %c0_62 = arith.constant 0 : index
    %110 = vector.load %arg17[%c0_61, %c0_62] : memref<32x32xf32, #tpu.memory_space<vmem>>, vector<32x32xf32>
    %c0_63 = arith.constant 0 : index
    %c0_64 = arith.constant 0 : index
    %111 = vector.load %arg18[%c0_63, %c0_64] : memref<1x32xf32, #tpu.memory_space<vmem>>, vector<1x32xf32>
    %cst_65 = arith.constant dense<0.000000e+00> : vector<16x32xf32>
    %112 = tpu.matmul %109, %110, %cst_65 {dimension_numbers = #tpu.dot_dimension_numbers<[1], [0], [0], [1], [0, 0, 1, 1], [], []>} : vector<16x32xf32>, vector<32x32xf32>, vector<16x32xf32> -> vector<16x32xf32>
    %113 = vector.broadcast %111 : vector<1x32xf32> to vector<16x32xf32>
    %114 = arith.addf %112, %113 : vector<16x32xf32>
    %cst_66 = arith.constant 5.000000e-01 : f32
    %115 = vector.broadcast %cst_66 : f32 to vector<16x32xf32>
    %116 = arith.mulf %115, %114 : vector<16x32xf32>
    %cst_67 = arith.constant 0.707106769 : f32
    %117 = vector.broadcast %cst_67 : f32 to vector<16x32xf32>
    %118 = arith.mulf %114, %117 : vector<16x32xf32>
    %119 = math.erf %118 : vector<16x32xf32>
    %cst_68 = arith.constant 1.000000e+00 : f32
    %120 = vector.broadcast %cst_68 : f32 to vector<16x32xf32>
    %121 = arith.addf %120, %119 : vector<16x32xf32>
    %122 = arith.mulf %116, %121 : vector<16x32xf32>
    %cst_69 = arith.constant dense<0.000000e+00> : vector<256x32xf32>
    %123 = tpu.matmul %4, %122, %cst_69 {dimension_numbers = #tpu.dot_dimension_numbers<[1], [0], [0], [1], [0, 0, 1, 1], [], []>} : vector<256x16xf32>, vector<16x32xf32>, vector<256x32xf32> -> vector<256x32xf32>
    %124 = vector.extract_strided_slice %64 {offsets = [0, 32], sizes = [256, 32], strides = [1, 1]} : vector<256x64xf32> to vector<256x32xf32>
    %125 = arith.mulf %124, %123 : vector<256x32xf32>
    %cst_70 = arith.constant dense<0.000000e+00> : vector<16x32xf32>
    %126 = tpu.matmul %3, %125, %cst_70 {dimension_numbers = #tpu.dot_dimension_numbers<[1], [0], [0], [1], [0, 0, 1, 1], [], []>} : vector<16x256xf32>, vector<256x32xf32>, vector<16x32xf32> -> vector<16x32xf32>
    %127 = arith.addf %109, %126 : vector<16x32xf32>
    %c0_71 = arith.constant 0 : index
    %c0_72 = arith.constant 0 : index
    %128 = vector.load %arg19[%c0_71, %c0_72] : memref<32x32xf32, #tpu.memory_space<vmem>>, vector<32x32xf32>
    %c0_73 = arith.constant 0 : index
    %c0_74 = arith.constant 0 : index
    %129 = vector.load %arg20[%c0_73, %c0_74] : memref<1x32xf32, #tpu.memory_space<vmem>>, vector<1x32xf32>
    %cst_75 = arith.constant dense<0.000000e+00> : vector<16x32xf32>
    %130 = tpu.matmul %127, %128, %cst_75 {dimension_numbers = #tpu.dot_dimension_numbers<[1], [0], [0], [1], [0, 0, 1, 1], [], []>} : vector<16x32xf32>, vector<32x32xf32>, vector<16x32xf32> -> vector<16x32xf32>
    %131 = vector.broadcast %129 : vector<1x32xf32> to vector<16x32xf32>
    %132 = arith.addf %130, %131 : vector<16x32xf32>
    %cst_76 = arith.constant 5.000000e-01 : f32
    %133 = vector.broadcast %cst_76 : f32 to vector<16x32xf32>
    %134 = arith.mulf %133, %132 : vector<16x32xf32>
    %cst_77 = arith.constant 0.707106769 : f32
    %135 = vector.broadcast %cst_77 : f32 to vector<16x32xf32>
    %136 = arith.mulf %132, %135 : vector<16x32xf32>
    %137 = math.erf %136 : vector<16x32xf32>
    %cst_78 = arith.constant 1.000000e+00 : f32
    %138 = vector.broadcast %cst_78 : f32 to vector<16x32xf32>
    %139 = arith.addf %138, %137 : vector<16x32xf32>
    %140 = arith.mulf %134, %139 : vector<16x32xf32>
    %c0_79 = arith.constant 0 : index
    %c0_80 = arith.constant 0 : index
    %141 = vector.load %arg21[%c0_79, %c0_80] : memref<32x32xf32, #tpu.memory_space<vmem>>, vector<32x32xf32>
    %c0_81 = arith.constant 0 : index
    %c0_82 = arith.constant 0 : index
    %142 = vector.load %arg22[%c0_81, %c0_82] : memref<1x32xf32, #tpu.memory_space<vmem>>, vector<1x32xf32>
    %cst_83 = arith.constant dense<0.000000e+00> : vector<16x32xf32>
    %143 = tpu.matmul %140, %141, %cst_83 {dimension_numbers = #tpu.dot_dimension_numbers<[1], [0], [0], [1], [0, 0, 1, 1], [], []>} : vector<16x32xf32>, vector<32x32xf32>, vector<16x32xf32> -> vector<16x32xf32>
    %144 = vector.broadcast %142 : vector<1x32xf32> to vector<16x32xf32>
    %145 = arith.addf %143, %144 : vector<16x32xf32>
    %cst_84 = arith.constant 5.000000e-01 : f32
    %146 = vector.broadcast %cst_84 : f32 to vector<16x32xf32>
    %147 = arith.mulf %146, %145 : vector<16x32xf32>
    %cst_85 = arith.constant 0.707106769 : f32
    %148 = vector.broadcast %cst_85 : f32 to vector<16x32xf32>
    %149 = arith.mulf %145, %148 : vector<16x32xf32>
    %150 = math.erf %149 : vector<16x32xf32>
    %cst_86 = arith.constant 1.000000e+00 : f32
    %151 = vector.broadcast %cst_86 : f32 to vector<16x32xf32>
    %152 = arith.addf %151, %150 : vector<16x32xf32>
    %153 = arith.mulf %147, %152 : vector<16x32xf32>
    %154 = arith.addf %127, %153 : vector<16x32xf32>
    %cst_87 = arith.constant dense<0.000000e+00> : vector<32xf32>
    %155 = vector.multi_reduction <add>, %154, %cst_87 [0] : vector<16x32xf32> to vector<32xf32>
    %156 = vector.shape_cast %155 : vector<32xf32> to vector<1x32xf32>
    %c0_88 = arith.constant 0 : index
    %c0_89 = arith.constant 0 : index
    %157 = vector.load %arg23[%c0_88, %c0_89] : memref<32x32xf32, #tpu.memory_space<vmem>>, vector<32x32xf32>
    %c0_90 = arith.constant 0 : index
    %c0_91 = arith.constant 0 : index
    %158 = vector.load %arg24[%c0_90, %c0_91] : memref<1x32xf32, #tpu.memory_space<vmem>>, vector<1x32xf32>
    %cst_92 = arith.constant dense<0.000000e+00> : vector<1x32xf32>
    %159 = tpu.matmul %156, %157, %cst_92 {dimension_numbers = #tpu.dot_dimension_numbers<[1], [0], [0], [1], [0, 0, 1, 1], [], []>} : vector<1x32xf32>, vector<32x32xf32>, vector<1x32xf32> -> vector<1x32xf32>
    %160 = arith.addf %159, %158 : vector<1x32xf32>
    %cst_93 = arith.constant 5.000000e-01 : f32
    %161 = vector.broadcast %cst_93 : f32 to vector<1x32xf32>
    %162 = arith.mulf %161, %160 : vector<1x32xf32>
    %cst_94 = arith.constant 0.707106769 : f32
    %163 = vector.broadcast %cst_94 : f32 to vector<1x32xf32>
    %164 = arith.mulf %160, %163 : vector<1x32xf32>
    %165 = math.erf %164 : vector<1x32xf32>
    %cst_95 = arith.constant 1.000000e+00 : f32
    %166 = vector.broadcast %cst_95 : f32 to vector<1x32xf32>
    %167 = arith.addf %166, %165 : vector<1x32xf32>
    %168 = arith.mulf %162, %167 : vector<1x32xf32>
    %c0_96 = arith.constant 0 : index
    %c0_97 = arith.constant 0 : index
    %169 = vector.load %arg25[%c0_96, %c0_97] : memref<32x4xf32, #tpu.memory_space<vmem>>, vector<32x4xf32>
    %c0_98 = arith.constant 0 : index
    %c0_99 = arith.constant 0 : index
    %170 = vector.load %arg26[%c0_98, %c0_99] : memref<1x4xf32, #tpu.memory_space<vmem>>, vector<1x4xf32>
    %cst_100 = arith.constant dense<0.000000e+00> : vector<1x4xf32>
    %171 = tpu.matmul %168, %169, %cst_100 {dimension_numbers = #tpu.dot_dimension_numbers<[1], [0], [0], [1], [0, 0, 1, 1], [], []>} : vector<1x32xf32>, vector<32x4xf32>, vector<1x4xf32> -> vector<1x4xf32>
    %172 = arith.addf %171, %170 : vector<1x4xf32>
    %c0_101 = arith.constant 0 : index
    %c0_102 = arith.constant 0 : index
    %173 = vector.load %arg27[%c0_101, %c0_102] : memref<1x4xf32, #tpu.memory_space<vmem>>, vector<1x4xf32>
    tpu.vector_store %arg27[%c0_101, %c0_102], %172 {strides = array<i32>} : memref<1x4xf32, #tpu.memory_space<vmem>>, vector<1x4xf32>,
    return
  }
}

</mosaic_0001>

<llo_original>
// kernel: tpu_custom_call.1
$region0: #{tpu_custom_call.1}
  #allocation0 [shape = 'u32[]', space=smem, size = 0x4, offset = 0x4, fixed_abs, tag = 'smem constant byte address 0x4 - core index']
  #allocation1 [shape = 'u32[144,128]{1,0:T(1,128)}', space=vmem, size = 0x12000, scoped, tag = 'internal scratch']
  %s0 = inlined_call_operand.vmem [shape: f32[16,16], index: 0, kind: input, shape index: {}]
  %s1 = inlined_call_operand.vmem [shape: f32[256,8], index: 1, kind: input, shape index: {}]
  %s2 = inlined_call_operand.vmem [shape: f32[256,1], index: 2, kind: input, shape index: {}]
  %s3 = inlined_call_operand.vmem [shape: f32[16,256], index: 3, kind: input, shape index: {}]
  %s4 = inlined_call_operand.vmem [shape: f32[256,16], index: 4, kind: input, shape index: {}]
  %s5 = inlined_call_operand.vmem [shape: f32[16,32], index: 5, kind: input, shape index: {}]
  %s6 = inlined_call_operand.vmem [shape: f32[1,32], index: 6, kind: input, shape index: {}]
  %s7 = inlined_call_operand.vmem [shape: f32[8,64], index: 7, kind: input, shape index: {}]
  %s8 = inlined_call_operand.vmem [shape: f32[1,64], index: 8, kind: input, shape index: {}]
  %s9 = inlined_call_operand.vmem [shape: f32[64,64], index: 9, kind: input, shape index: {}]
  %s10 = inlined_call_operand.vmem [shape: f32[1,64], index: 10, kind: input, shape index: {}]
  %s11 = inlined_call_operand.vmem [shape: f32[32,32], index: 11, kind: input, shape index: {}]
  %s12 = inlined_call_operand.vmem [shape: f32[1,32], index: 12, kind: input, shape index: {}]
  %s13 = inlined_call_operand.vmem [shape: f32[32,32], index: 13, kind: input, shape index: {}]
  %s14 = inlined_call_operand.vmem [shape: f32[1,32], index: 14, kind: input, shape index: {}]
  %s15 = inlined_call_operand.vmem [shape: f32[32,32], index: 15, kind: input, shape index: {}]
  %s16 = inlined_call_operand.vmem [shape: f32[1,32], index: 16, kind: input, shape index: {}]
  %s17 = inlined_call_operand.vmem [shape: f32[32,32], index: 17, kind: input, shape index: {}]
  %s18 = inlined_call_operand.vmem [shape: f32[1,32], index: 18, kind: input, shape index: {}]
  %s19 = inlined_call_operand.vmem [shape: f32[32,32], index: 19, kind: input, shape index: {}]
  %s20 = inlined_call_operand.vmem [shape: f32[1,32], index: 20, kind: input, shape index: {}]
  %s21 = inlined_call_operand.vmem [shape: f32[32,32], index: 21, kind: input, shape index: {}]
  %s22 = inlined_call_operand.vmem [shape: f32[1,32], index: 22, kind: input, shape index: {}]
  %s23 = inlined_call_operand.vmem [shape: f32[32,32], index: 23, kind: input, shape index: {}]
  %s24 = inlined_call_operand.vmem [shape: f32[1,32], index: 24, kind: input, shape index: {}]
  %s25 = inlined_call_operand.vmem [shape: f32[32,4], index: 25, kind: input, shape index: {}]
  %s26 = inlined_call_operand.vmem [shape: f32[1,4], index: 26, kind: input, shape index: {}]
  %s27 = inlined_call_operand.hbm [shape: f32[1,4], index: 27, kind: output, shape index: {}]
  %s28 = sld [smem:[#allocation0]]
  $region118: #{tpu_custom_call.1} parent=0
    _
  %s30 = ssub.s32 1, %s28
  %s31 = scalar_select 0, %s30, %s28
  $region1: #{tpu_custom_call.1} parent=0
    #allocation2 [shape = 'u8[512]{0}', space=vmem, size = 0x400, scoped, tag = 'output window, operand 0, single buffered']
    #allocation3 [shape = 's32[1]{0}', space=sflag, size = 0x4, scoped, tag = 'scoped memory for tpu_custom_call.1']
    %32 = vsyncpa [#allocation3], 0
    // Predicated region
    $region2: #{tpu_custom_call.1} parent=1 // pred_check
      _
    $region3: #{tpu_custom_call.1} parent=1 // pred_check_branch
      %34 = sbr.rel (0) target = $region5
    $region4: #{tpu_custom_call.1} parent=1 // pred_region
      _
    $region5: #{tpu_custom_call.1} parent=1 // pred_fallthru
      _
    // Predicated region
    $region6: #{tpu_custom_call.1} parent=1 // pred_check
      _
    $region7: #{tpu_custom_call.1} parent=1 // pred_check_branch
      %36 = sbr.rel (0) target = $region9
    $region8: #{tpu_custom_call.1} parent=1 // pred_region
      _
    $region9: #{tpu_custom_call.1} parent=1 // pred_fallthru
      _
    // Predicated region
    $region10: #{tpu_custom_call.1} parent=1 // pred_check
      _
    $region11: #{tpu_custom_call.1} parent=1 // pred_check_branch
      %38 = sbr.rel (0) target = $region13
    $region12: #{tpu_custom_call.1} parent=1 // pred_region
      _
    $region13: #{tpu_custom_call.1} parent=1 // pred_fallthru
      _
    // Predicated region
    $region14: #{tpu_custom_call.1} parent=1 // pred_check
      _
    $region15: #{tpu_custom_call.1} parent=1 // pred_check_branch
      %40 = sbr.rel (0) target = $region17
    $region16: #{tpu_custom_call.1} parent=1 // pred_region
      _
    $region17: #{tpu_custom_call.1} parent=1 // pred_fallthru
      _
    // Predicated region
    $region18: #{tpu_custom_call.1} parent=1 // pred_check
      _
    $region19: #{tpu_custom_call.1} parent=1 // pred_check_branch
      %42 = sbr.rel (0) target = $region21
    $region20: #{tpu_custom_call.1} parent=1 // pred_region
      _
    $region21: #{tpu_custom_call.1} parent=1 // pred_fallthru
      _
    // Predicated region
    $region22: #{tpu_custom_call.1} parent=1 // pred_check
      _
    $region23: #{tpu_custom_call.1} parent=1 // pred_check_branch
      %44 = sbr.rel (0) target = $region25
    $region24: #{tpu_custom_call.1} parent=1 // pred_region
      _
    $region25: #{tpu_custom_call.1} parent=1 // pred_fallthru
      _
    // Predicated region
    $region26: #{tpu_custom_call.1} parent=1 // pred_check
      _
    $region27: #{tpu_custom_call.1} parent=1 // pred_check_branch
      %46 = sbr.rel (0) target = $region29
    $region28: #{tpu_custom_call.1} parent=1 // pred_region
      _
    $region29: #{tpu_custom_call.1} parent=1 // pred_fallthru
      _
    // Predicated region
    $region30: #{tpu_custom_call.1} parent=1 // pred_check
      _
    $region31: #{tpu_custom_call.1} parent=1 // pred_check_branch
      %48 = sbr.rel (0) target = $region33
    $region32: #{tpu_custom_call.1} parent=1 // pred_region
      _
    $region33: #{tpu_custom_call.1} parent=1 // pred_fallthru
      _
    // Predicated region
    $region34: #{tpu_custom_call.1} parent=1 // pred_check
      _
    $region35: #{tpu_custom_call.1} parent=1 // pred_check_branch
      %50 = sbr.rel (0) target = $region37
    $region36: #{tpu_custom_call.1} parent=1 // pred_region
      _
    $region37: #{tpu_custom_call.1} parent=1 // pred_fallthru
      _
    // Predicated region
    $region38: #{tpu_custom_call.1} parent=1 // pred_check
      _
    $region39: #{tpu_custom_call.1} parent=1 // pred_check_branch
      %52 = sbr.rel (0) target = $region41
    $region40: #{tpu_custom_call.1} parent=1 // pred_region
      _
    $region41: #{tpu_custom_call.1} parent=1 // pred_fallthru
      _
    // Predicated region
    $region42: #{tpu_custom_call.1} parent=1 // pred_check
      _
    $region43: #{tpu_custom_call.1} parent=1 // pred_check_branch
      %54 = sbr.rel (0) target = $region45
    $region44: #{tpu_custom_call.1} parent=1 // pred_region
      _
    $region45: #{tpu_custom_call.1} parent=1 // pred_fallthru
      _
    // Predicated region
    $region46: #{tpu_custom_call.1} parent=1 // pred_check
      _
    $region47: #{tpu_custom_call.1} parent=1 // pred_check_branch
      %56 = sbr.rel (0) target = $region49
    $region48: #{tpu_custom_call.1} parent=1 // pred_region
      _
    $region49: #{tpu_custom_call.1} parent=1 // pred_fallthru
      _
    // Predicated region
    $region50: #{tpu_custom_call.1} parent=1 // pred_check
      _
    $region51: #{tpu_custom_call.1} parent=1 // pred_check_branch
      %58 = sbr.rel (0) target = $region53
    $region52: #{tpu_custom_call.1} parent=1 // pred_region
      _
    $region53: #{tpu_custom_call.1} parent=1 // pred_fallthru
      _
    // Predicated region
    $region54: #{tpu_custom_call.1} parent=1 // pred_check
      _
    $region55: #{tpu_custom_call.1} parent=1 // pred_check_branch
      %60 = sbr.rel (0) target = $region57
    $region56: #{tpu_custom_call.1} parent=1 // pred_region
      _
    $region57: #{tpu_custom_call.1} parent=1 // pred_fallthru
      _
    // Predicated region
    $region58: #{tpu_custom_call.1} parent=1 // pred_check
      _
    $region59: #{tpu_custom_call.1} parent=1 // pred_check_branch
      %62 = sbr.rel (0) target = $region61
    $region60: #{tpu_custom_call.1} parent=1 // pred_region
      _
    $region61: #{tpu_custom_call.1} parent=1 // pred_fallthru
      _
    // Predicated region
    $region62: #{tpu_custom_call.1} parent=1 // pred_check
      _
    $region63: #{tpu_custom_call.1} parent=1 // pred_check_branch
      %64 = sbr.rel (0) target = $region65
    $region64: #{tpu_custom_call.1} parent=1 // pred_region
      _
    $region65: #{tpu_custom_call.1} parent=1 // pred_fallthru
      _
    // Predicated region
    $region66: #{tpu_custom_call.1} parent=1 // pred_check
      _
    $region67: #{tpu_custom_call.1} parent=1 // pred_check_branch
      %66 = sbr.rel (0) target = $region69
    $region68: #{tpu_custom_call.1} parent=1 // pred_region
      _
    $region69: #{tpu_custom_call.1} parent=1 // pred_fallthru
      _
    // Predicated region
    $region70: #{tpu_custom_call.1} parent=1 // pred_check
      _
    $region71: #{tpu_custom_call.1} parent=1 // pred_check_branch
      %68 = sbr.rel (0) target = $region73
    $region72: #{tpu_custom_call.1} parent=1 // pred_region
      _
    $region73: #{tpu_custom_call.1} parent=1 // pred_fallthru
      _
    // Predicated region
    $region74: #{tpu_custom_call.1} parent=1 // pred_check
      _
    $region75: #{tpu_custom_call.1} parent=1 // pred_check_branch
      %70 = sbr.rel (0) target = $region77
    $region76: #{tpu_custom_call.1} parent=1 // pred_region
      _
    $region77: #{tpu_custom_call.1} parent=1 // pred_fallthru
      _
    // Predicated region
    $region78: #{tpu_custom_call.1} parent=1 // pred_check
      _
    $region79: #{tpu_custom_call.1} parent=1 // pred_check_branch
      %72 = sbr.rel (0) target = $region81
    $region80: #{tpu_custom_call.1} parent=1 // pred_region
      _
    $region81: #{tpu_custom_call.1} parent=1 // pred_fallthru
      _
    // Predicated region
    $region82: #{tpu_custom_call.1} parent=1 // pred_check
      _
    $region83: #{tpu_custom_call.1} parent=1 // pred_check_branch
      %74 = sbr.rel (0) target = $region85
    $region84: #{tpu_custom_call.1} parent=1 // pred_region
      _
    $region85: #{tpu_custom_call.1} parent=1 // pred_fallthru
      _
    // Predicated region
    $region86: #{tpu_custom_call.1} parent=1 // pred_check
      _
    $region87: #{tpu_custom_call.1} parent=1 // pred_check_branch
      %76 = sbr.rel (0) target = $region89
    $region88: #{tpu_custom_call.1} parent=1 // pred_region
      _
    $region89: #{tpu_custom_call.1} parent=1 // pred_fallthru
      _
    // Predicated region
    $region90: #{tpu_custom_call.1} parent=1 // pred_check
      _
    $region91: #{tpu_custom_call.1} parent=1 // pred_check_branch
      %78 = sbr.rel (0) target = $region93
    $region92: #{tpu_custom_call.1} parent=1 // pred_region
      _
    $region93: #{tpu_custom_call.1} parent=1 // pred_fallthru
      _
    // Predicated region
    $region94: #{tpu_custom_call.1} parent=1 // pred_check
      _
    $region95: #{tpu_custom_call.1} parent=1 // pred_check_branch
      %80 = sbr.rel (0) target = $region97
    $region96: #{tpu_custom_call.1} parent=1 // pred_region
      _
    $region97: #{tpu_custom_call.1} parent=1 // pred_fallthru
      _
    // Predicated region
    $region98: #{tpu_custom_call.1} parent=1 // pred_check
      _
    $region99: #{tpu_custom_call.1} parent=1 // pred_check_branch
      %82 = sbr.rel (0) target = $region101
    $region100: #{tpu_custom_call.1} parent=1 // pred_region
      _
    $region101: #{tpu_custom_call.1} parent=1 // pred_fallthru
      _
    // Predicated region
    $region102: #{tpu_custom_call.1} parent=1 // pred_check
      _
    $region103: #{tpu_custom_call.1} parent=1 // pred_check_branch
      %84 = sbr.rel (0) target = $region105
    $region104: #{tpu_custom_call.1} parent=1 // pred_region
      _
    $region105: #{tpu_custom_call.1} parent=1 // pred_fallthru
      _
    // Predicated region
    $region106: #{tpu_custom_call.1} parent=1 // pred_check
      _
    $region107: #{tpu_custom_call.1} parent=1 // pred_check_branch
      %86 = sbr.rel (0) target = $region109
    $region108: #{tpu_custom_call.1} parent=1 // pred_region
      _
    $region109: #{tpu_custom_call.1} parent=1 // pred_fallthru
      _
    %v87 = vld [vmem:[%s0] sm:$0xff]
    %v88 = vld [vmem:[%s0 + $0x8] sm:$0xff]
    %v89 = vld [vmem:[%s1] sm:$0xff]
    %v90 = vld [vmem:[%s1 + $0x8] sm:$0xff]
    %v91 = vld [vmem:[%s1 + $0x10] sm:$0xff]
    %v92 = vld [vmem:[%s1 + $0x18] sm:$0xff]
    %v93 = vld [vmem:[%s1 + $0x20] sm:$0xff]
    %v94 = vld [vmem:[%s1 + $0x28] sm:$0xff]
    %v95 = vld [vmem:[%s1 + $0x30] sm:$0xff]
    %v96 = vld [vmem:[%s1 + $0x38] sm:$0xff]
    %v97 = vld [vmem:[%s1 + $0x40] sm:$0xff]
    %v98 = vld [vmem:[%s1 + $0x48] sm:$0xff]
    %v99 = vld [vmem:[%s1 + $0x50] sm:$0xff]
    %v100 = vld [vmem:[%s1 + $0x58] sm:$0xff]
    %v101 = vld [vmem:[%s1 + $0x60] sm:$0xff]
    %v102 = vld [vmem:[%s1 + $0x68] sm:$0xff]
    %v103 = vld [vmem:[%s1 + $0x70] sm:$0xff]
    %v104 = vld [vmem:[%s1 + $0x78] sm:$0xff]
    %v105 = vld [vmem:[%s1 + $0x80] sm:$0xff]
    %v106 = vld [vmem:[%s1 + $0x88] sm:$0xff]
    %v107 = vld [vmem:[%s1 + $0x90] sm:$0xff]
    %v108 = vld [vmem:[%s1 + $0x98] sm:$0xff]
    %v109 = vld [vmem:[%s1 + $0xa0] sm:$0xff]
    %v110 = vld [vmem:[%s1 + $0xa8] sm:$0xff]
    %v111 = vld [vmem:[%s1 + $0xb0] sm:$0xff]
    %v112 = vld [vmem:[%s1 + $0xb8] sm:$0xff]
    %v113 = vld [vmem:[%s1 + $0xc0] sm:$0xff]
    %v114 = vld [vmem:[%s1 + $0xc8] sm:$0xff]
    %v115 = vld [vmem:[%s1 + $0xd0] sm:$0xff]
    %v116 = vld [vmem:[%s1 + $0xd8] sm:$0xff]
    %v117 = vld [vmem:[%s1 + $0xe0] sm:$0xff]
    %v118 = vld [vmem:[%s1 + $0xe8] sm:$0xff]
    %v119 = vld [vmem:[%s1 + $0xf0] sm:$0xff]
    %v120 = vld [vmem:[%s1 + $0xf8] sm:$0xff]
    %v121 = vld [vmem:[%s2] sm:$0xff]
    %v122 = vld [vmem:[%s2 + $0x8] sm:$0xff]
    %v123 = vld [vmem:[%s2 + $0x10] sm:$0xff]
    %v124 = vld [vmem:[%s2 + $0x18] sm:$0xff]
    %v125 = vld [vmem:[%s2 + $0x20] sm:$0xff]
    %v126 = vld [vmem:[%s2 + $0x28] sm:$0xff]
    %v127 = vld [vmem:[%s2 + $0x30] sm:$0xff]
    %v128 = vld [vmem:[%s2 + $0x38] sm:$0xff]
    %v129 = vld [vmem:[%s2 + $0x40] sm:$0xff]
    %v130 = vld [vmem:[%s2 + $0x48] sm:$0xff]
    %v131 = vld [vmem:[%s2 + $0x50] sm:$0xff]
    %v132 = vld [vmem:[%s2 + $0x58] sm:$0xff]
    %v133 = vld [vmem:[%s2 + $0x60] sm:$0xff]
    %v134 = vld [vmem:[%s2 + $0x68] sm:$0xff]
    %v135 = vld [vmem:[%s2 + $0x70] sm:$0xff]
    %v136 = vld [vmem:[%s2 + $0x78] sm:$0xff]
    %v137 = vld [vmem:[%s2 + $0x80] sm:$0xff]
    %v138 = vld [vmem:[%s2 + $0x88] sm:$0xff]
    %v139 = vld [vmem:[%s2 + $0x90] sm:$0xff]
    %v140 = vld [vmem:[%s2 + $0x98] sm:$0xff]
    %v141 = vld [vmem:[%s2 + $0xa0] sm:$0xff]
    %v142 = vld [vmem:[%s2 + $0xa8] sm:$0xff]
    %v143 = vld [vmem:[%s2 + $0xb0] sm:$0xff]
    %v144 = vld [vmem:[%s2 + $0xb8] sm:$0xff]
    %v145 = vld [vmem:[%s2 + $0xc0] sm:$0xff]
    %v146 = vld [vmem:[%s2 + $0xc8] sm:$0xff]
    %v147 = vld [vmem:[%s2 + $0xd0] sm:$0xff]
    %v148 = vld [vmem:[%s2 + $0xd8] sm:$0xff]
    %v149 = vld [vmem:[%s2 + $0xe0] sm:$0xff]
    %v150 = vld [vmem:[%s2 + $0xe8] sm:$0xff]
    %v151 = vld [vmem:[%s2 + $0xf0] sm:$0xff]
    %v152 = vld [vmem:[%s2 + $0xf8] sm:$0xff]
    %v153 = vld [vmem:[%s3] sm:$0xff]
    %v154 = vld [vmem:[%s3 + $0x8] sm:$0xff]
    %v155 = vld [vmem:[%s3 + $0x10] sm:$0xff]
    %v156 = vld [vmem:[%s3 + $0x18] sm:$0xff]
    %v157 = vld [vmem:[%s4] sm:$0xff]
    %v158 = vld [vmem:[%s4 + $0x8] sm:$0xff]
    %v159 = vld [vmem:[%s4 + $0x10] sm:$0xff]
    %v160 = vld [vmem:[%s4 + $0x18] sm:$0xff]
    %v161 = vld [vmem:[%s4 + $0x20] sm:$0xff]
    %v162 = vld [vmem:[%s4 + $0x28] sm:$0xff]
    %v163 = vld [vmem:[%s4 + $0x30] sm:$0xff]
    %v164 = vld [vmem:[%s4 + $0x38] sm:$0xff]
    %v165 = vld [vmem:[%s4 + $0x40] sm:$0xff]
    %v166 = vld [vmem:[%s4 + $0x48] sm:$0xff]
    %v167 = vld [vmem:[%s4 + $0x50] sm:$0xff]
    %v168 = vld [vmem:[%s4 + $0x58] sm:$0xff]
    %v169 = vld [vmem:[%s4 + $0x60] sm:$0xff]
    %v170 = vld [vmem:[%s4 + $0x68] sm:$0xff]
    %v171 = vld [vmem:[%s4 + $0x70] sm:$0xff]
    %v172 = vld [vmem:[%s4 + $0x78] sm:$0xff]
    %v173 = vld [vmem:[%s4 + $0x80] sm:$0xff]
    %v174 = vld [vmem:[%s4 + $0x88] sm:$0xff]
    %v175 = vld [vmem:[%s4 + $0x90] sm:$0xff]
    %v176 = vld [vmem:[%s4 + $0x98] sm:$0xff]
    %v177 = vld [vmem:[%s4 + $0xa0] sm:$0xff]
    %v178 = vld [vmem:[%s4 + $0xa8] sm:$0xff]
    %v179 = vld [vmem:[%s4 + $0xb0] sm:$0xff]
    %v180 = vld [vmem:[%s4 + $0xb8] sm:$0xff]
    %v181 = vld [vmem:[%s4 + $0xc0] sm:$0xff]
    %v182 = vld [vmem:[%s4 + $0xc8] sm:$0xff]
    %v183 = vld [vmem:[%s4 + $0xd0] sm:$0xff]
    %v184 = vld [vmem:[%s4 + $0xd8] sm:$0xff]
    %v185 = vld [vmem:[%s4 + $0xe0] sm:$0xff]
    %v186 = vld [vmem:[%s4 + $0xe8] sm:$0xff]
    %v187 = vld [vmem:[%s4 + $0xf0] sm:$0xff]
    %v188 = vld [vmem:[%s4 + $0xf8] sm:$0xff]
    %v189 = vld [vmem:[%s5] sm:$0xff]
    %v190 = vld [vmem:[%s5 + $0x8] sm:$0xff]
    %v191 = vld [vmem:[%s6] sm:$0x1]
    %v193 = vlaneseq
    %v194 = vshrl.u32 %v193, 7
    %v195 = vsub.s32 0, %v194
    %v196 = vrot.slane %v191, %v195
    %vm198 = vcmask 130048
    %v200 = vsel %vm198, %v87, 0
    %v203 = vsel %vm198, %v88, 0
    %205 = vmatprep.subr.mxu0 0.0
    %206 = vmatpush1.msra.mxu0 0.0
    %207 = vmatprep.subr.mxu0 0.0
    %208 = vmatpush1.msra.mxu0 0.0
    %209 = vmatprep.subr.mxu0 0.0
    %210 = vmatpush1.msra.mxu0 0.0
    %211 = vmatprep.subr.mxu0 0.0
    %212 = vmatpush1.msra.mxu0 0.0
    %213 = vmatprep.subr.mxu0 0.0
    %214 = vmatpush1.msra.mxu0 0.0
    %215 = vmatprep.subr.mxu0 0.0
    %216 = vmatpush1.msra.mxu0 0.0
    %217 = vmatprep.subr.mxu0 0.0
    %218 = vmatpush1.msra.mxu0 0.0
    %219 = vmatprep.subr.mxu0 0.0
    %220 = vmatpush1.msra.mxu0 0.0
    %221 = vmatprep.subr.mxu0 0.0
    %222 = vmatpush1.msra.mxu0 0.0
    %223 = vmatprep.subr.mxu0 0.0
    %224 = vmatpush1.msra.mxu0 0.0
    %225 = vmatprep.subr.mxu0 0.0
    %226 = vmatpush1.msra.mxu0 0.0
    %227 = vmatprep.subr.mxu0 0.0
    %228 = vmatpush1.msra.mxu0 0.0
    %229 = vmatprep.subr.mxu0 0.0
    %230 = vmatpush1.msra.mxu0 0.0
    %231 = vmatprep.subr.mxu0 0.0
    %232 = vmatpush1.msra.mxu0 0.0
    %233 = vmatprep.subr.mxu0 0.0
    %234 = vmatpush1.msra.mxu0 %v190
    %235 = vmatprep.subr.mxu0 0.0
    %236 = vmatpush1.msra.mxu0 %v189
    %237 = vmatprep.subr.mxu0 0.0
    %238 = vmatpush2.msra.mxu0 0.0
    %239 = vmatprep.subr.mxu0 0.0
    %240 = vmatpush2.msra.mxu0 0.0
    %241 = vmatprep.subr.mxu0 0.0
    %242 = vmatpush2.msra.mxu0 0.0
    %243 = vmatprep.subr.mxu0 0.0
    %244 = vmatpush2.msra.mxu0 0.0
    %245 = vmatprep.subr.mxu0 0.0
    %246 = vmatpush2.msra.mxu0 0.0
    %247 = vmatprep.subr.mxu0 0.0
    %248 = vmatpush2.msra.mxu0 0.0
    %249 = vmatprep.subr.mxu0 0.0
    %250 = vmatpush2.msra.mxu0 0.0
    %251 = vmatprep.subr.mxu0 0.0
    %252 = vmatpush2.msra.mxu0 0.0
    %253 = vmatprep.subr.mxu0 0.0
    %254 = vmatpush2.msra.mxu0 0.0
    %255 = vmatprep.subr.mxu0 0.0
    %256 = vmatpush2.msra.mxu0 0.0
    %257 = vmatprep.subr.mxu0 0.0
    %258 = vmatpush2.msra.mxu0 0.0
    %259 = vmatprep.subr.mxu0 0.0
    %260 = vmatpush2.msra.mxu0 0.0
    %261 = vmatprep.subr.mxu0 0.0
    %262 = vmatpush2.msra.mxu0 0.0
    %263 = vmatprep.subr.mxu0 0.0
    %264 = vmatpush2.msra.mxu0 0.0
    %265 = vmatprep.subr.mxu0 0.0
    %266 = vmatpush2.msra.mxu0 0.0
    %267 = vmatprep.subr.mxu0 0.0
    %268 = vmatpush2.msra.mxu0 0.0
    %269 = vmatprep.mubr.f32.mxu0 0.0
    %270 = vmatmul.mubr.f32.gmra.mxu0 %v200
    %v271 = vpop.f32.mrf.mxu0
    %v272 = vadd.f32 %v196, %v271
    %v273 = vpop.f32.mrf.mxu0
    %274 = vmatprep.mubr.f32.mxu0 0.0
    %275 = vmatmul.mubr.f32.gmra.mxu0 %v203
    %v276 = vpop.f32.mrf.mxu0
    %v277 = vadd.f32 %v196, %v276
    %v278 = vpop.f32.mrf.mxu0
    %279 = vdwg.mxu0
    %vm280 = vcmp.gt.f32.partialorder %v121, 0.0
    %vm281 = vcmp.gt.f32.partialorder %v122, 0.0
    %vm282 = vcmp.gt.f32.partialorder %v123, 0.0
    %vm283 = vcmp.gt.f32.partialorder %v124, 0.0
    %vm284 = vcmp.gt.f32.partialorder %v125, 0.0
    %vm285 = vcmp.gt.f32.partialorder %v126, 0.0
    %vm286 = vcmp.gt.f32.partialorder %v127, 0.0
    %vm287 = vcmp.gt.f32.partialorder %v128, 0.0
    %vm288 = vcmp.gt.f32.partialorder %v129, 0.0
    %vm289 = vcmp.gt.f32.partialorder %v130, 0.0
    %vm290 = vcmp.gt.f32.partialorder %v131, 0.0
    %vm291 = vcmp.gt.f32.partialorder %v132, 0.0
    %vm292 = vcmp.gt.f32.partialorder %v133, 0.0
    %vm293 = vcmp.gt.f32.partialorder %v134, 0.0
    %vm294 = vcmp.gt.f32.partialorder %v135, 0.0
    %vm295 = vcmp.gt.f32.partialorder %v136, 0.0
    %vm296 = vcmp.gt.f32.partialorder %v137, 0.0
    %vm297 = vcmp.gt.f32.partialorder %v138, 0.0
    %vm298 = vcmp.gt.f32.partialorder %v139, 0.0
    %vm299 = vcmp.gt.f32.partialorder %v140, 0.0
    %vm300 = vcmp.gt.f32.partialorder %v141, 0.0
    %vm301 = vcmp.gt.f32.partialorder %v142, 0.0
    %vm302 = vcmp.gt.f32.partialorder %v143, 0.0
    %vm303 = vcmp.gt.f32.partialorder %v144, 0.0
    %vm304 = vcmp.gt.f32.partialorder %v145, 0.0
    %vm305 = vcmp.gt.f32.partialorder %v146, 0.0
    %vm306 = vcmp.gt.f32.partialorder %v147, 0.0
    %vm307 = vcmp.gt.f32.partialorder %v148, 0.0
    %vm308 = vcmp.gt.f32.partialorder %v149, 0.0
    %vm309 = vcmp.gt.f32.partialorder %v150, 0.0
    %vm310 = vcmp.gt.f32.partialorder %v151, 0.0
    %vm311 = vcmp.gt.f32.partialorder %v152, 0.0
    %v312 = vsel %vm280, 1, 0
    %v313 = vsel %vm281, 1, 0
    %v314 = vsel %vm282, 1, 0
    %v315 = vsel %vm283, 1, 0
    %v316 = vsel %vm284, 1, 0
    %v317 = vsel %vm285, 1, 0
    %v318 = vsel %vm286, 1, 0
    %v319 = vsel %vm287, 1, 0
    %v320 = vsel %vm288, 1, 0
    %v321 = vsel %vm289, 1, 0
    %v322 = vsel %vm290, 1, 0
    %v323 = vsel %vm291, 1, 0
    %v324 = vsel %vm292, 1, 0
    %v325 = vsel %vm293, 1, 0
    %v326 = vsel %vm294, 1, 0
    %v327 = vsel %vm295, 1, 0
    %v328 = vsel %vm296, 1, 0
    %v329 = vsel %vm297, 1, 0
    %v330 = vsel %vm298, 1, 0
    %v331 = vsel %vm299, 1, 0
    %v332 = vsel %vm300, 1, 0
    %v333 = vsel %vm301, 1, 0
    %v334 = vsel %vm302, 1, 0
    %v335 = vsel %vm303, 1, 0
    %v336 = vsel %vm304, 1, 0
    %v337 = vsel %vm305, 1, 0
    %v338 = vsel %vm306, 1, 0
    %v339 = vsel %vm307, 1, 0
    %v340 = vsel %vm308, 1, 0
    %v341 = vsel %vm309, 1, 0
    %v342 = vsel %vm310, 1, 0
    %v343 = vsel %vm311, 1, 0
    %344 = vset.pattern.permute.xlu0 0
    %345 = vperm.xlu0 %344, %v312
    %v346 = vpop.permute.xlu0 %345
    %347 = vset.pattern.permute.xlu0 0
    %348 = vperm.xlu0 %347, %v313
    %v349 = vpop.permute.xlu0 %348
    %350 = vset.pattern.permute.xlu0 0
    %351 = vperm.xlu0 %350, %v314
    %v352 = vpop.permute.xlu0 %351
    %353 = vset.pattern.permute.xlu0 0
    %354 = vperm.xlu0 %353, %v315
    %v355 = vpop.permute.xlu0 %354
    %356 = vset.pattern.permute.xlu0 0
    %357 = vperm.xlu0 %356, %v316
    %v358 = vpop.permute.xlu0 %357
    %359 = vset.pattern.permute.xlu0 0
    %360 = vperm.xlu0 %359, %v317
    %v361 = vpop.permute.xlu0 %360
    %362 = vset.pattern.permute.xlu0 0
    %363 = vperm.xlu0 %362, %v318
    %v364 = vpop.permute.xlu0 %363
    %365 = vset.pattern.permute.xlu0 0
    %366 = vperm.xlu0 %365, %v319
    %v367 = vpop.permute.xlu0 %366
    %368 = vset.pattern.permute.xlu0 0
    %369 = vperm.xlu0 %368, %v320
    %v370 = vpop.permute.xlu0 %369
    %371 = vset.pattern.permute.xlu0 0
    %372 = vperm.xlu0 %371, %v321
    %v373 = vpop.permute.xlu0 %372
    %374 = vset.pattern.permute.xlu0 0
    %375 = vperm.xlu0 %374, %v322
    %v376 = vpop.permute.xlu0 %375
    %377 = vset.pattern.permute.xlu0 0
    %378 = vperm.xlu0 %377, %v323
    %v379 = vpop.permute.xlu0 %378
    %380 = vset.pattern.permute.xlu0 0
    %381 = vperm.xlu0 %380, %v324
    %v382 = vpop.permute.xlu0 %381
    %383 = vset.pattern.permute.xlu0 0
    %384 = vperm.xlu0 %383, %v325
    %v385 = vpop.permute.xlu0 %384
    %386 = vset.pattern.permute.xlu0 0
    %387 = vperm.xlu0 %386, %v326
    %v388 = vpop.permute.xlu0 %387
    %389 = vset.pattern.permute.xlu0 0
    %390 = vperm.xlu0 %389, %v327
    %v391 = vpop.permute.xlu0 %390
    %392 = vset.pattern.permute.xlu0 0
    %393 = vperm.xlu0 %392, %v328
    %v394 = vpop.permute.xlu0 %393
    %395 = vset.pattern.permute.xlu0 0
    %396 = vperm.xlu0 %395, %v329
    %v397 = vpop.permute.xlu0 %396
    %398 = vset.pattern.permute.xlu0 0
    %399 = vperm.xlu0 %398, %v330
    %v400 = vpop.permute.xlu0 %399
    %401 = vset.pattern.permute.xlu0 0
    %402 = vperm.xlu0 %401, %v331
    %v403 = vpop.permute.xlu0 %402
    %404 = vset.pattern.permute.xlu0 0
    %405 = vperm.xlu0 %404, %v332
    %v406 = vpop.permute.xlu0 %405
    %407 = vset.pattern.permute.xlu0 0
    %408 = vperm.xlu0 %407, %v333
    %v409 = vpop.permute.xlu0 %408
    %410 = vset.pattern.permute.xlu0 0
    %411 = vperm.xlu0 %410, %v334
    %v412 = vpop.permute.xlu0 %411
    %413 = vset.pattern.permute.xlu0 0
    %414 = vperm.xlu0 %413, %v335
    %v415 = vpop.permute.xlu0 %414
    %416 = vset.pattern.permute.xlu0 0
    %417 = vperm.xlu0 %416, %v336
    %v418 = vpop.permute.xlu0 %417
    %419 = vset.pattern.permute.xlu0 0
    %420 = vperm.xlu0 %419, %v337
    %v421 = vpop.permute.xlu0 %420
    %422 = vset.pattern.permute.xlu0 0
    %423 = vperm.xlu0 %422, %v338
    %v424 = vpop.permute.xlu0 %423
    %425 = vset.pattern.permute.xlu0 0
    %426 = vperm.xlu0 %425, %v339
    %v427 = vpop.permute.xlu0 %426
    %428 = vset.pattern.permute.xlu0 0
    %429 = vperm.xlu0 %428, %v340
    %v430 = vpop.permute.xlu0 %429
    %431 = vset.pattern.permute.xlu0 0
    %432 = vperm.xlu0 %431, %v341
    %v433 = vpop.permute.xlu0 %432
    %434 = vset.pattern.permute.xlu0 0
    %435 = vperm.xlu0 %434, %v342
    %v436 = vpop.permute.xlu0 %435
    %437 = vset.pattern.permute.xlu0 0
    %438 = vperm.xlu0 %437, %v343
    %v439 = vpop.permute.xlu0 %438
    %vm440 = vcmp.eq.s32.totalorder %v346, 1
    %vm441 = vcmp.eq.s32.totalorder %v349, 1
    %vm442 = vcmp.eq.s32.totalorder %v352, 1
    %vm443 = vcmp.eq.s32.totalorder %v355, 1
    %vm444 = vcmp.eq.s32.totalorder %v358, 1
    %vm445 = vcmp.eq.s32.totalorder %v361, 1
    %vm446 = vcmp.eq.s32.totalorder %v364, 1
    %vm447 = vcmp.eq.s32.totalorder %v367, 1
    %vm448 = vcmp.eq.s32.totalorder %v370, 1
    %vm449 = vcmp.eq.s32.totalorder %v373, 1
    %vm450 = vcmp.eq.s32.totalorder %v376, 1
    %vm451 = vcmp.eq.s32.totalorder %v379, 1
    %vm452 = vcmp.eq.s32.totalorder %v382, 1
    %vm453 = vcmp.eq.s32.totalorder %v385, 1
    %vm454 = vcmp.eq.s32.totalorder %v388, 1
    %vm455 = vcmp.eq.s32.totalorder %v391, 1
    %vm456 = vcmp.eq.s32.totalorder %v394, 1
    %vm457 = vcmp.eq.s32.totalorder %v397, 1
    %vm458 = vcmp.eq.s32.totalorder %v400, 1
    %vm459 = vcmp.eq.s32.totalorder %v403, 1
    %vm460 = vcmp.eq.s32.totalorder %v406, 1
    %vm461 = vcmp.eq.s32.totalorder %v409, 1
    %vm462 = vcmp.eq.s32.totalorder %v412, 1
    %vm463 = vcmp.eq.s32.totalorder %v415, 1
    %vm464 = vcmp.eq.s32.totalorder %v418, 1
    %vm465 = vcmp.eq.s32.totalorder %v421, 1
    %vm466 = vcmp.eq.s32.totalorder %v424, 1
    %vm467 = vcmp.eq.s32.totalorder %v427, 1
    %vm468 = vcmp.eq.s32.totalorder %v430, 1
    %vm469 = vcmp.eq.s32.totalorder %v433, 1
    %vm470 = vcmp.eq.s32.totalorder %v436, 1
    %vm471 = vcmp.eq.s32.totalorder %v439, 1
    %v472 = vsel %vm440, %v89, -1e+30
    %v473 = vsel %vm441, %v90, -1e+30
    %v474 = vsel %vm442, %v91, -1e+30
    %v475 = vsel %vm443, %v92, -1e+30
    %v476 = vsel %vm444, %v93, -1e+30
    %v477 = vsel %vm445, %v94, -1e+30
    %v478 = vsel %vm446, %v95, -1e+30
    %v479 = vsel %vm447, %v96, -1e+30
    %v480 = vsel %vm448, %v97, -1e+30
    %v481 = vsel %vm449, %v98, -1e+30
    %v482 = vsel %vm450, %v99, -1e+30
    %v483 = vsel %vm451, %v100, -1e+30
    %v484 = vsel %vm452, %v101, -1e+30
    %v485 = vsel %vm453, %v102, -1e+30
    %v486 = vsel %vm454, %v103, -1e+30
    %v487 = vsel %vm455, %v104, -1e+30
    %v488 = vsel %vm456, %v105, -1e+30
    %v489 = vsel %vm457, %v106, -1e+30
    %v490 = vsel %vm458, %v107, -1e+30
    %v491 = vsel %vm459, %v108, -1e+30
    %v492 = vsel %vm460, %v109, -1e+30
    %v493 = vsel %vm461, %v110, -1e+30
    %v494 = vsel %vm462, %v111, -1e+30
    %v495 = vsel %vm463, %v112, -1e+30
    %v496 = vsel %vm464, %v113, -1e+30
    %v497 = vsel %vm465, %v114, -1e+30
    %v498 = vsel %vm466, %v115, -1e+30
    %v499 = vsel %vm467, %v116, -1e+30
    %v500 = vsel %vm468, %v117, -1e+30
    %v501 = vsel %vm469, %v118, -1e+30
    %v502 = vsel %vm470, %v119, -1e+30
    %v503 = vsel %vm471, %v120, -1e+30
    %vm504 = vcmask 64512
    %v505 = vsel %vm504, %v472, -inf
    %v506 = vsel %vm504, %v473, -inf
    %v507 = vmax.f32 %v505, %v506
    %v508 = vrot.slane %v507, 4
    %v509 = vmax.f32 %v507, %v508
    %v510 = vrot.slane %v509, 2
    %v511 = vmax.f32 %v509, %v510
    %v512 = vrot.slane %v511, 1
    %v513 = vmax.f32 %v511, %v512
    %v514 = vsel %vm504, %v474, -inf
    %v515 = vsel %vm504, %v475, -inf
    %v516 = vmax.f32 %v514, %v515
    %v517 = vrot.slane %v516, 4
    %v518 = vmax.f32 %v516, %v517
    %v519 = vrot.slane %v518, 2
    %v520 = vmax.f32 %v518, %v519
    %v521 = vrot.slane %v520, 1
    %v522 = vmax.f32 %v520, %v521
    %v523 = vsel %vm504, %v476, -inf
    %v524 = vsel %vm504, %v477, -inf
    %v525 = vmax.f32 %v523, %v524
    %v526 = vrot.slane %v525, 4
    %v527 = vmax.f32 %v525, %v526
    %v528 = vrot.slane %v527, 2
    %v529 = vmax.f32 %v527, %v528
    %v530 = vrot.slane %v529, 1
    %v531 = vmax.f32 %v529, %v530
    %v532 = vsel %vm504, %v478, -inf
    %v533 = vsel %vm504, %v479, -inf
    %v534 = vmax.f32 %v532, %v533
    %v535 = vrot.slane %v534, 4
    %v536 = vmax.f32 %v534, %v535
    %v537 = vrot.slane %v536, 2
    %v538 = vmax.f32 %v536, %v537
    %v539 = vrot.slane %v538, 1
    %v540 = vmax.f32 %v538, %v539
    %v541 = vsel %vm504, %v480, -inf
    %v542 = vsel %vm504, %v481, -inf
    %v543 = vmax.f32 %v541, %v542
    %v544 = vrot.slane %v543, 4
    %v545 = vmax.f32 %v543, %v544
    %v546 = vrot.slane %v545, 2
    %v547 = vmax.f32 %v545, %v546
    %v548 = vrot.slane %v547, 1
    %v549 = vmax.f32 %v547, %v548
    %v550 = vsel %vm504, %v482, -inf
    %v551 = vsel %vm504, %v483, -inf
    %v552 = vmax.f32 %v550, %v551
    %v553 = vrot.slane %v552, 4
    %v554 = vmax.f32 %v552, %v553
    %v555 = vrot.slane %v554, 2
    %v556 = vmax.f32 %v554, %v555
    %v557 = vrot.slane %v556, 1
    %v558 = vmax.f32 %v556, %v557
    %v559 = vsel %vm504, %v484, -inf
    %v560 = vsel %vm504, %v485, -inf
    %v561 = vmax.f32 %v559, %v560
    %v562 = vrot.slane %v561, 4
    %v563 = vmax.f32 %v561, %v562
    %v564 = vrot.slane %v563, 2
    %v565 = vmax.f32 %v563, %v564
    %v566 = vrot.slane %v565, 1
    %v567 = vmax.f32 %v565, %v566
    %v568 = vsel %vm504, %v486, -inf
    %v569 = vsel %vm504, %v487, -inf
    %v570 = vmax.f32 %v568, %v569
    %v571 = vrot.slane %v570, 4
    %v572 = vmax.f32 %v570, %v571
    %v573 = vrot.slane %v572, 2
    %v574 = vmax.f32 %v572, %v573
    %v575 = vrot.slane %v574, 1
    %v576 = vmax.f32 %v574, %v575
    %v577 = vsel %vm504, %v488, -inf
    %v578 = vsel %vm504, %v489, -inf
    %v579 = vmax.f32 %v577, %v578
    %v580 = vrot.slane %v579, 4
    %v581 = vmax.f32 %v579, %v580
    %v582 = vrot.slane %v581, 2
    %v583 = vmax.f32 %v581, %v582
    %v584 = vrot.slane %v583, 1
    %v585 = vmax.f32 %v583, %v584
    %v586 = vsel %vm504, %v490, -inf
    %v587 = vsel %vm504, %v491, -inf
    %v588 = vmax.f32 %v586, %v587
    %v589 = vrot.slane %v588, 4
    %v590 = vmax.f32 %v588, %v589
    %v591 = vrot.slane %v590, 2
    %v592 = vmax.f32 %v590, %v591
    %v593 = vrot.slane %v592, 1
    %v594 = vmax.f32 %v592, %v593
    %v595 = vsel %vm504, %v492, -inf
    %v596 = vsel %vm504, %v493, -inf
    %v597 = vmax.f32 %v595, %v596
    %v598 = vrot.slane %v597, 4
    %v599 = vmax.f32 %v597, %v598
    %v600 = vrot.slane %v599, 2
    %v601 = vmax.f32 %v599, %v600
    %v602 = vrot.slane %v601, 1
    %v603 = vmax.f32 %v601, %v602
    %v604 = vsel %vm504, %v494, -inf
    %v605 = vsel %vm504, %v495, -inf
    %v606 = vmax.f32 %v604, %v605
    %v607 = vrot.slane %v606, 4
    %v608 = vmax.f32 %v606, %v607
    %v609 = vrot.slane %v608, 2
    %v610 = vmax.f32 %v608, %v609
    %v611 = vrot.slane %v610, 1
    %v612 = vmax.f32 %v610, %v611
    %v613 = vsel %vm504, %v496, -inf
    %v614 = vsel %vm504, %v497, -inf
    %v615 = vmax.f32 %v613, %v614
    %v616 = vrot.slane %v615, 4
    %v617 = vmax.f32 %v615, %v616
    %v618 = vrot.slane %v617, 2
    %v619 = vmax.f32 %v617, %v618
    %v620 = vrot.slane %v619, 1
    %v621 = vmax.f32 %v619, %v620
    %v622 = vsel %vm504, %v498, -inf
    %v623 = vsel %vm504, %v499, -inf
    %v624 = vmax.f32 %v622, %v623
    %v625 = vrot.slane %v624, 4
    %v626 = vmax.f32 %v624, %v625
    %v627 = vrot.slane %v626, 2
    %v628 = vmax.f32 %v626, %v627
    %v629 = vrot.slane %v628, 1
    %v630 = vmax.f32 %v628, %v629
    %v631 = vsel %vm504, %v500, -inf
    %v632 = vsel %vm504, %v501, -inf
    %v633 = vmax.f32 %v631, %v632
    %v634 = vrot.slane %v633, 4
    %v635 = vmax.f32 %v633, %v634
    %v636 = vrot.slane %v635, 2
    %v637 = vmax.f32 %v635, %v636
    %v638 = vrot.slane %v637, 1
    %v639 = vmax.f32 %v637, %v638
    %v640 = vsel %vm504, %v502, -inf
    %v641 = vsel %vm504, %v503, -inf
    %v642 = vmax.f32 %v640, %v641
    %v643 = vrot.slane %v642, 4
    %v644 = vmax.f32 %v642, %v643
    %v645 = vrot.slane %v644, 2
    %v646 = vmax.f32 %v644, %v645
    %v647 = vrot.slane %v646, 1
    %v648 = vmax.f32 %v646, %v647
    %v649 = vsub.f32 %v472, %v513
    %v650 = vsub.f32 %v473, %v513
    %v651 = vsub.f32 %v474, %v522
    %v652 = vsub.f32 %v475, %v522
    %v653 = vsub.f32 %v476, %v531
    %v654 = vsub.f32 %v477, %v531
    %v655 = vsub.f32 %v478, %v540
    %v656 = vsub.f32 %v479, %v540
    %v657 = vsub.f32 %v480, %v549
    %v658 = vsub.f32 %v481, %v549
    %v659 = vsub.f32 %v482, %v558
    %v660 = vsub.f32 %v483, %v558
    %v661 = vsub.f32 %v484, %v567
    %v662 = vsub.f32 %v485, %v567
    %v663 = vsub.f32 %v486, %v576
    %v664 = vsub.f32 %v487, %v576
    %v665 = vsub.f32 %v488, %v585
    %v666 = vsub.f32 %v489, %v585
    %v667 = vsub.f32 %v490, %v594
    %v668 = vsub.f32 %v491, %v594
    %v669 = vsub.f32 %v492, %v603
    %v670 = vsub.f32 %v493, %v603
    %v671 = vsub.f32 %v494, %v612
    %v672 = vsub.f32 %v495, %v612
    %v673 = vsub.f32 %v496, %v621
    %v674 = vsub.f32 %v497, %v621
    %v675 = vsub.f32 %v498, %v630
    %v676 = vsub.f32 %v499, %v630
    %v677 = vsub.f32 %v500, %v639
    %v678 = vsub.f32 %v501, %v639
    %v679 = vsub.f32 %v502, %v648
    %v680 = vsub.f32 %v503, %v648
    %v681 = vmul.f32 %v649, 1.442695
    %v682 = vpow.pop %v681
    %v683 = vmul.f32 %v650, 1.442695
    %v684 = vpow.pop %v683
    %v685 = vmul.f32 %v651, 1.442695
    %v686 = vpow.pop %v685
    %v687 = vmul.f32 %v652, 1.442695
    %v688 = vpow.pop %v687
    %v689 = vmul.f32 %v653, 1.442695
    %v690 = vpow.pop %v689
    %v691 = vmul.f32 %v654, 1.442695
    %v692 = vpow.pop %v691
    %v693 = vmul.f32 %v655, 1.442695
    %v694 = vpow.pop %v693
    %v695 = vmul.f32 %v656, 1.442695
    %v696 = vpow.pop %v695
    %v697 = vmul.f32 %v657, 1.442695
    %v698 = vpow.pop %v697
    %v699 = vmul.f32 %v658, 1.442695
    %v700 = vpow.pop %v699
    %v701 = vmul.f32 %v659, 1.442695
    %v702 = vpow.pop %v701
    %v703 = vmul.f32 %v660, 1.442695
    %v704 = vpow.pop %v703
    %v705 = vmul.f32 %v661, 1.442695
    %v706 = vpow.pop %v705
    %v707 = vmul.f32 %v662, 1.442695
    %v708 = vpow.pop %v707
    %v709 = vmul.f32 %v663, 1.442695
    %v710 = vpow.pop %v709
    %v711 = vmul.f32 %v664, 1.442695
    %v712 = vpow.pop %v711
    %v713 = vmul.f32 %v665, 1.442695
    %v714 = vpow.pop %v713
    %v715 = vmul.f32 %v666, 1.442695
    %v716 = vpow.pop %v715
    %v717 = vmul.f32 %v667, 1.442695
    %v718 = vpow.pop %v717
    %v719 = vmul.f32 %v668, 1.442695
    %v720 = vpow.pop %v719
    %v721 = vmul.f32 %v669, 1.442695
    %v722 = vpow.pop %v721
    %v723 = vmul.f32 %v670, 1.442695
    %v724 = vpow.pop %v723
    %v725 = vmul.f32 %v671, 1.442695
    %v726 = vpow.pop %v725
    %v727 = vmul.f32 %v672, 1.442695
    %v728 = vpow.pop %v727
    %v729 = vmul.f32 %v673, 1.442695
    %v730 = vpow.pop %v729
    %v731 = vmul.f32 %v674, 1.442695
    %v732 = vpow.pop %v731
    %v733 = vmul.f32 %v675, 1.442695
    %v734 = vpow.pop %v733
    %v735 = vmul.f32 %v676, 1.442695
    %v736 = vpow.pop %v735
    %v737 = vmul.f32 %v677, 1.442695
    %v738 = vpow.pop %v737
    %v739 = vmul.f32 %v678, 1.442695
    %v740 = vpow.pop %v739
    %v741 = vmul.f32 %v679, 1.442695
    %v742 = vpow.pop %v741
    %v743 = vmul.f32 %v680, 1.442695
    %v744 = vpow.pop %v743
    %746 = vset.pattern.permute.xlu0 0
    %747 = vperm.xlu0 %746, %v121
    %v748 = vpop.permute.xlu0 %747
    %751 = vset.pattern.permute.xlu0 0
    %752 = vperm.xlu0 %751, %v122
    %v753 = vpop.permute.xlu0 %752
    %756 = vset.pattern.permute.xlu0 0
    %757 = vperm.xlu0 %756, %v123
    %v758 = vpop.permute.xlu0 %757
    %761 = vset.pattern.permute.xlu0 0
    %762 = vperm.xlu0 %761, %v124
    %v763 = vpop.permute.xlu0 %762
    %766 = vset.pattern.permute.xlu0 0
    %767 = vperm.xlu0 %766, %v125
    %v768 = vpop.permute.xlu0 %767
    %771 = vset.pattern.permute.xlu0 0
    %772 = vperm.xlu0 %771, %v126
    %v773 = vpop.permute.xlu0 %772
    %776 = vset.pattern.permute.xlu0 0
    %777 = vperm.xlu0 %776, %v127
    %v778 = vpop.permute.xlu0 %777
    %781 = vset.pattern.permute.xlu0 0
    %782 = vperm.xlu0 %781, %v128
    %v783 = vpop.permute.xlu0 %782
    %786 = vset.pattern.permute.xlu0 0
    %787 = vperm.xlu0 %786, %v129
    %v788 = vpop.permute.xlu0 %787
    %791 = vset.pattern.permute.xlu0 0
    %792 = vperm.xlu0 %791, %v130
    %v793 = vpop.permute.xlu0 %792
    %796 = vset.pattern.permute.xlu0 0
    %797 = vperm.xlu0 %796, %v131
    %v798 = vpop.permute.xlu0 %797
    %801 = vset.pattern.permute.xlu0 0
    %802 = vperm.xlu0 %801, %v132
    %v803 = vpop.permute.xlu0 %802
    %806 = vset.pattern.permute.xlu0 0
    %807 = vperm.xlu0 %806, %v133
    %v808 = vpop.permute.xlu0 %807
    %811 = vset.pattern.permute.xlu0 0
    %812 = vperm.xlu0 %811, %v134
    %v813 = vpop.permute.xlu0 %812
    %816 = vset.pattern.permute.xlu0 0
    %817 = vperm.xlu0 %816, %v135
    %v818 = vpop.permute.xlu0 %817
    %821 = vset.pattern.permute.xlu0 0
    %822 = vperm.xlu0 %821, %v136
    %v823 = vpop.permute.xlu0 %822
    %826 = vset.pattern.permute.xlu0 0
    %827 = vperm.xlu0 %826, %v137
    %v828 = vpop.permute.xlu0 %827
    %831 = vset.pattern.permute.xlu0 0
    %832 = vperm.xlu0 %831, %v138
    %v833 = vpop.permute.xlu0 %832
    %836 = vset.pattern.permute.xlu0 0
    %837 = vperm.xlu0 %836, %v139
    %v838 = vpop.permute.xlu0 %837
    %841 = vset.pattern.permute.xlu0 0
    %842 = vperm.xlu0 %841, %v140
    %v843 = vpop.permute.xlu0 %842
    %846 = vset.pattern.permute.xlu0 0
    %847 = vperm.xlu0 %846, %v141
    %v848 = vpop.permute.xlu0 %847
    %851 = vset.pattern.permute.xlu0 0
    %852 = vperm.xlu0 %851, %v142
    %v853 = vpop.permute.xlu0 %852
    %856 = vset.pattern.permute.xlu0 0
    %857 = vperm.xlu0 %856, %v143
    %v858 = vpop.permute.xlu0 %857
    %861 = vset.pattern.permute.xlu0 0
    %862 = vperm.xlu0 %861, %v144
    %v863 = vpop.permute.xlu0 %862
    %866 = vset.pattern.permute.xlu0 0
    %867 = vperm.xlu0 %866, %v145
    %v868 = vpop.permute.xlu0 %867
    %871 = vset.pattern.permute.xlu0 0
    %872 = vperm.xlu0 %871, %v146
    %v873 = vpop.permute.xlu0 %872
    %876 = vset.pattern.permute.xlu0 0
    %877 = vperm.xlu0 %876, %v147
    %v878 = vpop.permute.xlu0 %877
    %881 = vset.pattern.permute.xlu0 0
    %882 = vperm.xlu0 %881, %v148
    %v883 = vpop.permute.xlu0 %882
    %886 = vset.pattern.permute.xlu0 0
    %887 = vperm.xlu0 %886, %v149
    %v888 = vpop.permute.xlu0 %887
    %891 = vset.pattern.permute.xlu0 0
    %892 = vperm.xlu0 %891, %v150
    %v893 = vpop.permute.xlu0 %892
    %896 = vset.pattern.permute.xlu0 0
    %897 = vperm.xlu0 %896, %v151
    %v898 = vpop.permute.xlu0 %897
    %901 = vset.pattern.permute.xlu0 0
    %902 = vperm.xlu0 %901, %v152
    %v903 = vpop.permute.xlu0 %902
    %v905 = vmul.f32 %v682, %v748
    %v906 = vmul.f32 %v684, %v753
    %v907 = vmul.f32 %v686, %v758
    %v908 = vmul.f32 %v688, %v763
    %v909 = vmul.f32 %v690, %v768
    %v910 = vmul.f32 %v692, %v773
    %v911 = vmul.f32 %v694, %v778
    %v912 = vmul.f32 %v696, %v783
    %v913 = vmul.f32 %v698, %v788
    %v914 = vmul.f32 %v700, %v793
    %v915 = vmul.f32 %v702, %v798
    %v916 = vmul.f32 %v704, %v803
    %v917 = vmul.f32 %v706, %v808
    %v918 = vmul.f32 %v708, %v813
    %v919 = vmul.f32 %v710, %v818
    %v920 = vmul.f32 %v712, %v823
    %v921 = vmul.f32 %v714, %v828
    %v922 = vmul.f32 %v716, %v833
    %v923 = vmul.f32 %v718, %v838
    %v924 = vmul.f32 %v720, %v843
    %v925 = vmul.f32 %v722, %v848
    %v926 = vmul.f32 %v724, %v853
    %v927 = vmul.f32 %v726, %v858
    %v928 = vmul.f32 %v728, %v863
    %v929 = vmul.f32 %v730, %v868
    %v930 = vmul.f32 %v732, %v873
    %v931 = vmul.f32 %v734, %v878
    %v932 = vmul.f32 %v736, %v883
    %v933 = vmul.f32 %v738, %v888
    %v934 = vmul.f32 %v740, %v893
    %v935 = vmul.f32 %v742, %v898
    %v936 = vmul.f32 %v744, %v903
    %v937 = vsel %vm504, %v905, 0.0
    %v938 = vsel %vm504, %v906, 0.0
    %v939 = vadd.f32 %v937, %v938
    %v940 = vrot.slane %v939, 4
    %v941 = vadd.f32 %v939, %v940
    %v942 = vrot.slane %v941, 2
    %v943 = vadd.f32 %v941, %v942
    %v944 = vrot.slane %v943, 1
    %v945 = vadd.f32 %v943, %v944
    %v946 = vsel %vm504, %v907, 0.0
    %v947 = vsel %vm504, %v908, 0.0
    %v948 = vadd.f32 %v946, %v947
    %v949 = vrot.slane %v948, 4
    %v950 = vadd.f32 %v948, %v949
    %v951 = vrot.slane %v950, 2
    %v952 = vadd.f32 %v950, %v951
    %v953 = vrot.slane %v952, 1
    %v954 = vadd.f32 %v952, %v953
    %v955 = vsel %vm504, %v909, 0.0
    %v956 = vsel %vm504, %v910, 0.0
    %v957 = vadd.f32 %v955, %v956
    %v958 = vrot.slane %v957, 4
    %v959 = vadd.f32 %v957, %v958
    %v960 = vrot.slane %v959, 2
    %v961 = vadd.f32 %v959, %v960
    %v962 = vrot.slane %v961, 1
    %v963 = vadd.f32 %v961, %v962
    %v964 = vsel %vm504, %v911, 0.0
    %v965 = vsel %vm504, %v912, 0.0
    %v966 = vadd.f32 %v964, %v965
    %v967 = vrot.slane %v966, 4
    %v968 = vadd.f32 %v966, %v967
    %v969 = vrot.slane %v968, 2
    %v970 = vadd.f32 %v968, %v969
    %v971 = vrot.slane %v970, 1
    %v972 = vadd.f32 %v970, %v971
    %v973 = vsel %vm504, %v913, 0.0
    %v974 = vsel %vm504, %v914, 0.0
    %v975 = vadd.f32 %v973, %v974
    %v976 = vrot.slane %v975, 4
    %v977 = vadd.f32 %v975, %v976
    %v978 = vrot.slane %v977, 2
    %v979 = vadd.f32 %v977, %v978
    %v980 = vrot.slane %v979, 1
    %v981 = vadd.f32 %v979, %v980
    %v982 = vsel %vm504, %v915, 0.0
    %v983 = vsel %vm504, %v916, 0.0
    %v984 = vadd.f32 %v982, %v983
    %v985 = vrot.slane %v984, 4
    %v986 = vadd.f32 %v984, %v985
    %v987 = vrot.slane %v986, 2
    %v988 = vadd.f32 %v986, %v987
    %v989 = vrot.slane %v988, 1
    %v990 = vadd.f32 %v988, %v989
    %v991 = vsel %vm504, %v917, 0.0
    %v992 = vsel %vm504, %v918, 0.0
    %v993 = vadd.f32 %v991, %v992
    %v994 = vrot.slane %v993, 4
    %v995 = vadd.f32 %v993, %v994
    %v996 = vrot.slane %v995, 2
    %v997 = vadd.f32 %v995, %v996
    %v998 = vrot.slane %v997, 1
    %v999 = vadd.f32 %v997, %v998
    %v1000 = vsel %vm504, %v919, 0.0
    %v1001 = vsel %vm504, %v920, 0.0
    %v1002 = vadd.f32 %v1000, %v1001
    %v1003 = vrot.slane %v1002, 4
    %v1004 = vadd.f32 %v1002, %v1003
    %v1005 = vrot.slane %v1004, 2
    %v1006 = vadd.f32 %v1004, %v1005
    %v1007 = vrot.slane %v1006, 1
    %v1008 = vadd.f32 %v1006, %v1007
    %v1009 = vsel %vm504, %v921, 0.0
    %v1010 = vsel %vm504, %v922, 0.0
    %v1011 = vadd.f32 %v1009, %v1010
    %v1012 = vrot.slane %v1011, 4
    %v1013 = vadd.f32 %v1011, %v1012
    %v1014 = vrot.slane %v1013, 2
    %v1015 = vadd.f32 %v1013, %v1014
    %v1016 = vrot.slane %v1015, 1
    %v1017 = vadd.f32 %v1015, %v1016
    %v1018 = vsel %vm504, %v923, 0.0
    %v1019 = vsel %vm504, %v924, 0.0
    %v1020 = vadd.f32 %v1018, %v1019
    %v1021 = vrot.slane %v1020, 4
    %v1022 = vadd.f32 %v1020, %v1021
    %v1023 = vrot.slane %v1022, 2
    %v1024 = vadd.f32 %v1022, %v1023
    %v1025 = vrot.slane %v1024, 1
    %v1026 = vadd.f32 %v1024, %v1025
    %v1027 = vsel %vm504, %v925, 0.0
    %v1028 = vsel %vm504, %v926, 0.0
    %v1029 = vadd.f32 %v1027, %v1028
    %v1030 = vrot.slane %v1029, 4
    %v1031 = vadd.f32 %v1029, %v1030
    %v1032 = vrot.slane %v1031, 2
    %v1033 = vadd.f32 %v1031, %v1032
    %v1034 = vrot.slane %v1033, 1
    %v1035 = vadd.f32 %v1033, %v1034
    %v1036 = vsel %vm504, %v927, 0.0
    %v1037 = vsel %vm504, %v928, 0.0
    %v1038 = vadd.f32 %v1036, %v1037
    %v1039 = vrot.slane %v1038, 4
    %v1040 = vadd.f32 %v1038, %v1039
    %v1041 = vrot.slane %v1040, 2
    %v1042 = vadd.f32 %v1040, %v1041
    %v1043 = vrot.slane %v1042, 1
    %v1044 = vadd.f32 %v1042, %v1043
    %v1045 = vsel %vm504, %v929, 0.0
    %v1046 = vsel %vm504, %v930, 0.0
    %v1047 = vadd.f32 %v1045, %v1046
    %v1048 = vrot.slane %v1047, 4
    %v1049 = vadd.f32 %v1047, %v1048
    %v1050 = vrot.slane %v1049, 2
    %v1051 = vadd.f32 %v1049, %v1050
    %v1052 = vrot.slane %v1051, 1
    %v1053 = vadd.f32 %v1051, %v1052
    %v1054 = vsel %vm504, %v931, 0.0
    %v1055 = vsel %vm504, %v932, 0.0
    %v1056 = vadd.f32 %v1054, %v1055
    %v1057 = vrot.slane %v1056, 4
    %v1058 = vadd.f32 %v1056, %v1057
    %v1059 = vrot.slane %v1058, 2
    %v1060 = vadd.f32 %v1058, %v1059
    %v1061 = vrot.slane %v1060, 1
    %v1062 = vadd.f32 %v1060, %v1061
    %v1063 = vsel %vm504, %v933, 0.0
    %v1064 = vsel %vm504, %v934, 0.0
    %v1065 = vadd.f32 %v1063, %v1064
    %v1066 = vrot.slane %v1065, 4
    %v1067 = vadd.f32 %v1065, %v1066
    %v1068 = vrot.slane %v1067, 2
    %v1069 = vadd.f32 %v1067, %v1068
    %v1070 = vrot.slane %v1069, 1
    %v1071 = vadd.f32 %v1069, %v1070
    %v1072 = vsel %vm504, %v935, 0.0
    %v1073 = vsel %vm504, %v936, 0.0
    %v1074 = vadd.f32 %v1072, %v1073
    %v1075 = vrot.slane %v1074, 4
    %v1076 = vadd.f32 %v1074, %v1075
    %v1077 = vrot.slane %v1076, 2
    %v1078 = vadd.f32 %v1076, %v1077
    %v1079 = vrot.slane %v1078, 1
    %v1080 = vadd.f32 %v1078, %v1079
    %v1081 = vmax.f32 %v945, 1e-30
    %v1082 = vmax.f32 %v954, 1e-30
    %v1083 = vmax.f32 %v963, 1e-30
    %v1084 = vmax.f32 %v972, 1e-30
    %v1085 = vmax.f32 %v981, 1e-30
    %v1086 = vmax.f32 %v990, 1e-30
    %v1087 = vmax.f32 %v999, 1e-30
    %v1088 = vmax.f32 %v1008, 1e-30
    %v1089 = vmax.f32 %v1017, 1e-30
    %v1090 = vmax.f32 %v1026, 1e-30
    %v1091 = vmax.f32 %v1035, 1e-30
    %v1092 = vmax.f32 %v1044, 1e-30
    %v1093 = vmax.f32 %v1053, 1e-30
    %v1094 = vmax.f32 %v1062, 1e-30
    %v1095 = vmax.f32 %v1071, 1e-30
    %v1096 = vmax.f32 %v1080, 1e-30
    %v1097 = vrcp.pop %v1081
    %v1098 = vrcp.pop %v1082
    %v1099 = vrcp.pop %v1083
    %v1100 = vrcp.pop %v1084
    %v1101 = vrcp.pop %v1085
    %v1102 = vrcp.pop %v1086
    %v1103 = vrcp.pop %v1087
    %v1104 = vrcp.pop %v1088
    %v1105 = vrcp.pop %v1089
    %v1106 = vrcp.pop %v1090
    %v1107 = vrcp.pop %v1091
    %v1108 = vrcp.pop %v1092
    %v1109 = vrcp.pop %v1093
    %v1110 = vrcp.pop %v1094
    %v1111 = vrcp.pop %v1095
    %v1112 = vrcp.pop %v1096
    %v1113 = vmul.f32 %v1081, %v1097
    %v1114 = vmul.f32 %v1082, %v1098
    %v1115 = vmul.f32 %v1083, %v1099
    %v1116 = vmul.f32 %v1084, %v1100
    %v1117 = vmul.f32 %v1085, %v1101
    %v1118 = vmul.f32 %v1086, %v1102
    %v1119 = vmul.f32 %v1087, %v1103
    %v1120 = vmul.f32 %v1088, %v1104
    %v1121 = vmul.f32 %v1089, %v1105
    %v1122 = vmul.f32 %v1090, %v1106
    %v1123 = vmul.f32 %v1091, %v1107
    %v1124 = vmul.f32 %v1092, %v1108
    %v1125 = vmul.f32 %v1093, %v1109
    %v1126 = vmul.f32 %v1094, %v1110
    %v1127 = vmul.f32 %v1095, %v1111
    %v1128 = vmul.f32 %v1096, %v1112
    %v1129 = vsub.f32 2.0, %v1113
    %v1130 = vsub.f32 2.0, %v1114
    %v1131 = vsub.f32 2.0, %v1115
    %v1132 = vsub.f32 2.0, %v1116
    %v1133 = vsub.f32 2.0, %v1117
    %v1134 = vsub.f32 2.0, %v1118
    %v1135 = vsub.f32 2.0, %v1119
    %v1136 = vsub.f32 2.0, %v1120
    %v1137 = vsub.f32 2.0, %v1121
    %v1138 = vsub.f32 2.0, %v1122
    %v1139 = vsub.f32 2.0, %v1123
    %v1140 = vsub.f32 2.0, %v1124
    %v1141 = vsub.f32 2.0, %v1125
    %v1142 = vsub.f32 2.0, %v1126
    %v1143 = vsub.f32 2.0, %v1127
    %v1144 = vsub.f32 2.0, %v1128
    %v1145 = vmul.f32 %v1097, %v1129
    %v1146 = vmul.f32 %v1098, %v1130
    %v1147 = vmul.f32 %v1099, %v1131
    %v1148 = vmul.f32 %v1100, %v1132
    %v1149 = vmul.f32 %v1101, %v1133
    %v1150 = vmul.f32 %v1102, %v1134
    %v1151 = vmul.f32 %v1103, %v1135
    %v1152 = vmul.f32 %v1104, %v1136
    %v1153 = vmul.f32 %v1105, %v1137
    %v1154 = vmul.f32 %v1106, %v1138
    %v1155 = vmul.f32 %v1107, %v1139
    %v1156 = vmul.f32 %v1108, %v1140
    %v1157 = vmul.f32 %v1109, %v1141
    %v1158 = vmul.f32 %v1110, %v1142
    %v1159 = vmul.f32 %v1111, %v1143
    %v1160 = vmul.f32 %v1112, %v1144
    %v1161 = vmul.f32 %v905, %v1145
    %v1162 = vmul.f32 %v906, %v1145
    %v1163 = vmul.f32 %v907, %v1146
    %v1164 = vmul.f32 %v908, %v1146
    %v1165 = vmul.f32 %v909, %v1147
    %v1166 = vmul.f32 %v910, %v1147
    %v1167 = vmul.f32 %v911, %v1148
    %v1168 = vmul.f32 %v912, %v1148
    %v1169 = vmul.f32 %v913, %v1149
    %v1170 = vmul.f32 %v914, %v1149
    %v1171 = vmul.f32 %v915, %v1150
    %v1172 = vmul.f32 %v916, %v1150
    %v1173 = vmul.f32 %v917, %v1151
    %v1174 = vmul.f32 %v918, %v1151
    %v1175 = vmul.f32 %v919, %v1152
    %v1176 = vmul.f32 %v920, %v1152
    %v1177 = vmul.f32 %v921, %v1153
    %v1178 = vmul.f32 %v922, %v1153
    %v1179 = vmul.f32 %v923, %v1154
    %v1180 = vmul.f32 %v924, %v1154
    %v1181 = vmul.f32 %v925, %v1155
    %v1182 = vmul.f32 %v926, %v1155
    %v1183 = vmul.f32 %v927, %v1156
    %v1184 = vmul.f32 %v928, %v1156
    %v1185 = vmul.f32 %v929, %v1157
    %v1186 = vmul.f32 %v930, %v1157
    %v1187 = vmul.f32 %v931, %v1158
    %v1188 = vmul.f32 %v932, %v1158
    %v1189 = vmul.f32 %v933, %v1159
    %v1190 = vmul.f32 %v934, %v1159
    %v1191 = vmul.f32 %v935, %v1160
    %v1192 = vmul.f32 %v936, %v1160
    %v1193 = vld [vmem:[%s7] sm:$0xff]
    %v1194 = vld [vmem:[%s8] sm:$0x1]
    %v1196 = vlaneseq
    %v1197 = vshrl.u32 %v1196, 7
    %v1198 = vsub.s32 0, %v1197
    %v1199 = vrot.slane %v1194, %v1198
    %v1202 = vsel %vm504, %v1161, 0
    %v1205 = vsel %vm504, %v1162, 0
    %v1208 = vsel %vm504, %v1163, 0
    %v1211 = vsel %vm504, %v1164, 0
    %v1214 = vsel %vm504, %v1165, 0
    %v1217 = vsel %vm504, %v1166, 0
    %v1220 = vsel %vm504, %v1167, 0
    %v1223 = vsel %vm504, %v1168, 0
    %v1226 = vsel %vm504, %v1169, 0
    %v1229 = vsel %vm504, %v1170, 0
    %v1232 = vsel %vm504, %v1171, 0
    %v1235 = vsel %vm504, %v1172, 0
    %v1238 = vsel %vm504, %v1173, 0
    %v1241 = vsel %vm504, %v1174, 0
    %v1244 = vsel %vm504, %v1175, 0
    %v1247 = vsel %vm504, %v1176, 0
    %v1250 = vsel %vm504, %v1177, 0
    %v1253 = vsel %vm504, %v1178, 0
    %v1256 = vsel %vm504, %v1179, 0
    %v1259 = vsel %vm504, %v1180, 0
    %v1262 = vsel %vm504, %v1181, 0
    %v1265 = vsel %vm504, %v1182, 0
    %v1268 = vsel %vm504, %v1183, 0
    %v1271 = vsel %vm504, %v1184, 0
    %v1274 = vsel %vm504, %v1185, 0
    %v1277 = vsel %vm504, %v1186, 0
    %v1280 = vsel %vm504, %v1187, 0
    %v1283 = vsel %vm504, %v1188, 0
    %v1286 = vsel %vm504, %v1189, 0
    %v1289 = vsel %vm504, %v1190, 0
    %v1292 = vsel %vm504, %v1191, 0
    %v1295 = vsel %vm504, %v1192, 0
    %1297 = vmatprep.subr.mxu0 0.0
    %1298 = vmatpush1.msra.mxu0 0.0
    %1299 = vmatprep.subr.mxu0 0.0
    %1300 = vmatpush1.msra.mxu0 0.0
    %1301 = vmatprep.subr.mxu0 0.0
    %1302 = vmatpush1.msra.mxu0 0.0
    %1303 = vmatprep.subr.mxu0 0.0
    %1304 = vmatpush1.msra.mxu0 0.0
    %1305 = vmatprep.subr.mxu0 0.0
    %1306 = vmatpush1.msra.mxu0 0.0
    %1307 = vmatprep.subr.mxu0 0.0
    %1308 = vmatpush1.msra.mxu0 0.0
    %1309 = vmatprep.subr.mxu0 0.0
    %1310 = vmatpush1.msra.mxu0 0.0
    %1311 = vmatprep.subr.mxu0 0.0
    %1312 = vmatpush1.msra.mxu0 0.0
    %1313 = vmatprep.subr.mxu0 0.0
    %1314 = vmatpush1.msra.mxu0 0.0
    %1315 = vmatprep.subr.mxu0 0.0
    %1316 = vmatpush1.msra.mxu0 0.0
    %1317 = vmatprep.subr.mxu0 0.0
    %1318 = vmatpush1.msra.mxu0 0.0
    %1319 = vmatprep.subr.mxu0 0.0
    %1320 = vmatpush1.msra.mxu0 0.0
    %1321 = vmatprep.subr.mxu0 0.0
    %1322 = vmatpush1.msra.mxu0 0.0
    %1323 = vmatprep.subr.mxu0 0.0
    %1324 = vmatpush1.msra.mxu0 0.0
    %1325 = vmatprep.subr.mxu0 0.0
    %1326 = vmatpush1.msra.mxu0 0.0
    %1327 = vmatprep.subr.mxu0 0.0
    %1328 = vmatpush1.msra.mxu0 %v1193
    %1329 = vmatprep.subr.mxu0 0.0
    %1330 = vmatpush2.msra.mxu0 0.0
    %1331 = vmatprep.subr.mxu0 0.0
    %1332 = vmatpush2.msra.mxu0 0.0
    %1333 = vmatprep.subr.mxu0 0.0
    %1334 = vmatpush2.msra.mxu0 0.0
    %1335 = vmatprep.subr.mxu0 0.0
    %1336 = vmatpush2.msra.mxu0 0.0
    %1337 = vmatprep.subr.mxu0 0.0
    %1338 = vmatpush2.msra.mxu0 0.0
    %1339 = vmatprep.subr.mxu0 0.0
    %1340 = vmatpush2.msra.mxu0 0.0
    %1341 = vmatprep.subr.mxu0 0.0
    %1342 = vmatpush2.msra.mxu0 0.0
    %1343 = vmatprep.subr.mxu0 0.0
    %1344 = vmatpush2.msra.mxu0 0.0
    %1345 = vmatprep.subr.mxu0 0.0
    %1346 = vmatpush2.msra.mxu0 0.0
    %1347 = vmatprep.subr.mxu0 0.0
    %1348 = vmatpush2.msra.mxu0 0.0
    %1349 = vmatprep.subr.mxu0 0.0
    %1350 = vmatpush2.msra.mxu0 0.0
    %1351 = vmatprep.subr.mxu0 0.0
    %1352 = vmatpush2.msra.mxu0 0.0
    %1353 = vmatprep.subr.mxu0 0.0
    %1354 = vmatpush2.msra.mxu0 0.0
    %1355 = vmatprep.subr.mxu0 0.0
    %1356 = vmatpush2.msra.mxu0 0.0
    %1357 = vmatprep.subr.mxu0 0.0
    %1358 = vmatpush2.msra.mxu0 0.0
    %1359 = vmatprep.subr.mxu0 0.0
    %1360 = vmatpush2.msra.mxu0 0.0
    %1361 = vmatprep.mubr.f32.mxu0 0.0
    %1362 = vmatmul.mubr.f32.gmra.mxu0 %v1202
    %v1363 = vpop.f32.mrf.mxu0
    %v1364 = vadd.f32 %v1199, %v1363
    %v1365 = vpop.f32.mrf.mxu0
    %1366 = vmatprep.mubr.f32.mxu0 0.0
    %1367 = vmatmul.mubr.f32.gmra.mxu0 %v1205
    %v1368 = vpop.f32.mrf.mxu0
    %v1369 = vadd.f32 %v1199, %v1368
    %v1370 = vpop.f32.mrf.mxu0
    %1371 = vmatprep.mubr.f32.mxu0 0.0
    %1372 = vmatmul.mubr.f32.gmra.mxu0 %v1208
    %v1373 = vpop.f32.mrf.mxu0
    %v1374 = vadd.f32 %v1199, %v1373
    %v1375 = vpop.f32.mrf.mxu0
    %1376 = vmatprep.mubr.f32.mxu0 0.0
    %1377 = vmatmul.mubr.f32.gmra.mxu0 %v1211
    %v1378 = vpop.f32.mrf.mxu0
    %v1379 = vadd.f32 %v1199, %v1378
    %v1380 = vpop.f32.mrf.mxu0
    %1381 = vmatprep.mubr.f32.mxu0 0.0
    %1382 = vmatmul.mubr.f32.gmra.mxu0 %v1214
    %v1383 = vpop.f32.mrf.mxu0
    %v1384 = vadd.f32 %v1199, %v1383
    %v1385 = vpop.f32.mrf.mxu0
    %1386 = vmatprep.mubr.f32.mxu0 0.0
    %1387 = vmatmul.mubr.f32.gmra.mxu0 %v1217
    %v1388 = vpop.f32.mrf.mxu0
    %v1389 = vadd.f32 %v1199, %v1388
    %v1390 = vpop.f32.mrf.mxu0
    %1391 = vmatprep.mubr.f32.mxu0 0.0
    %1392 = vmatmul.mubr.f32.gmra.mxu0 %v1220
    %v1393 = vpop.f32.mrf.mxu0
    %v1394 = vadd.f32 %v1199, %v1393
    %v1395 = vpop.f32.mrf.mxu0
    %1396 = vmatprep.mubr.f32.mxu0 0.0
    %1397 = vmatmul.mubr.f32.gmra.mxu0 %v1223
    %v1398 = vpop.f32.mrf.mxu0
    %v1399 = vadd.f32 %v1199, %v1398
    %v1400 = vpop.f32.mrf.mxu0
    %1401 = vmatprep.mubr.f32.mxu0 0.0
    %1402 = vmatmul.mubr.f32.gmra.mxu0 %v1226
    %v1403 = vpop.f32.mrf.mxu0
    %v1404 = vadd.f32 %v1199, %v1403
    %v1405 = vpop.f32.mrf.mxu0
    %1406 = vmatprep.mubr.f32.mxu0 0.0
    %1407 = vmatmul.mubr.f32.gmra.mxu0 %v1229
    %v1408 = vpop.f32.mrf.mxu0
    %v1409 = vadd.f32 %v1199, %v1408
    %v1410 = vpop.f32.mrf.mxu0
    %1411 = vmatprep.mubr.f32.mxu0 0.0
    %1412 = vmatmul.mubr.f32.gmra.mxu0 %v1232
    %v1413 = vpop.f32.mrf.mxu0
    %v1414 = vadd.f32 %v1199, %v1413
    %v1415 = vpop.f32.mrf.mxu0
    %1416 = vmatprep.mubr.f32.mxu0 0.0
    %1417 = vmatmul.mubr.f32.gmra.mxu0 %v1235
    %v1418 = vpop.f32.mrf.mxu0
    %v1419 = vadd.f32 %v1199, %v1418
    %v1420 = vpop.f32.mrf.mxu0
    %1421 = vmatprep.mubr.f32.mxu0 0.0
    %1422 = vmatmul.mubr.f32.gmra.mxu0 %v1238
    %v1423 = vpop.f32.mrf.mxu0
    %v1424 = vadd.f32 %v1199, %v1423
    %v1425 = vpop.f32.mrf.mxu0
    %1426 = vmatprep.mubr.f32.mxu0 0.0
    %1427 = vmatmul.mubr.f32.gmra.mxu0 %v1241
    %v1428 = vpop.f32.mrf.mxu0
    %v1429 = vadd.f32 %v1199, %v1428
    %v1430 = vpop.f32.mrf.mxu0
    %1431 = vmatprep.mubr.f32.mxu0 0.0
    %1432 = vmatmul.mubr.f32.gmra.mxu0 %v1244
    %v1433 = vpop.f32.mrf.mxu0
    %v1434 = vadd.f32 %v1199, %v1433
    %v1435 = vpop.f32.mrf.mxu0
    %1436 = vmatprep.mubr.f32.mxu0 0.0
    %1437 = vmatmul.mubr.f32.gmra.mxu0 %v1247
    %v1438 = vpop.f32.mrf.mxu0
    %v1439 = vadd.f32 %v1199, %v1438
    %v1440 = vpop.f32.mrf.mxu0
    %1441 = vmatprep.mubr.f32.mxu0 0.0
    %1442 = vmatmul.mubr.f32.gmra.mxu0 %v1250
    %v1443 = vpop.f32.mrf.mxu0
    %v1444 = vadd.f32 %v1199, %v1443
    %v1445 = vpop.f32.mrf.mxu0
    %1446 = vmatprep.mubr.f32.mxu0 0.0
    %1447 = vmatmul.mubr.f32.gmra.mxu0 %v1253
    %v1448 = vpop.f32.mrf.mxu0
    %v1449 = vadd.f32 %v1199, %v1448
    %v1450 = vpop.f32.mrf.mxu0
    %1451 = vmatprep.mubr.f32.mxu0 0.0
    %1452 = vmatmul.mubr.f32.gmra.mxu0 %v1256
    %v1453 = vpop.f32.mrf.mxu0
    %v1454 = vadd.f32 %v1199, %v1453
    %v1455 = vpop.f32.mrf.mxu0
    %1456 = vmatprep.mubr.f32.mxu0 0.0
    %1457 = vmatmul.mubr.f32.gmra.mxu0 %v1259
    %v1458 = vpop.f32.mrf.mxu0
    %v1459 = vadd.f32 %v1199, %v1458
    %v1460 = vpop.f32.mrf.mxu0
    %1461 = vmatprep.mubr.f32.mxu0 0.0
    %1462 = vmatmul.mubr.f32.gmra.mxu0 %v1262
    %v1463 = vpop.f32.mrf.mxu0
    %v1464 = vadd.f32 %v1199, %v1463
    %v1465 = vpop.f32.mrf.mxu0
    %1466 = vmatprep.mubr.f32.mxu0 0.0
    %1467 = vmatmul.mubr.f32.gmra.mxu0 %v1265
    %v1468 = vpop.f32.mrf.mxu0
    %v1469 = vadd.f32 %v1199, %v1468
    %v1470 = vpop.f32.mrf.mxu0
    %1471 = vmatprep.mubr.f32.mxu0 0.0
    %1472 = vmatmul.mubr.f32.gmra.mxu0 %v1268
    %v1473 = vpop.f32.mrf.mxu0
    %v1474 = vadd.f32 %v1199, %v1473
    %v1475 = vpop.f32.mrf.mxu0
    %1476 = vmatprep.mubr.f32.mxu0 0.0
    %1477 = vmatmul.mubr.f32.gmra.mxu0 %v1271
    %v1478 = vpop.f32.mrf.mxu0
    %v1479 = vadd.f32 %v1199, %v1478
    %v1480 = vpop.f32.mrf.mxu0
    %1481 = vmatprep.mubr.f32.mxu0 0.0
    %1482 = vmatmul.mubr.f32.gmra.mxu0 %v1274
    %v1483 = vpop.f32.mrf.mxu0
    %v1484 = vadd.f32 %v1199, %v1483
    %v1485 = vpop.f32.mrf.mxu0
    %1486 = vmatprep.mubr.f32.mxu0 0.0
    %1487 = vmatmul.mubr.f32.gmra.mxu0 %v1277
    %v1488 = vpop.f32.mrf.mxu0
    %v1489 = vadd.f32 %v1199, %v1488
    %v1490 = vpop.f32.mrf.mxu0
    %1491 = vmatprep.mubr.f32.mxu0 0.0
    %1492 = vmatmul.mubr.f32.gmra.mxu0 %v1280
    %v1493 = vpop.f32.mrf.mxu0
    %v1494 = vadd.f32 %v1199, %v1493
    %v1495 = vpop.f32.mrf.mxu0
    %1496 = vmatprep.mubr.f32.mxu0 0.0
    %1497 = vmatmul.mubr.f32.gmra.mxu0 %v1283
    %v1498 = vpop.f32.mrf.mxu0
    %v1499 = vadd.f32 %v1199, %v1498
    %v1500 = vpop.f32.mrf.mxu0
    %1501 = vmatprep.mubr.f32.mxu0 0.0
    %1502 = vmatmul.mubr.f32.gmra.mxu0 %v1286
    %v1503 = vpop.f32.mrf.mxu0
    %v1504 = vadd.f32 %v1199, %v1503
    %v1505 = vpop.f32.mrf.mxu0
    %1506 = vmatprep.mubr.f32.mxu0 0.0
    %1507 = vmatmul.mubr.f32.gmra.mxu0 %v1289
    %v1508 = vpop.f32.mrf.mxu0
    %v1509 = vadd.f32 %v1199, %v1508
    %v1510 = vpop.f32.mrf.mxu0
    %1511 = vmatprep.mubr.f32.mxu0 0.0
    %1512 = vmatmul.mubr.f32.gmra.mxu0 %v1292
    %v1513 = vpop.f32.mrf.mxu0
    %v1514 = vadd.f32 %v1199, %v1513
    %v1515 = vpop.f32.mrf.mxu0
    %1516 = vmatprep.mubr.f32.mxu0 0.0
    %1517 = vmatmul.mubr.f32.gmra.mxu0 %v1295
    %v1518 = vpop.f32.mrf.mxu0
    %v1519 = vadd.f32 %v1199, %v1518
    %v1520 = vpop.f32.mrf.mxu0
    %1521 = vdwg.mxu0
    %v1522 = vmul.f32 %v1364, 0.5
    %v1523 = vmul.f32 %v1369, 0.5
    %v1524 = vmul.f32 %v1374, 0.5
    %v1525 = vmul.f32 %v1379, 0.5
    %v1526 = vmul.f32 %v1384, 0.5
    %v1527 = vmul.f32 %v1389, 0.5
    %v1528 = vmul.f32 %v1394, 0.5
    %v1529 = vmul.f32 %v1399, 0.5
    %v1530 = vmul.f32 %v1404, 0.5
    %v1531 = vmul.f32 %v1409, 0.5
    %v1532 = vmul.f32 %v1414, 0.5
    %v1533 = vmul.f32 %v1419, 0.5
    %v1534 = vmul.f32 %v1424, 0.5
    %v1535 = vmul.f32 %v1429, 0.5
    %v1536 = vmul.f32 %v1434, 0.5
    %v1537 = vmul.f32 %v1439, 0.5
    %v1538 = vmul.f32 %v1444, 0.5
    %v1539 = vmul.f32 %v1449, 0.5
    %v1540 = vmul.f32 %v1454, 0.5
    %v1541 = vmul.f32 %v1459, 0.5
    %v1542 = vmul.f32 %v1464, 0.5
    %v1543 = vmul.f32 %v1469, 0.5
    %v1544 = vmul.f32 %v1474, 0.5
    %v1545 = vmul.f32 %v1479, 0.5
    %v1546 = vmul.f32 %v1484, 0.5
    %v1547 = vmul.f32 %v1489, 0.5
    %v1548 = vmul.f32 %v1494, 0.5
    %v1549 = vmul.f32 %v1499, 0.5
    %v1550 = vmul.f32 %v1504, 0.5
    %v1551 = vmul.f32 %v1509, 0.5
    %v1552 = vmul.f32 %v1514, 0.5
    %v1553 = vmul.f32 %v1519, 0.5
    %v1554 = vmul.f32 %v1364, 0.70710677
    %v1555 = vmul.f32 %v1369, 0.70710677
    %v1556 = vmul.f32 %v1374, 0.70710677
    %v1557 = vmul.f32 %v1379, 0.70710677
    %v1558 = vmul.f32 %v1384, 0.70710677
    %v1559 = vmul.f32 %v1389, 0.70710677
    %v1560 = vmul.f32 %v1394, 0.70710677
    %v1561 = vmul.f32 %v1399, 0.70710677
    %v1562 = vmul.f32 %v1404, 0.70710677
    %v1563 = vmul.f32 %v1409, 0.70710677
    %v1564 = vmul.f32 %v1414, 0.70710677
    %v1565 = vmul.f32 %v1419, 0.70710677
    %v1566 = vmul.f32 %v1424, 0.70710677
    %v1567 = vmul.f32 %v1429, 0.70710677
    %v1568 = vmul.f32 %v1434, 0.70710677
    %v1569 = vmul.f32 %v1439, 0.70710677
    %v1570 = vmul.f32 %v1444, 0.70710677
    %v1571 = vmul.f32 %v1449, 0.70710677
    %v1572 = vmul.f32 %v1454, 0.70710677
    %v1573 = vmul.f32 %v1459, 0.70710677
    %v1574 = vmul.f32 %v1464, 0.70710677
    %v1575 = vmul.f32 %v1469, 0.70710677
    %v1576 = vmul.f32 %v1474, 0.70710677
    %v1577 = vmul.f32 %v1479, 0.70710677
    %v1578 = vmul.f32 %v1484, 0.70710677
    %v1579 = vmul.f32 %v1489, 0.70710677
    %v1580 = vmul.f32 %v1494, 0.70710677
    %v1581 = vmul.f32 %v1499, 0.70710677
    %v1582 = vmul.f32 %v1504, 0.70710677
    %v1583 = vmul.f32 %v1509, 0.70710677
    %v1584 = vmul.f32 %v1514, 0.70710677
    %v1585 = vmul.f32 %v1519, 0.70710677
    %v1586 = verf.f32.pop %v1554
    %v1587 = verf.f32.pop %v1555
    %v1588 = verf.f32.pop %v1556
    %v1589 = verf.f32.pop %v1557
    %v1590 = verf.f32.pop %v1558
    %v1591 = verf.f32.pop %v1559
    %v1592 = verf.f32.pop %v1560
    %v1593 = verf.f32.pop %v1561
    %v1594 = verf.f32.pop %v1562
    %v1595 = verf.f32.pop %v1563
    %v1596 = verf.f32.pop %v1564
    %v1597 = verf.f32.pop %v1565
    %v1598 = verf.f32.pop %v1566
    %v1599 = verf.f32.pop %v1567
    %v1600 = verf.f32.pop %v1568
    %v1601 = verf.f32.pop %v1569
    %v1602 = verf.f32.pop %v1570
    %v1603 = verf.f32.pop %v1571
    %v1604 = verf.f32.pop %v1572
    %v1605 = verf.f32.pop %v1573
    %v1606 = verf.f32.pop %v1574
    %v1607 = verf.f32.pop %v1575
    %v1608 = verf.f32.pop %v1576
    %v1609 = verf.f32.pop %v1577
    %v1610 = verf.f32.pop %v1578
    %v1611 = verf.f32.pop %v1579
    %v1612 = verf.f32.pop %v1580
    %v1613 = verf.f32.pop %v1581
    %v1614 = verf.f32.pop %v1582
    %v1615 = verf.f32.pop %v1583
    %v1616 = verf.f32.pop %v1584
    %v1617 = verf.f32.pop %v1585
    %v1618 = vadd.f32 %v1586, 1.0
    %v1619 = vadd.f32 %v1587, 1.0
    %v1620 = vadd.f32 %v1588, 1.0
    %v1621 = vadd.f32 %v1589, 1.0
    %v1622 = vadd.f32 %v1590, 1.0
    %v1623 = vadd.f32 %v1591, 1.0
    %v1624 = vadd.f32 %v1592, 1.0
    %v1625 = vadd.f32 %v1593, 1.0
    %v1626 = vadd.f32 %v1594, 1.0
    %v1627 = vadd.f32 %v1595, 1.0
    %v1628 = vadd.f32 %v1596, 1.0
    %v1629 = vadd.f32 %v1597, 1.0
    %v1630 = vadd.f32 %v1598, 1.0
    %v1631 = vadd.f32 %v1599, 1.0
    %v1632 = vadd.f32 %v1600, 1.0
    %v1633 = vadd.f32 %v1601, 1.0
    %v1634 = vadd.f32 %v1602, 1.0
    %v1635 = vadd.f32 %v1603, 1.0
    %v1636 = vadd.f32 %v1604, 1.0
    %v1637 = vadd.f32 %v1605, 1.0
    %v1638 = vadd.f32 %v1606, 1.0
    %v1639 = vadd.f32 %v1607, 1.0
    %v1640 = vadd.f32 %v1608, 1.0
    %v1641 = vadd.f32 %v1609, 1.0
    %v1642 = vadd.f32 %v1610, 1.0
    %v1643 = vadd.f32 %v1611, 1.0
    %v1644 = vadd.f32 %v1612, 1.0
    %v1645 = vadd.f32 %v1613, 1.0
    %v1646 = vadd.f32 %v1614, 1.0
    %v1647 = vadd.f32 %v1615, 1.0
    %v1648 = vadd.f32 %v1616, 1.0
    %v1649 = vadd.f32 %v1617, 1.0
    %v1650 = vmul.f32 %v1522, %v1618
    %v1651 = vmul.f32 %v1523, %v1619
    %v1652 = vmul.f32 %v1524, %v1620
    %v1653 = vmul.f32 %v1525, %v1621
    %v1654 = vmul.f32 %v1526, %v1622
    %v1655 = vmul.f32 %v1527, %v1623
    %v1656 = vmul.f32 %v1528, %v1624
    %v1657 = vmul.f32 %v1529, %v1625
    %v1658 = vmul.f32 %v1530, %v1626
    %v1659 = vmul.f32 %v1531, %v1627
    %v1660 = vmul.f32 %v1532, %v1628
    %v1661 = vmul.f32 %v1533, %v1629
    %v1662 = vmul.f32 %v1534, %v1630
    %v1663 = vmul.f32 %v1535, %v1631
    %v1664 = vmul.f32 %v1536, %v1632
    %v1665 = vmul.f32 %v1537, %v1633
    %v1666 = vmul.f32 %v1538, %v1634
    %v1667 = vmul.f32 %v1539, %v1635
    %v1668 = vmul.f32 %v1540, %v1636
    %v1669 = vmul.f32 %v1541, %v1637
    %v1670 = vmul.f32 %v1542, %v1638
    %v1671 = vmul.f32 %v1543, %v1639
    %v1672 = vmul.f32 %v1544, %v1640
    %v1673 = vmul.f32 %v1545, %v1641
    %v1674 = vmul.f32 %v1546, %v1642
    %v1675 = vmul.f32 %v1547, %v1643
    %v1676 = vmul.f32 %v1548, %v1644
    %v1677 = vmul.f32 %v1549, %v1645
    %v1678 = vmul.f32 %v1550, %v1646
    %v1679 = vmul.f32 %v1551, %v1647
    %v1680 = vmul.f32 %v1552, %v1648
    %v1681 = vmul.f32 %v1553, %v1649
    %v1682 = vld [vmem:[%s9] sm:$0xff]
    %v1683 = vld [vmem:[%s9 + $0x8] sm:$0xff]
    %v1684 = vld [vmem:[%s9 + $0x10] sm:$0xff]
    %v1685 = vld [vmem:[%s9 + $0x18] sm:$0xff]
    %v1686 = vld [vmem:[%s9 + $0x20] sm:$0xff]
    %v1687 = vld [vmem:[%s9 + $0x28] sm:$0xff]
    %v1688 = vld [vmem:[%s9 + $0x30] sm:$0xff]
    %v1689 = vld [vmem:[%s9 + $0x38] sm:$0xff]
    %v1690 = vld [vmem:[%s10] sm:$0x1]
    %v1692 = vlaneseq
    %v1693 = vshrl.u32 %v1692, 7
    %v1694 = vsub.s32 0, %v1693
    %v1695 = vrot.slane %v1690, %v1694
    %vm1697 = vcmask 523264
    %v1699 = vsel %vm1697, %v1650, 0
    %v1702 = vsel %vm1697, %v1651, 0
    %v1705 = vsel %vm1697, %v1652, 0
    %v1708 = vsel %vm1697, %v1653, 0
    %v1711 = vsel %vm1697, %v1654, 0
    %v1714 = vsel %vm1697, %v1655, 0
    %v1717 = vsel %vm1697, %v1656, 0
    %v1720 = vsel %vm1697, %v1657, 0
    %v1723 = vsel %vm1697, %v1658, 0
    %v1726 = vsel %vm1697, %v1659, 0
    %v1729 = vsel %vm1697, %v1660, 0
    %v1732 = vsel %vm1697, %v1661, 0
    %v1735 = vsel %vm1697, %v1662, 0
    %v1738 = vsel %vm1697, %v1663, 0
    %v1741 = vsel %vm1697, %v1664, 0
    %v1744 = vsel %vm1697, %v1665, 0
    %v1747 = vsel %vm1697, %v1666, 0
    %v1750 = vsel %vm1697, %v1667, 0
    %v1753 = vsel %vm1697, %v1668, 0
    %v1756 = vsel %vm1697, %v1669, 0
    %v1759 = vsel %vm1697, %v1670, 0
    %v1762 = vsel %vm1697, %v1671, 0
    %v1765 = vsel %vm1697, %v1672, 0
    %v1768 = vsel %vm1697, %v1673, 0
    %v1771 = vsel %vm1697, %v1674, 0
    %v1774 = vsel %vm1697, %v1675, 0
    %v1777 = vsel %vm1697, %v1676, 0
    %v1780 = vsel %vm1697, %v1677, 0
    %v1783 = vsel %vm1697, %v1678, 0
    %v1786 = vsel %vm1697, %v1679, 0
    %v1789 = vsel %vm1697, %v1680, 0
    %v1792 = vsel %vm1697, %v1681, 0
    %1794 = vmatprep.subr.mxu0 0.0
    %1795 = vmatpush1.msra.mxu0 0.0
    %1796 = vmatprep.subr.mxu0 0.0
    %1797 = vmatpush1.msra.mxu0 0.0
    %1798 = vmatprep.subr.mxu0 0.0
    %1799 = vmatpush1.msra.mxu0 0.0
    %1800 = vmatprep.subr.mxu0 0.0
    %1801 = vmatpush1.msra.mxu0 0.0
    %1802 = vmatprep.subr.mxu0 0.0
    %1803 = vmatpush1.msra.mxu0 0.0
    %1804 = vmatprep.subr.mxu0 0.0
    %1805 = vmatpush1.msra.mxu0 0.0
    %1806 = vmatprep.subr.mxu0 0.0
    %1807 = vmatpush1.msra.mxu0 0.0
    %1808 = vmatprep.subr.mxu0 0.0
    %1809 = vmatpush1.msra.mxu0 0.0
    %1810 = vmatprep.subr.mxu0 0.0
    %1811 = vmatpush1.msra.mxu0 %v1689
    %1812 = vmatprep.subr.mxu0 0.0
    %1813 = vmatpush1.msra.mxu0 %v1688
    %1814 = vmatprep.subr.mxu0 0.0
    %1815 = vmatpush1.msra.mxu0 %v1687
    %1816 = vmatprep.subr.mxu0 0.0
    %1817 = vmatpush1.msra.mxu0 %v1686
    %1818 = vmatprep.subr.mxu0 0.0
    %1819 = vmatpush1.msra.mxu0 %v1685
    %1820 = vmatprep.subr.mxu0 0.0
    %1821 = vmatpush1.msra.mxu0 %v1684
    %1822 = vmatprep.subr.mxu0 0.0
    %1823 = vmatpush1.msra.mxu0 %v1683
    %1824 = vmatprep.subr.mxu0 0.0
    %1825 = vmatpush1.msra.mxu0 %v1682
    %1826 = vmatprep.subr.mxu0 0.0
    %1827 = vmatpush2.msra.mxu0 0.0
    %1828 = vmatprep.subr.mxu0 0.0
    %1829 = vmatpush2.msra.mxu0 0.0
    %1830 = vmatprep.subr.mxu0 0.0
    %1831 = vmatpush2.msra.mxu0 0.0
    %1832 = vmatprep.subr.mxu0 0.0
    %1833 = vmatpush2.msra.mxu0 0.0
    %1834 = vmatprep.subr.mxu0 0.0
    %1835 = vmatpush2.msra.mxu0 0.0
    %1836 = vmatprep.subr.mxu0 0.0
    %1837 = vmatpush2.msra.mxu0 0.0
    %1838 = vmatprep.subr.mxu0 0.0
    %1839 = vmatpush2.msra.mxu0 0.0
    %1840 = vmatprep.subr.mxu0 0.0
    %1841 = vmatpush2.msra.mxu0 0.0
    %1842 = vmatprep.subr.mxu0 0.0
    %1843 = vmatpush2.msra.mxu0 0.0
    %1844 = vmatprep.subr.mxu0 0.0
    %1845 = vmatpush2.msra.mxu0 0.0
    %1846 = vmatprep.subr.mxu0 0.0
    %1847 = vmatpush2.msra.mxu0 0.0
    %1848 = vmatprep.subr.mxu0 0.0
    %1849 = vmatpush2.msra.mxu0 0.0
    %1850 = vmatprep.subr.mxu0 0.0
    %1851 = vmatpush2.msra.mxu0 0.0
    %1852 = vmatprep.subr.mxu0 0.0
    %1853 = vmatpush2.msra.mxu0 0.0
    %1854 = vmatprep.subr.mxu0 0.0
    %1855 = vmatpush2.msra.mxu0 0.0
    %1856 = vmatprep.subr.mxu0 0.0
    %1857 = vmatpush2.msra.mxu0 0.0
    %1858 = vmatprep.mubr.f32.mxu0 0.0
    %1859 = vmatmul.mubr.f32.gmra.mxu0 %v1699
    %v1860 = vpop.f32.mrf.mxu0
    %v1861 = vadd.f32 %v1695, %v1860
    %v1862 = vpop.f32.mrf.mxu0
    %1863 = vmatprep.mubr.f32.mxu0 0.0
    %1864 = vmatmul.mubr.f32.gmra.mxu0 %v1702
    %v1865 = vpop.f32.mrf.mxu0
    %v1866 = vadd.f32 %v1695, %v1865
    %v1867 = vpop.f32.mrf.mxu0
    %1868 = vmatprep.mubr.f32.mxu0 0.0
    %1869 = vmatmul.mubr.f32.gmra.mxu0 %v1705
    %v1870 = vpop.f32.mrf.mxu0
    %v1871 = vadd.f32 %v1695, %v1870
    %v1872 = vpop.f32.mrf.mxu0
    %1873 = vmatprep.mubr.f32.mxu0 0.0
    %1874 = vmatmul.mubr.f32.gmra.mxu0 %v1708
    %v1875 = vpop.f32.mrf.mxu0
    %v1876 = vadd.f32 %v1695, %v1875
    %v1877 = vpop.f32.mrf.mxu0
    %1878 = vmatprep.mubr.f32.mxu0 0.0
    %1879 = vmatmul.mubr.f32.gmra.mxu0 %v1711
    %v1880 = vpop.f32.mrf.mxu0
    %v1881 = vadd.f32 %v1695, %v1880
    %v1882 = vpop.f32.mrf.mxu0
    %1883 = vmatprep.mubr.f32.mxu0 0.0
    %1884 = vmatmul.mubr.f32.gmra.mxu0 %v1714
    %v1885 = vpop.f32.mrf.mxu0
    %v1886 = vadd.f32 %v1695, %v1885
    %v1887 = vpop.f32.mrf.mxu0
    %1888 = vmatprep.mubr.f32.mxu0 0.0
    %1889 = vmatmul.mubr.f32.gmra.mxu0 %v1717
    %v1890 = vpop.f32.mrf.mxu0
    %v1891 = vadd.f32 %v1695, %v1890
    %v1892 = vpop.f32.mrf.mxu0
    %1893 = vmatprep.mubr.f32.mxu0 0.0
    %1894 = vmatmul.mubr.f32.gmra.mxu0 %v1720
    %v1895 = vpop.f32.mrf.mxu0
    %v1896 = vadd.f32 %v1695, %v1895
    %v1897 = vpop.f32.mrf.mxu0
    %1898 = vmatprep.mubr.f32.mxu0 0.0
    %1899 = vmatmul.mubr.f32.gmra.mxu0 %v1723
    %v1900 = vpop.f32.mrf.mxu0
    %v1901 = vadd.f32 %v1695, %v1900
    %v1902 = vpop.f32.mrf.mxu0
    %1903 = vmatprep.mubr.f32.mxu0 0.0
    %1904 = vmatmul.mubr.f32.gmra.mxu0 %v1726
    %v1905 = vpop.f32.mrf.mxu0
    %v1906 = vadd.f32 %v1695, %v1905
    %v1907 = vpop.f32.mrf.mxu0
    %1908 = vmatprep.mubr.f32.mxu0 0.0
    %1909 = vmatmul.mubr.f32.gmra.mxu0 %v1729
    %v1910 = vpop.f32.mrf.mxu0
    %v1911 = vadd.f32 %v1695, %v1910
    %v1912 = vpop.f32.mrf.mxu0
    %1913 = vmatprep.mubr.f32.mxu0 0.0
    %1914 = vmatmul.mubr.f32.gmra.mxu0 %v1732
    %v1915 = vpop.f32.mrf.mxu0
    %v1916 = vadd.f32 %v1695, %v1915
    %v1917 = vpop.f32.mrf.mxu0
    %1918 = vmatprep.mubr.f32.mxu0 0.0
    %1919 = vmatmul.mubr.f32.gmra.mxu0 %v1735
    %v1920 = vpop.f32.mrf.mxu0
    %v1921 = vadd.f32 %v1695, %v1920
    %v1922 = vpop.f32.mrf.mxu0
    %1923 = vmatprep.mubr.f32.mxu0 0.0
    %1924 = vmatmul.mubr.f32.gmra.mxu0 %v1738
    %v1925 = vpop.f32.mrf.mxu0
    %v1926 = vadd.f32 %v1695, %v1925
    %v1927 = vpop.f32.mrf.mxu0
    %1928 = vmatprep.mubr.f32.mxu0 0.0
    %1929 = vmatmul.mubr.f32.gmra.mxu0 %v1741
    %v1930 = vpop.f32.mrf.mxu0
    %v1931 = vadd.f32 %v1695, %v1930
    %v1932 = vpop.f32.mrf.mxu0
    %1933 = vmatprep.mubr.f32.mxu0 0.0
    %1934 = vmatmul.mubr.f32.gmra.mxu0 %v1744
    %v1935 = vpop.f32.mrf.mxu0
    %v1936 = vadd.f32 %v1695, %v1935
    %v1937 = vpop.f32.mrf.mxu0
    %1938 = vmatprep.mubr.f32.mxu0 0.0
    %1939 = vmatmul.mubr.f32.gmra.mxu0 %v1747
    %v1940 = vpop.f32.mrf.mxu0
    %v1941 = vadd.f32 %v1695, %v1940
    %v1942 = vpop.f32.mrf.mxu0
    %1943 = vmatprep.mubr.f32.mxu0 0.0
    %1944 = vmatmul.mubr.f32.gmra.mxu0 %v1750
    %v1945 = vpop.f32.mrf.mxu0
    %v1946 = vadd.f32 %v1695, %v1945
    %v1947 = vpop.f32.mrf.mxu0
    %1948 = vmatprep.mubr.f32.mxu0 0.0
    %1949 = vmatmul.mubr.f32.gmra.mxu0 %v1753
    %v1950 = vpop.f32.mrf.mxu0
    %v1951 = vadd.f32 %v1695, %v1950
    %v1952 = vpop.f32.mrf.mxu0
    %1953 = vmatprep.mubr.f32.mxu0 0.0
    %1954 = vmatmul.mubr.f32.gmra.mxu0 %v1756
    %v1955 = vpop.f32.mrf.mxu0
    %v1956 = vadd.f32 %v1695, %v1955
    %v1957 = vpop.f32.mrf.mxu0
    %1958 = vmatprep.mubr.f32.mxu0 0.0
    %1959 = vmatmul.mubr.f32.gmra.mxu0 %v1759
    %v1960 = vpop.f32.mrf.mxu0
    %v1961 = vadd.f32 %v1695, %v1960
    %v1962 = vpop.f32.mrf.mxu0
    %1963 = vmatprep.mubr.f32.mxu0 0.0
    %1964 = vmatmul.mubr.f32.gmra.mxu0 %v1762
    %v1965 = vpop.f32.mrf.mxu0
    %v1966 = vadd.f32 %v1695, %v1965
    %v1967 = vpop.f32.mrf.mxu0
    %1968 = vmatprep.mubr.f32.mxu0 0.0
    %1969 = vmatmul.mubr.f32.gmra.mxu0 %v1765
    %v1970 = vpop.f32.mrf.mxu0
    %v1971 = vadd.f32 %v1695, %v1970
    %v1972 = vpop.f32.mrf.mxu0
    %1973 = vmatprep.mubr.f32.mxu0 0.0
    %1974 = vmatmul.mubr.f32.gmra.mxu0 %v1768
    %v1975 = vpop.f32.mrf.mxu0
    %v1976 = vadd.f32 %v1695, %v1975
    %v1977 = vpop.f32.mrf.mxu0
    %1978 = vmatprep.mubr.f32.mxu0 0.0
    %1979 = vmatmul.mubr.f32.gmra.mxu0 %v1771
    %v1980 = vpop.f32.mrf.mxu0
    %v1981 = vadd.f32 %v1695, %v1980
    %v1982 = vpop.f32.mrf.mxu0
    %1983 = vmatprep.mubr.f32.mxu0 0.0
    %1984 = vmatmul.mubr.f32.gmra.mxu0 %v1774
    %v1985 = vpop.f32.mrf.mxu0
    %v1986 = vadd.f32 %v1695, %v1985
    %v1987 = vpop.f32.mrf.mxu0
    %1988 = vmatprep.mubr.f32.mxu0 0.0
    %1989 = vmatmul.mubr.f32.gmra.mxu0 %v1777
    %v1990 = vpop.f32.mrf.mxu0
    %v1991 = vadd.f32 %v1695, %v1990
    %v1992 = vpop.f32.mrf.mxu0
    %1993 = vmatprep.mubr.f32.mxu0 0.0
    %1994 = vmatmul.mubr.f32.gmra.mxu0 %v1780
    %v1995 = vpop.f32.mrf.mxu0
    %v1996 = vadd.f32 %v1695, %v1995
    %v1997 = vpop.f32.mrf.mxu0
    %1998 = vmatprep.mubr.f32.mxu0 0.0
    %1999 = vmatmul.mubr.f32.gmra.mxu0 %v1783
    %v2000 = vpop.f32.mrf.mxu0
    %v2001 = vadd.f32 %v1695, %v2000
    %v2002 = vpop.f32.mrf.mxu0
    %2003 = vmatprep.mubr.f32.mxu0 0.0
    %2004 = vmatmul.mubr.f32.gmra.mxu0 %v1786
    %v2005 = vpop.f32.mrf.mxu0
    %v2006 = vadd.f32 %v1695, %v2005
    %v2007 = vpop.f32.mrf.mxu0
    %2008 = vmatprep.mubr.f32.mxu0 0.0
    %2009 = vmatmul.mubr.f32.gmra.mxu0 %v1789
    %v2010 = vpop.f32.mrf.mxu0
    %v2011 = vadd.f32 %v1695, %v2010
    %v2012 = vpop.f32.mrf.mxu0
    %2013 = vmatprep.mubr.f32.mxu0 0.0
    %2014 = vmatmul.mubr.f32.gmra.mxu0 %v1792
    %v2015 = vpop.f32.mrf.mxu0
    %v2016 = vadd.f32 %v1695, %v2015
    %v2017 = vpop.f32.mrf.mxu0
    %2018 = vdwg.mxu0
    %v2019 = vmul.f32 %v1861, 0.5
    %v2020 = vmul.f32 %v1866, 0.5
    %v2021 = vmul.f32 %v1871, 0.5
    %v2022 = vmul.f32 %v1876, 0.5
    %v2023 = vmul.f32 %v1881, 0.5
    %v2024 = vmul.f32 %v1886, 0.5
    %v2025 = vmul.f32 %v1891, 0.5
    %v2026 = vmul.f32 %v1896, 0.5
    %v2027 = vmul.f32 %v1901, 0.5
    %v2028 = vmul.f32 %v1906, 0.5
    %v2029 = vmul.f32 %v1911, 0.5
    %v2030 = vmul.f32 %v1916, 0.5
    %v2031 = vmul.f32 %v1921, 0.5
    %v2032 = vmul.f32 %v1926, 0.5
    %v2033 = vmul.f32 %v1931, 0.5
    %v2034 = vmul.f32 %v1936, 0.5
    %v2035 = vmul.f32 %v1941, 0.5
    %v2036 = vmul.f32 %v1946, 0.5
    %v2037 = vmul.f32 %v1951, 0.5
    %v2038 = vmul.f32 %v1956, 0.5
    %v2039 = vmul.f32 %v1961, 0.5
    %v2040 = vmul.f32 %v1966, 0.5
    %v2041 = vmul.f32 %v1971, 0.5
    %v2042 = vmul.f32 %v1976, 0.5
    %v2043 = vmul.f32 %v1981, 0.5
    %v2044 = vmul.f32 %v1986, 0.5
    %v2045 = vmul.f32 %v1991, 0.5
    %v2046 = vmul.f32 %v1996, 0.5
    %v2047 = vmul.f32 %v2001, 0.5
    %v2048 = vmul.f32 %v2006, 0.5
    %v2049 = vmul.f32 %v2011, 0.5
    %v2050 = vmul.f32 %v2016, 0.5
    %v2051 = vmul.f32 %v1861, 0.70710677
    %v2052 = vmul.f32 %v1866, 0.70710677
    %v2053 = vmul.f32 %v1871, 0.70710677
    %v2054 = vmul.f32 %v1876, 0.70710677
    %v2055 = vmul.f32 %v1881, 0.70710677
    %v2056 = vmul.f32 %v1886, 0.70710677
    %v2057 = vmul.f32 %v1891, 0.70710677
    %v2058 = vmul.f32 %v1896, 0.70710677
    %v2059 = vmul.f32 %v1901, 0.70710677
    %v2060 = vmul.f32 %v1906, 0.70710677
    %v2061 = vmul.f32 %v1911, 0.70710677
    %v2062 = vmul.f32 %v1916, 0.70710677
    %v2063 = vmul.f32 %v1921, 0.70710677
    %v2064 = vmul.f32 %v1926, 0.70710677
    %v2065 = vmul.f32 %v1931, 0.70710677
    %v2066 = vmul.f32 %v1936, 0.70710677
    %v2067 = vmul.f32 %v1941, 0.70710677
    %v2068 = vmul.f32 %v1946, 0.70710677
    %v2069 = vmul.f32 %v1951, 0.70710677
    %v2070 = vmul.f32 %v1956, 0.70710677
    %v2071 = vmul.f32 %v1961, 0.70710677
    %v2072 = vmul.f32 %v1966, 0.70710677
    %v2073 = vmul.f32 %v1971, 0.70710677
    %v2074 = vmul.f32 %v1976, 0.70710677
    %v2075 = vmul.f32 %v1981, 0.70710677
    %v2076 = vmul.f32 %v1986, 0.70710677
    %v2077 = vmul.f32 %v1991, 0.70710677
    %v2078 = vmul.f32 %v1996, 0.70710677
    %v2079 = vmul.f32 %v2001, 0.70710677
    %v2080 = vmul.f32 %v2006, 0.70710677
    %v2081 = vmul.f32 %v2011, 0.70710677
    %v2082 = vmul.f32 %v2016, 0.70710677
    %v2083 = verf.f32.pop %v2051
    %v2084 = verf.f32.pop %v2052
    %v2085 = verf.f32.pop %v2053
    %v2086 = verf.f32.pop %v2054
    %v2087 = verf.f32.pop %v2055
    %v2088 = verf.f32.pop %v2056
    %v2089 = verf.f32.pop %v2057
    %v2090 = verf.f32.pop %v2058
    %v2091 = verf.f32.pop %v2059
    %v2092 = verf.f32.pop %v2060
    %v2093 = verf.f32.pop %v2061
    %v2094 = verf.f32.pop %v2062
    %v2095 = verf.f32.pop %v2063
    %v2096 = verf.f32.pop %v2064
    %v2097 = verf.f32.pop %v2065
    %v2098 = verf.f32.pop %v2066
    %v2099 = verf.f32.pop %v2067
    %v2100 = verf.f32.pop %v2068
    %v2101 = verf.f32.pop %v2069
    %v2102 = verf.f32.pop %v2070
    %v2103 = verf.f32.pop %v2071
    %v2104 = verf.f32.pop %v2072
    %v2105 = verf.f32.pop %v2073
    %v2106 = verf.f32.pop %v2074
    %v2107 = verf.f32.pop %v2075
    %v2108 = verf.f32.pop %v2076
    %v2109 = verf.f32.pop %v2077
    %v2110 = verf.f32.pop %v2078
    %v2111 = verf.f32.pop %v2079
    %v2112 = verf.f32.pop %v2080
    %v2113 = verf.f32.pop %v2081
    %v2114 = verf.f32.pop %v2082
    %v2115 = vadd.f32 %v2083, 1.0
    %v2116 = vadd.f32 %v2084, 1.0
    %v2117 = vadd.f32 %v2085, 1.0
    %v2118 = vadd.f32 %v2086, 1.0
    %v2119 = vadd.f32 %v2087, 1.0
    %v2120 = vadd.f32 %v2088, 1.0
    %v2121 = vadd.f32 %v2089, 1.0
    %v2122 = vadd.f32 %v2090, 1.0
    %v2123 = vadd.f32 %v2091, 1.0
    %v2124 = vadd.f32 %v2092, 1.0
    %v2125 = vadd.f32 %v2093, 1.0
    %v2126 = vadd.f32 %v2094, 1.0
    %v2127 = vadd.f32 %v2095, 1.0
    %v2128 = vadd.f32 %v2096, 1.0
    %v2129 = vadd.f32 %v2097, 1.0
    %v2130 = vadd.f32 %v2098, 1.0
    %v2131 = vadd.f32 %v2099, 1.0
    %v2132 = vadd.f32 %v2100, 1.0
    %v2133 = vadd.f32 %v2101, 1.0
    %v2134 = vadd.f32 %v2102, 1.0
    %v2135 = vadd.f32 %v2103, 1.0
    %v2136 = vadd.f32 %v2104, 1.0
    %v2137 = vadd.f32 %v2105, 1.0
    %v2138 = vadd.f32 %v2106, 1.0
    %v2139 = vadd.f32 %v2107, 1.0
    %v2140 = vadd.f32 %v2108, 1.0
    %v2141 = vadd.f32 %v2109, 1.0
    %v2142 = vadd.f32 %v2110, 1.0
    %v2143 = vadd.f32 %v2111, 1.0
    %v2144 = vadd.f32 %v2112, 1.0
    %v2145 = vadd.f32 %v2113, 1.0
    %v2146 = vadd.f32 %v2114, 1.0
    %v2147 = vmul.f32 %v2019, %v2115
    %v2148 = vmul.f32 %v2020, %v2116
    %v2149 = vmul.f32 %v2021, %v2117
    %v2150 = vmul.f32 %v2022, %v2118
    %v2151 = vmul.f32 %v2023, %v2119
    %v2152 = vmul.f32 %v2024, %v2120
    %v2153 = vmul.f32 %v2025, %v2121
    %v2154 = vmul.f32 %v2026, %v2122
    %v2155 = vmul.f32 %v2027, %v2123
    %v2156 = vmul.f32 %v2028, %v2124
    %v2157 = vmul.f32 %v2029, %v2125
    %v2158 = vmul.f32 %v2030, %v2126
    %v2159 = vmul.f32 %v2031, %v2127
    %v2160 = vmul.f32 %v2032, %v2128
    %v2161 = vmul.f32 %v2033, %v2129
    %v2162 = vmul.f32 %v2034, %v2130
    %v2163 = vmul.f32 %v2035, %v2131
    %v2164 = vmul.f32 %v2036, %v2132
    %v2165 = vmul.f32 %v2037, %v2133
    %v2166 = vmul.f32 %v2038, %v2134
    %v2167 = vmul.f32 %v2039, %v2135
    %v2168 = vmul.f32 %v2040, %v2136
    %v2169 = vmul.f32 %v2041, %v2137
    %v2170 = vmul.f32 %v2042, %v2138
    %v2171 = vmul.f32 %v2043, %v2139
    %v2172 = vmul.f32 %v2044, %v2140
    %v2173 = vmul.f32 %v2045, %v2141
    %v2174 = vmul.f32 %v2046, %v2142
    %v2175 = vmul.f32 %v2047, %v2143
    %v2176 = vmul.f32 %v2048, %v2144
    %v2177 = vmul.f32 %v2049, %v2145
    %v2178 = vmul.f32 %v2050, %v2146
    %v2179 = vmul.f32 %v2147, %v748
    %v2180 = vmul.f32 %v2148, %v753
    %v2181 = vmul.f32 %v2149, %v758
    %v2182 = vmul.f32 %v2150, %v763
    %v2183 = vmul.f32 %v2151, %v768
    %v2184 = vmul.f32 %v2152, %v773
    %v2185 = vmul.f32 %v2153, %v778
    %v2186 = vmul.f32 %v2154, %v783
    %v2187 = vmul.f32 %v2155, %v788
    %v2188 = vmul.f32 %v2156, %v793
    %v2189 = vmul.f32 %v2157, %v798
    %v2190 = vmul.f32 %v2158, %v803
    %v2191 = vmul.f32 %v2159, %v808
    %v2192 = vmul.f32 %v2160, %v813
    %v2193 = vmul.f32 %v2161, %v818
    %v2194 = vmul.f32 %v2162, %v823
    %v2195 = vmul.f32 %v2163, %v828
    %v2196 = vmul.f32 %v2164, %v833
    %v2197 = vmul.f32 %v2165, %v838
    %v2198 = vmul.f32 %v2166, %v843
    %v2199 = vmul.f32 %v2167, %v848
    %v2200 = vmul.f32 %v2168, %v853
    %v2201 = vmul.f32 %v2169, %v858
    %v2202 = vmul.f32 %v2170, %v863
    %v2203 = vmul.f32 %v2171, %v868
    %v2204 = vmul.f32 %v2172, %v873
    %v2205 = vmul.f32 %v2173, %v878
    %v2206 = vmul.f32 %v2174, %v883
    %v2207 = vmul.f32 %v2175, %v888
    %v2208 = vmul.f32 %v2176, %v893
    %v2209 = vmul.f32 %v2177, %v898
    %v2210 = vmul.f32 %v2178, %v903
    %v2211 = vld [vmem:[%s11] sm:$0xff]
    %v2212 = vld [vmem:[%s11 + $0x8] sm:$0xff]
    %v2213 = vld [vmem:[%s11 + $0x10] sm:$0xff]
    %v2214 = vld [vmem:[%s11 + $0x18] sm:$0xff]
    %v2215 = vld [vmem:[%s12] sm:$0x1]
    %v2217 = vlaneseq
    %v2218 = vshrl.u32 %v2217, 7
    %v2219 = vsub.s32 0, %v2218
    %v2220 = vrot.slane %v2215, %v2219
    %vm2222 = vcmask 261120
    %v2224 = vsel %vm2222, %v272, 0
    %v2227 = vsel %vm2222, %v277, 0
    %2229 = vmatprep.subr.mxu0 0.0
    %2230 = vmatpush1.msra.mxu0 0.0
    %2231 = vmatprep.subr.mxu0 0.0
    %2232 = vmatpush1.msra.mxu0 0.0
    %2233 = vmatprep.subr.mxu0 0.0
    %2234 = vmatpush1.msra.mxu0 0.0
    %2235 = vmatprep.subr.mxu0 0.0
    %2236 = vmatpush1.msra.mxu0 0.0
    %2237 = vmatprep.subr.mxu0 0.0
    %2238 = vmatpush1.msra.mxu0 0.0
    %2239 = vmatprep.subr.mxu0 0.0
    %2240 = vmatpush1.msra.mxu0 0.0
    %2241 = vmatprep.subr.mxu0 0.0
    %2242 = vmatpush1.msra.mxu0 0.0
    %2243 = vmatprep.subr.mxu0 0.0
    %2244 = vmatpush1.msra.mxu0 0.0
    %2245 = vmatprep.subr.mxu0 0.0
    %2246 = vmatpush1.msra.mxu0 0.0
    %2247 = vmatprep.subr.mxu0 0.0
    %2248 = vmatpush1.msra.mxu0 0.0
    %2249 = vmatprep.subr.mxu0 0.0
    %2250 = vmatpush1.msra.mxu0 0.0
    %2251 = vmatprep.subr.mxu0 0.0
    %2252 = vmatpush1.msra.mxu0 0.0
    %2253 = vmatprep.subr.mxu0 0.0
    %2254 = vmatpush1.msra.mxu0 %v2214
    %2255 = vmatprep.subr.mxu0 0.0
    %2256 = vmatpush1.msra.mxu0 %v2213
    %2257 = vmatprep.subr.mxu0 0.0
    %2258 = vmatpush1.msra.mxu0 %v2212
    %2259 = vmatprep.subr.mxu0 0.0
    %2260 = vmatpush1.msra.mxu0 %v2211
    %2261 = vmatprep.subr.mxu0 0.0
    %2262 = vmatpush2.msra.mxu0 0.0
    %2263 = vmatprep.subr.mxu0 0.0
    %2264 = vmatpush2.msra.mxu0 0.0
    %2265 = vmatprep.subr.mxu0 0.0
    %2266 = vmatpush2.msra.mxu0 0.0
    %2267 = vmatprep.subr.mxu0 0.0
    %2268 = vmatpush2.msra.mxu0 0.0
    %2269 = vmatprep.subr.mxu0 0.0
    %2270 = vmatpush2.msra.mxu0 0.0
    %2271 = vmatprep.subr.mxu0 0.0
    %2272 = vmatpush2.msra.mxu0 0.0
    %2273 = vmatprep.subr.mxu0 0.0
    %2274 = vmatpush2.msra.mxu0 0.0
    %2275 = vmatprep.subr.mxu0 0.0
    %2276 = vmatpush2.msra.mxu0 0.0
    %2277 = vmatprep.subr.mxu0 0.0
    %2278 = vmatpush2.msra.mxu0 0.0
    %2279 = vmatprep.subr.mxu0 0.0
    %2280 = vmatpush2.msra.mxu0 0.0
    %2281 = vmatprep.subr.mxu0 0.0
    %2282 = vmatpush2.msra.mxu0 0.0
    %2283 = vmatprep.subr.mxu0 0.0
    %2284 = vmatpush2.msra.mxu0 0.0
    %2285 = vmatprep.subr.mxu0 0.0
    %2286 = vmatpush2.msra.mxu0 0.0
    %2287 = vmatprep.subr.mxu0 0.0
    %2288 = vmatpush2.msra.mxu0 0.0
    %2289 = vmatprep.subr.mxu0 0.0
    %2290 = vmatpush2.msra.mxu0 0.0
    %2291 = vmatprep.subr.mxu0 0.0
    %2292 = vmatpush2.msra.mxu0 0.0
    %2293 = vmatprep.mubr.f32.mxu0 0.0
    %2294 = vmatmul.mubr.f32.gmra.mxu0 %v2224
    %v2295 = vpop.f32.mrf.mxu0
    %v2296 = vadd.f32 %v2220, %v2295
    %v2297 = vpop.f32.mrf.mxu0
    %2298 = vmatprep.mubr.f32.mxu0 0.0
    %2299 = vmatmul.mubr.f32.gmra.mxu0 %v2227
    %v2300 = vpop.f32.mrf.mxu0
    %v2301 = vadd.f32 %v2220, %v2300
    %v2302 = vpop.f32.mrf.mxu0
    %2303 = vdwg.mxu0
    %v2304 = vmul.f32 %v2296, 0.5
    %v2305 = vmul.f32 %v2301, 0.5
    %v2306 = vmul.f32 %v2296, 0.70710677
    %v2307 = vmul.f32 %v2301, 0.70710677
    %v2308 = verf.f32.pop %v2306
    %v2309 = verf.f32.pop %v2307
    %v2310 = vadd.f32 %v2308, 1.0
    %v2311 = vadd.f32 %v2309, 1.0
    %v2312 = vmul.f32 %v2304, %v2310
    %v2313 = vmul.f32 %v2305, %v2311
    %v2315 = vsel %vm198, %v157, 0
    %v2318 = vsel %vm198, %v158, 0
    %v2321 = vsel %vm198, %v159, 0
    %v2324 = vsel %vm198, %v160, 0
    %v2327 = vsel %vm198, %v161, 0
    %v2330 = vsel %vm198, %v162, 0
    %v2333 = vsel %vm198, %v163, 0
    %v2336 = vsel %vm198, %v164, 0
    %v2339 = vsel %vm198, %v165, 0
    %v2342 = vsel %vm198, %v166, 0
    %v2345 = vsel %vm198, %v167, 0
    %v2348 = vsel %vm198, %v168, 0
    %v2351 = vsel %vm198, %v169, 0
    %v2354 = vsel %vm198, %v170, 0
    %v2357 = vsel %vm198, %v171, 0
    %v2360 = vsel %vm198, %v172, 0
    %v2363 = vsel %vm198, %v173, 0
    %v2366 = vsel %vm198, %v174, 0
    %v2369 = vsel %vm198, %v175, 0
    %v2372 = vsel %vm198, %v176, 0
    %v2375 = vsel %vm198, %v177, 0
    %v2378 = vsel %vm198, %v178, 0
    %v2381 = vsel %vm198, %v179, 0
    %v2384 = vsel %vm198, %v180, 0
    %v2387 = vsel %vm198, %v181, 0
    %v2390 = vsel %vm198, %v182, 0
    %v2393 = vsel %vm198, %v183, 0
    %v2396 = vsel %vm198, %v184, 0
    %v2399 = vsel %vm198, %v185, 0
    %v2402 = vsel %vm198, %v186, 0
    %v2405 = vsel %vm198, %v187, 0
    %v2408 = vsel %vm198, %v188, 0
    %2410 = vmatprep.subr.mxu0 0.0
    %2411 = vmatpush1.msra.mxu0 0.0
    %2412 = vmatprep.subr.mxu0 0.0
    %2413 = vmatpush1.msra.mxu0 0.0
    %2414 = vmatprep.subr.mxu0 0.0
    %2415 = vmatpush1.msra.mxu0 0.0
    %2416 = vmatprep.subr.mxu0 0.0
    %2417 = vmatpush1.msra.mxu0 0.0
    %2418 = vmatprep.subr.mxu0 0.0
    %2419 = vmatpush1.msra.mxu0 0.0
    %2420 = vmatprep.subr.mxu0 0.0
    %2421 = vmatpush1.msra.mxu0 0.0
    %2422 = vmatprep.subr.mxu0 0.0
    %2423 = vmatpush1.msra.mxu0 0.0
    %2424 = vmatprep.subr.mxu0 0.0
    %2425 = vmatpush1.msra.mxu0 0.0
    %2426 = vmatprep.subr.mxu0 0.0
    %2427 = vmatpush1.msra.mxu0 0.0
    %2428 = vmatprep.subr.mxu0 0.0
    %2429 = vmatpush1.msra.mxu0 0.0
    %2430 = vmatprep.subr.mxu0 0.0
    %2431 = vmatpush1.msra.mxu0 0.0
    %2432 = vmatprep.subr.mxu0 0.0
    %2433 = vmatpush1.msra.mxu0 0.0
    %2434 = vmatprep.subr.mxu0 0.0
    %2435 = vmatpush1.msra.mxu0 0.0
    %2436 = vmatprep.subr.mxu0 0.0
    %2437 = vmatpush1.msra.mxu0 0.0
    %2438 = vmatprep.subr.mxu0 0.0
    %2439 = vmatpush1.msra.mxu0 %v2313
    %2440 = vmatprep.subr.mxu0 0.0
    %2441 = vmatpush1.msra.mxu0 %v2312
    %2442 = vmatprep.subr.mxu0 0.0
    %2443 = vmatpush2.msra.mxu0 0.0
    %2444 = vmatprep.subr.mxu0 0.0
    %2445 = vmatpush2.msra.mxu0 0.0
    %2446 = vmatprep.subr.mxu0 0.0
    %2447 = vmatpush2.msra.mxu0 0.0
    %2448 = vmatprep.subr.mxu0 0.0
    %2449 = vmatpush2.msra.mxu0 0.0
    %2450 = vmatprep.subr.mxu0 0.0
    %2451 = vmatpush2.msra.mxu0 0.0
    %2452 = vmatprep.subr.mxu0 0.0
    %2453 = vmatpush2.msra.mxu0 0.0
    %2454 = vmatprep.subr.mxu0 0.0
    %2455 = vmatpush2.msra.mxu0 0.0
    %2456 = vmatprep.subr.mxu0 0.0
    %2457 = vmatpush2.msra.mxu0 0.0
    %2458 = vmatprep.subr.mxu0 0.0
    %2459 = vmatpush2.msra.mxu0 0.0
    %2460 = vmatprep.subr.mxu0 0.0
    %2461 = vmatpush2.msra.mxu0 0.0
    %2462 = vmatprep.subr.mxu0 0.0
    %2463 = vmatpush2.msra.mxu0 0.0
    %2464 = vmatprep.subr.mxu0 0.0
    %2465 = vmatpush2.msra.mxu0 0.0
    %2466 = vmatprep.subr.mxu0 0.0
    %2467 = vmatpush2.msra.mxu0 0.0
    %2468 = vmatprep.subr.mxu0 0.0
    %2469 = vmatpush2.msra.mxu0 0.0
    %2470 = vmatprep.subr.mxu0 0.0
    %2471 = vmatpush2.msra.mxu0 0.0
    %2472 = vmatprep.subr.mxu0 0.0
    %2473 = vmatpush2.msra.mxu0 0.0
    %2474 = vmatprep.mubr.f32.mxu0 0.0
    %2475 = vmatmul.mubr.f32.gmra.mxu0 %v2315
    %v2476 = vpop.f32.mrf.mxu0
    %v2477 = vadd.f32 0.0, %v2476
    %v2478 = vpop.f32.mrf.mxu0
    %2479 = vmatprep.mubr.f32.mxu0 0.0
    %2480 = vmatmul.mubr.f32.gmra.mxu0 %v2318
    %v2481 = vpop.f32.mrf.mxu0
    %v2482 = vadd.f32 0.0, %v2481
    %v2483 = vpop.f32.mrf.mxu0
    %2484 = vmatprep.mubr.f32.mxu0 0.0
    %2485 = vmatmul.mubr.f32.gmra.mxu0 %v2321
    %v2486 = vpop.f32.mrf.mxu0
    %v2487 = vadd.f32 0.0, %v2486
    %v2488 = vpop.f32.mrf.mxu0
    %2489 = vmatprep.mubr.f32.mxu0 0.0
    %2490 = vmatmul.mubr.f32.gmra.mxu0 %v2324
    %v2491 = vpop.f32.mrf.mxu0
    %v2492 = vadd.f32 0.0, %v2491
    %v2493 = vpop.f32.mrf.mxu0
    %2494 = vmatprep.mubr.f32.mxu0 0.0
    %2495 = vmatmul.mubr.f32.gmra.mxu0 %v2327
    %v2496 = vpop.f32.mrf.mxu0
    %v2497 = vadd.f32 0.0, %v2496
    %v2498 = vpop.f32.mrf.mxu0
    %2499 = vmatprep.mubr.f32.mxu0 0.0
    %2500 = vmatmul.mubr.f32.gmra.mxu0 %v2330
    %v2501 = vpop.f32.mrf.mxu0
    %v2502 = vadd.f32 0.0, %v2501
    %v2503 = vpop.f32.mrf.mxu0
    %2504 = vmatprep.mubr.f32.mxu0 0.0
    %2505 = vmatmul.mubr.f32.gmra.mxu0 %v2333
    %v2506 = vpop.f32.mrf.mxu0
    %v2507 = vadd.f32 0.0, %v2506
    %v2508 = vpop.f32.mrf.mxu0
    %2509 = vmatprep.mubr.f32.mxu0 0.0
    %2510 = vmatmul.mubr.f32.gmra.mxu0 %v2336
    %v2511 = vpop.f32.mrf.mxu0
    %v2512 = vadd.f32 0.0, %v2511
    %v2513 = vpop.f32.mrf.mxu0
    %2514 = vmatprep.mubr.f32.mxu0 0.0
    %2515 = vmatmul.mubr.f32.gmra.mxu0 %v2339
    %v2516 = vpop.f32.mrf.mxu0
    %v2517 = vadd.f32 0.0, %v2516
    %v2518 = vpop.f32.mrf.mxu0
    %2519 = vmatprep.mubr.f32.mxu0 0.0
    %2520 = vmatmul.mubr.f32.gmra.mxu0 %v2342
    %v2521 = vpop.f32.mrf.mxu0
    %v2522 = vadd.f32 0.0, %v2521
    %v2523 = vpop.f32.mrf.mxu0
    %2524 = vmatprep.mubr.f32.mxu0 0.0
    %2525 = vmatmul.mubr.f32.gmra.mxu0 %v2345
    %v2526 = vpop.f32.mrf.mxu0
    %v2527 = vadd.f32 0.0, %v2526
    %v2528 = vpop.f32.mrf.mxu0
    %2529 = vmatprep.mubr.f32.mxu0 0.0
    %2530 = vmatmul.mubr.f32.gmra.mxu0 %v2348
    %v2531 = vpop.f32.mrf.mxu0
    %v2532 = vadd.f32 0.0, %v2531
    %v2533 = vpop.f32.mrf.mxu0
    %2534 = vmatprep.mubr.f32.mxu0 0.0
    %2535 = vmatmul.mubr.f32.gmra.mxu0 %v2351
    %v2536 = vpop.f32.mrf.mxu0
    %v2537 = vadd.f32 0.0, %v2536
    %v2538 = vpop.f32.mrf.mxu0
    %2539 = vmatprep.mubr.f32.mxu0 0.0
    %2540 = vmatmul.mubr.f32.gmra.mxu0 %v2354
    %v2541 = vpop.f32.mrf.mxu0
    %v2542 = vadd.f32 0.0, %v2541
    %v2543 = vpop.f32.mrf.mxu0
    %2544 = vmatprep.mubr.f32.mxu0 0.0
    %2545 = vmatmul.mubr.f32.gmra.mxu0 %v2357
    %v2546 = vpop.f32.mrf.mxu0
    %v2547 = vadd.f32 0.0, %v2546
    %v2548 = vpop.f32.mrf.mxu0
    %2549 = vmatprep.mubr.f32.mxu0 0.0
    %2550 = vmatmul.mubr.f32.gmra.mxu0 %v2360
    %v2551 = vpop.f32.mrf.mxu0
    %v2552 = vadd.f32 0.0, %v2551
    %v2553 = vpop.f32.mrf.mxu0
    %2554 = vmatprep.mubr.f32.mxu0 0.0
    %2555 = vmatmul.mubr.f32.gmra.mxu0 %v2363
    %v2556 = vpop.f32.mrf.mxu0
    %v2557 = vadd.f32 0.0, %v2556
    %v2558 = vpop.f32.mrf.mxu0
    %2559 = vmatprep.mubr.f32.mxu0 0.0
    %2560 = vmatmul.mubr.f32.gmra.mxu0 %v2366
    %v2561 = vpop.f32.mrf.mxu0
    %v2562 = vadd.f32 0.0, %v2561
    %v2563 = vpop.f32.mrf.mxu0
    %2564 = vmatprep.mubr.f32.mxu0 0.0
    %2565 = vmatmul.mubr.f32.gmra.mxu0 %v2369
    %v2566 = vpop.f32.mrf.mxu0
    %v2567 = vadd.f32 0.0, %v2566
    %v2568 = vpop.f32.mrf.mxu0
    %2569 = vmatprep.mubr.f32.mxu0 0.0
    %2570 = vmatmul.mubr.f32.gmra.mxu0 %v2372
    %v2571 = vpop.f32.mrf.mxu0
    %v2572 = vadd.f32 0.0, %v2571
    %v2573 = vpop.f32.mrf.mxu0
    %2574 = vmatprep.mubr.f32.mxu0 0.0
    %2575 = vmatmul.mubr.f32.gmra.mxu0 %v2375
    %v2576 = vpop.f32.mrf.mxu0
    %v2577 = vadd.f32 0.0, %v2576
    %v2578 = vpop.f32.mrf.mxu0
    %2579 = vmatprep.mubr.f32.mxu0 0.0
    %2580 = vmatmul.mubr.f32.gmra.mxu0 %v2378
    %v2581 = vpop.f32.mrf.mxu0
    %v2582 = vadd.f32 0.0, %v2581
    %v2583 = vpop.f32.mrf.mxu0
    %2584 = vmatprep.mubr.f32.mxu0 0.0
    %2585 = vmatmul.mubr.f32.gmra.mxu0 %v2381
    %v2586 = vpop.f32.mrf.mxu0
    %v2587 = vadd.f32 0.0, %v2586
    %v2588 = vpop.f32.mrf.mxu0
    %2589 = vmatprep.mubr.f32.mxu0 0.0
    %2590 = vmatmul.mubr.f32.gmra.mxu0 %v2384
    %v2591 = vpop.f32.mrf.mxu0
    %v2592 = vadd.f32 0.0, %v2591
    %v2593 = vpop.f32.mrf.mxu0
    %2594 = vmatprep.mubr.f32.mxu0 0.0
    %2595 = vmatmul.mubr.f32.gmra.mxu0 %v2387
    %v2596 = vpop.f32.mrf.mxu0
    %v2597 = vadd.f32 0.0, %v2596
    %v2598 = vpop.f32.mrf.mxu0
    %2599 = vmatprep.mubr.f32.mxu0 0.0
    %2600 = vmatmul.mubr.f32.gmra.mxu0 %v2390
    %v2601 = vpop.f32.mrf.mxu0
    %v2602 = vadd.f32 0.0, %v2601
    %v2603 = vpop.f32.mrf.mxu0
    %2604 = vmatprep.mubr.f32.mxu0 0.0
    %2605 = vmatmul.mubr.f32.gmra.mxu0 %v2393
    %v2606 = vpop.f32.mrf.mxu0
    %v2607 = vadd.f32 0.0, %v2606
    %v2608 = vpop.f32.mrf.mxu0
    %2609 = vmatprep.mubr.f32.mxu0 0.0
    %2610 = vmatmul.mubr.f32.gmra.mxu0 %v2396
    %v2611 = vpop.f32.mrf.mxu0
    %v2612 = vadd.f32 0.0, %v2611
    %v2613 = vpop.f32.mrf.mxu0
    %2614 = vmatprep.mubr.f32.mxu0 0.0
    %2615 = vmatmul.mubr.f32.gmra.mxu0 %v2399
    %v2616 = vpop.f32.mrf.mxu0
    %v2617 = vadd.f32 0.0, %v2616
    %v2618 = vpop.f32.mrf.mxu0
    %2619 = vmatprep.mubr.f32.mxu0 0.0
    %2620 = vmatmul.mubr.f32.gmra.mxu0 %v2402
    %v2621 = vpop.f32.mrf.mxu0
    %v2622 = vadd.f32 0.0, %v2621
    %v2623 = vpop.f32.mrf.mxu0
    %2624 = vmatprep.mubr.f32.mxu0 0.0
    %2625 = vmatmul.mubr.f32.gmra.mxu0 %v2405
    %v2626 = vpop.f32.mrf.mxu0
    %v2627 = vadd.f32 0.0, %v2626
    %v2628 = vpop.f32.mrf.mxu0
    %2629 = vmatprep.mubr.f32.mxu0 0.0
    %2630 = vmatmul.mubr.f32.gmra.mxu0 %v2408
    %v2631 = vpop.f32.mrf.mxu0
    %v2632 = vadd.f32 0.0, %v2631
    %v2633 = vpop.f32.mrf.mxu0
    %2634 = vdwg.mxu0
    %v2635 = vmul.f32 %v2179, %v2477
    %v2636 = vmul.f32 %v2180, %v2482
    %v2637 = vmul.f32 %v2181, %v2487
    %v2638 = vmul.f32 %v2182, %v2492
    %v2639 = vmul.f32 %v2183, %v2497
    %v2640 = vmul.f32 %v2184, %v2502
    %v2641 = vmul.f32 %v2185, %v2507
    %v2642 = vmul.f32 %v2186, %v2512
    %v2643 = vmul.f32 %v2187, %v2517
    %v2644 = vmul.f32 %v2188, %v2522
    %v2645 = vmul.f32 %v2189, %v2527
    %v2646 = vmul.f32 %v2190, %v2532
    %v2647 = vmul.f32 %v2191, %v2537
    %v2648 = vmul.f32 %v2192, %v2542
    %v2649 = vmul.f32 %v2193, %v2547
    %v2650 = vmul.f32 %v2194, %v2552
    %v2651 = vmul.f32 %v2195, %v2557
    %v2652 = vmul.f32 %v2196, %v2562
    %v2653 = vmul.f32 %v2197, %v2567
    %v2654 = vmul.f32 %v2198, %v2572
    %v2655 = vmul.f32 %v2199, %v2577
    %v2656 = vmul.f32 %v2200, %v2582
    %v2657 = vmul.f32 %v2201, %v2587
    %v2658 = vmul.f32 %v2202, %v2592
    %v2659 = vmul.f32 %v2203, %v2597
    %v2660 = vmul.f32 %v2204, %v2602
    %v2661 = vmul.f32 %v2205, %v2607
    %v2662 = vmul.f32 %v2206, %v2612
    %v2663 = vmul.f32 %v2207, %v2617
    %v2664 = vmul.f32 %v2208, %v2622
    %v2665 = vmul.f32 %v2209, %v2627
    %v2666 = vmul.f32 %v2210, %v2632
    %2667 = vmatprep.subr.mxu0 0.0
    %2668 = vmatpush1.msra.mxu0 %v2650
    %2669 = vmatprep.subr.mxu0 0.0
    %2670 = vmatpush1.msra.mxu0 %v2649
    %2671 = vmatprep.subr.mxu0 0.0
    %2672 = vmatpush1.msra.mxu0 %v2648
    %2673 = vmatprep.subr.mxu0 0.0
    %2674 = vmatpush1.msra.mxu0 %v2647
    %2675 = vmatprep.subr.mxu0 0.0
    %2676 = vmatpush1.msra.mxu0 %v2646
    %2677 = vmatprep.subr.mxu0 0.0
    %2678 = vmatpush1.msra.mxu0 %v2645
    %2679 = vmatprep.subr.mxu0 0.0
    %2680 = vmatpush1.msra.mxu0 %v2644
    %2681 = vmatprep.subr.mxu0 0.0
    %2682 = vmatpush1.msra.mxu0 %v2643
    %2683 = vmatprep.subr.mxu0 0.0
    %2684 = vmatpush1.msra.mxu0 %v2642
    %2685 = vmatprep.subr.mxu0 0.0
    %2686 = vmatpush1.msra.mxu0 %v2641
    %2687 = vmatprep.subr.mxu0 0.0
    %2688 = vmatpush1.msra.mxu0 %v2640
    %2689 = vmatprep.subr.mxu0 0.0
    %2690 = vmatpush1.msra.mxu0 %v2639
    %2691 = vmatprep.subr.mxu0 0.0
    %2692 = vmatpush1.msra.mxu0 %v2638
    %2693 = vmatprep.subr.mxu0 0.0
    %2694 = vmatpush1.msra.mxu0 %v2637
    %2695 = vmatprep.subr.mxu0 0.0
    %2696 = vmatpush1.msra.mxu0 %v2636
    %2697 = vmatprep.subr.mxu0 0.0
    %2698 = vmatpush1.msra.mxu0 %v2635
    %2699 = vmatprep.subr.mxu0 0.0
    %2700 = vmatpush2.msra.mxu0 %v2666
    %2701 = vmatprep.subr.mxu0 0.0
    %2702 = vmatpush2.msra.mxu0 %v2665
    %2703 = vmatprep.subr.mxu0 0.0
    %2704 = vmatpush2.msra.mxu0 %v2664
    %2705 = vmatprep.subr.mxu0 0.0
    %2706 = vmatpush2.msra.mxu0 %v2663
    %2707 = vmatprep.subr.mxu0 0.0
    %2708 = vmatpush2.msra.mxu0 %v2662
    %2709 = vmatprep.subr.mxu0 0.0
    %2710 = vmatpush2.msra.mxu0 %v2661
    %2711 = vmatprep.subr.mxu0 0.0
    %2712 = vmatpush2.msra.mxu0 %v2660
    %2713 = vmatprep.subr.mxu0 0.0
    %2714 = vmatpush2.msra.mxu0 %v2659
    %2715 = vmatprep.subr.mxu0 0.0
    %2716 = vmatpush2.msra.mxu0 %v2658
    %2717 = vmatprep.subr.mxu0 0.0
    %2718 = vmatpush2.msra.mxu0 %v2657
    %2719 = vmatprep.subr.mxu0 0.0
    %2720 = vmatpush2.msra.mxu0 %v2656
    %2721 = vmatprep.subr.mxu0 0.0
    %2722 = vmatpush2.msra.mxu0 %v2655
    %2723 = vmatprep.subr.mxu0 0.0
    %2724 = vmatpush2.msra.mxu0 %v2654
    %2725 = vmatprep.subr.mxu0 0.0
    %2726 = vmatpush2.msra.mxu0 %v2653
    %2727 = vmatprep.subr.mxu0 0.0
    %2728 = vmatpush2.msra.mxu0 %v2652
    %2729 = vmatprep.subr.mxu0 0.0
    %2730 = vmatpush2.msra.mxu0 %v2651
    %2731 = vmatprep.mubr.f32.mxu0 %v154
    %2732 = vmatmul.mubr.f32.gmra.mxu0 %v153
    %v2733 = vpop.f32.mrf.mxu0
    %v2734 = vadd.f32 0.0, %v2733
    %v2735 = vpop.f32.mrf.mxu0
    %2736 = vmatprep.mubr.f32.mxu0 %v156
    %2737 = vmatmul.mubr.f32.gmra.mxu0 %v155
    %v2738 = vpop.f32.mrf.mxu0
    %v2739 = vadd.f32 0.0, %v2738
    %v2740 = vpop.f32.mrf.mxu0
    %2741 = vdwg.mxu0
    %v2742 = vadd.f32 %v272, %v2734
    %v2743 = vadd.f32 %v277, %v2739
    %v2744 = vld [vmem:[%s13] sm:$0xff]
    %v2745 = vld [vmem:[%s13 + $0x8] sm:$0xff]
    %v2746 = vld [vmem:[%s13 + $0x10] sm:$0xff]
    %v2747 = vld [vmem:[%s13 + $0x18] sm:$0xff]
    %v2748 = vld [vmem:[%s14] sm:$0x1]
    %v2750 = vlaneseq
    %v2751 = vshrl.u32 %v2750, 7
    %v2752 = vsub.s32 0, %v2751
    %v2753 = vrot.slane %v2748, %v2752
    %v2756 = vsel %vm2222, %v2742, 0
    %v2759 = vsel %vm2222, %v2743, 0
    %2761 = vmatprep.subr.mxu0 0.0
    %2762 = vmatpush1.msra.mxu0 0.0
    %2763 = vmatprep.subr.mxu0 0.0
    %2764 = vmatpush1.msra.mxu0 0.0
    %2765 = vmatprep.subr.mxu0 0.0
    %2766 = vmatpush1.msra.mxu0 0.0
    %2767 = vmatprep.subr.mxu0 0.0
    %2768 = vmatpush1.msra.mxu0 0.0
    %2769 = vmatprep.subr.mxu0 0.0
    %2770 = vmatpush1.msra.mxu0 0.0
    %2771 = vmatprep.subr.mxu0 0.0
    %2772 = vmatpush1.msra.mxu0 0.0
    %2773 = vmatprep.subr.mxu0 0.0
    %2774 = vmatpush1.msra.mxu0 0.0
    %2775 = vmatprep.subr.mxu0 0.0
    %2776 = vmatpush1.msra.mxu0 0.0
    %2777 = vmatprep.subr.mxu0 0.0
    %2778 = vmatpush1.msra.mxu0 0.0
    %2779 = vmatprep.subr.mxu0 0.0
    %2780 = vmatpush1.msra.mxu0 0.0
    %2781 = vmatprep.subr.mxu0 0.0
    %2782 = vmatpush1.msra.mxu0 0.0
    %2783 = vmatprep.subr.mxu0 0.0
    %2784 = vmatpush1.msra.mxu0 0.0
    %2785 = vmatprep.subr.mxu0 0.0
    %2786 = vmatpush1.msra.mxu0 %v2747
    %2787 = vmatprep.subr.mxu0 0.0
    %2788 = vmatpush1.msra.mxu0 %v2746
    %2789 = vmatprep.subr.mxu0 0.0
    %2790 = vmatpush1.msra.mxu0 %v2745
    %2791 = vmatprep.subr.mxu0 0.0
    %2792 = vmatpush1.msra.mxu0 %v2744
    %2793 = vmatprep.subr.mxu0 0.0
    %2794 = vmatpush2.msra.mxu0 0.0
    %2795 = vmatprep.subr.mxu0 0.0
    %2796 = vmatpush2.msra.mxu0 0.0
    %2797 = vmatprep.subr.mxu0 0.0
    %2798 = vmatpush2.msra.mxu0 0.0
    %2799 = vmatprep.subr.mxu0 0.0
    %2800 = vmatpush2.msra.mxu0 0.0
    %2801 = vmatprep.subr.mxu0 0.0
    %2802 = vmatpush2.msra.mxu0 0.0
    %2803 = vmatprep.subr.mxu0 0.0
    %2804 = vmatpush2.msra.mxu0 0.0
    %2805 = vmatprep.subr.mxu0 0.0
    %2806 = vmatpush2.msra.mxu0 0.0
    %2807 = vmatprep.subr.mxu0 0.0
    %2808 = vmatpush2.msra.mxu0 0.0
    %2809 = vmatprep.subr.mxu0 0.0
    %2810 = vmatpush2.msra.mxu0 0.0
    %2811 = vmatprep.subr.mxu0 0.0
    %2812 = vmatpush2.msra.mxu0 0.0
    %2813 = vmatprep.subr.mxu0 0.0
    %2814 = vmatpush2.msra.mxu0 0.0
    %2815 = vmatprep.subr.mxu0 0.0
    %2816 = vmatpush2.msra.mxu0 0.0
    %2817 = vmatprep.subr.mxu0 0.0
    %2818 = vmatpush2.msra.mxu0 0.0
    %2819 = vmatprep.subr.mxu0 0.0
    %2820 = vmatpush2.msra.mxu0 0.0
    %2821 = vmatprep.subr.mxu0 0.0
    %2822 = vmatpush2.msra.mxu0 0.0
    %2823 = vmatprep.subr.mxu0 0.0
    %2824 = vmatpush2.msra.mxu0 0.0
    %2825 = vmatprep.mubr.f32.mxu0 0.0
    %2826 = vmatmul.mubr.f32.gmra.mxu0 %v2756
    %v2827 = vpop.f32.mrf.mxu0
    %v2828 = vadd.f32 %v2753, %v2827
    %v2829 = vpop.f32.mrf.mxu0
    %2830 = vmatprep.mubr.f32.mxu0 0.0
    %2831 = vmatmul.mubr.f32.gmra.mxu0 %v2759
    %v2832 = vpop.f32.mrf.mxu0
    %v2833 = vadd.f32 %v2753, %v2832
    %v2834 = vpop.f32.mrf.mxu0
    %2835 = vdwg.mxu0
    %v2836 = vmul.f32 %v2828, 0.5
    %v2837 = vmul.f32 %v2833, 0.5
    %v2838 = vmul.f32 %v2828, 0.70710677
    %v2839 = vmul.f32 %v2833, 0.70710677
    %v2840 = verf.f32.pop %v2838
    %v2841 = verf.f32.pop %v2839
    %v2842 = vadd.f32 %v2840, 1.0
    %v2843 = vadd.f32 %v2841, 1.0
    %v2844 = vmul.f32 %v2836, %v2842
    %v2845 = vmul.f32 %v2837, %v2843
    %v2846 = vld [vmem:[%s15] sm:$0xff]
    %v2847 = vld [vmem:[%s15 + $0x8] sm:$0xff]
    %v2848 = vld [vmem:[%s15 + $0x10] sm:$0xff]
    %v2849 = vld [vmem:[%s15 + $0x18] sm:$0xff]
    %v2850 = vld [vmem:[%s16] sm:$0x1]
    %v2852 = vlaneseq
    %v2853 = vshrl.u32 %v2852, 7
    %v2854 = vsub.s32 0, %v2853
    %v2855 = vrot.slane %v2850, %v2854
    %v2858 = vsel %vm2222, %v2844, 0
    %v2861 = vsel %vm2222, %v2845, 0
    %2863 = vmatprep.subr.mxu0 0.0
    %2864 = vmatpush1.msra.mxu0 0.0
    %2865 = vmatprep.subr.mxu0 0.0
    %2866 = vmatpush1.msra.mxu0 0.0
    %2867 = vmatprep.subr.mxu0 0.0
    %2868 = vmatpush1.msra.mxu0 0.0
    %2869 = vmatprep.subr.mxu0 0.0
    %2870 = vmatpush1.msra.mxu0 0.0
    %2871 = vmatprep.subr.mxu0 0.0
    %2872 = vmatpush1.msra.mxu0 0.0
    %2873 = vmatprep.subr.mxu0 0.0
    %2874 = vmatpush1.msra.mxu0 0.0
    %2875 = vmatprep.subr.mxu0 0.0
    %2876 = vmatpush1.msra.mxu0 0.0
    %2877 = vmatprep.subr.mxu0 0.0
    %2878 = vmatpush1.msra.mxu0 0.0
    %2879 = vmatprep.subr.mxu0 0.0
    %2880 = vmatpush1.msra.mxu0 0.0
    %2881 = vmatprep.subr.mxu0 0.0
    %2882 = vmatpush1.msra.mxu0 0.0
    %2883 = vmatprep.subr.mxu0 0.0
    %2884 = vmatpush1.msra.mxu0 0.0
    %2885 = vmatprep.subr.mxu0 0.0
    %2886 = vmatpush1.msra.mxu0 0.0
    %2887 = vmatprep.subr.mxu0 0.0
    %2888 = vmatpush1.msra.mxu0 %v2849
    %2889 = vmatprep.subr.mxu0 0.0
    %2890 = vmatpush1.msra.mxu0 %v2848
    %2891 = vmatprep.subr.mxu0 0.0
    %2892 = vmatpush1.msra.mxu0 %v2847
    %2893 = vmatprep.subr.mxu0 0.0
    %2894 = vmatpush1.msra.mxu0 %v2846
    %2895 = vmatprep.subr.mxu0 0.0
    %2896 = vmatpush2.msra.mxu0 0.0
    %2897 = vmatprep.subr.mxu0 0.0
    %2898 = vmatpush2.msra.mxu0 0.0
    %2899 = vmatprep.subr.mxu0 0.0
    %2900 = vmatpush2.msra.mxu0 0.0
    %2901 = vmatprep.subr.mxu0 0.0
    %2902 = vmatpush2.msra.mxu0 0.0
    %2903 = vmatprep.subr.mxu0 0.0
    %2904 = vmatpush2.msra.mxu0 0.0
    %2905 = vmatprep.subr.mxu0 0.0
    %2906 = vmatpush2.msra.mxu0 0.0
    %2907 = vmatprep.subr.mxu0 0.0
    %2908 = vmatpush2.msra.mxu0 0.0
    %2909 = vmatprep.subr.mxu0 0.0
    %2910 = vmatpush2.msra.mxu0 0.0
    %2911 = vmatprep.subr.mxu0 0.0
    %2912 = vmatpush2.msra.mxu0 0.0
    %2913 = vmatprep.subr.mxu0 0.0
    %2914 = vmatpush2.msra.mxu0 0.0
    %2915 = vmatprep.subr.mxu0 0.0
    %2916 = vmatpush2.msra.mxu0 0.0
    %2917 = vmatprep.subr.mxu0 0.0
    %2918 = vmatpush2.msra.mxu0 0.0
    %2919 = vmatprep.subr.mxu0 0.0
    %2920 = vmatpush2.msra.mxu0 0.0
    %2921 = vmatprep.subr.mxu0 0.0
    %2922 = vmatpush2.msra.mxu0 0.0
    %2923 = vmatprep.subr.mxu0 0.0
    %2924 = vmatpush2.msra.mxu0 0.0
    %2925 = vmatprep.subr.mxu0 0.0
    %2926 = vmatpush2.msra.mxu0 0.0
    %2927 = vmatprep.mubr.f32.mxu0 0.0
    %2928 = vmatmul.mubr.f32.gmra.mxu0 %v2858
    %v2929 = vpop.f32.mrf.mxu0
    %v2930 = vadd.f32 %v2855, %v2929
    %v2931 = vpop.f32.mrf.mxu0
    %2932 = vmatprep.mubr.f32.mxu0 0.0
    %2933 = vmatmul.mubr.f32.gmra.mxu0 %v2861
    %v2934 = vpop.f32.mrf.mxu0
    %v2935 = vadd.f32 %v2855, %v2934
    %v2936 = vpop.f32.mrf.mxu0
    %2937 = vdwg.mxu0
    %v2938 = vmul.f32 %v2930, 0.5
    %v2939 = vmul.f32 %v2935, 0.5
    %v2940 = vmul.f32 %v2930, 0.70710677
    %v2941 = vmul.f32 %v2935, 0.70710677
    %v2942 = verf.f32.pop %v2940
    %v2943 = verf.f32.pop %v2941
    %v2944 = vadd.f32 %v2942, 1.0
    %v2945 = vadd.f32 %v2943, 1.0
    %v2946 = vmul.f32 %v2938, %v2944
    %v2947 = vmul.f32 %v2939, %v2945
    %v2948 = vadd.f32 %v2742, %v2946
    %v2949 = vadd.f32 %v2743, %v2947
    %v2950 = vld [vmem:[%s17] sm:$0xff]
    %v2951 = vld [vmem:[%s17 + $0x8] sm:$0xff]
    %v2952 = vld [vmem:[%s17 + $0x10] sm:$0xff]
    %v2953 = vld [vmem:[%s17 + $0x18] sm:$0xff]
    %v2954 = vld [vmem:[%s18] sm:$0x1]
    %v2956 = vlaneseq
    %v2957 = vshrl.u32 %v2956, 7
    %v2958 = vsub.s32 0, %v2957
    %v2959 = vrot.slane %v2954, %v2958
    %v2962 = vsel %vm2222, %v2948, 0
    %v2965 = vsel %vm2222, %v2949, 0
    %2967 = vmatprep.subr.mxu0 0.0
    %2968 = vmatpush1.msra.mxu0 0.0
    %2969 = vmatprep.subr.mxu0 0.0
    %2970 = vmatpush1.msra.mxu0 0.0
    %2971 = vmatprep.subr.mxu0 0.0
    %2972 = vmatpush1.msra.mxu0 0.0
    %2973 = vmatprep.subr.mxu0 0.0
    %2974 = vmatpush1.msra.mxu0 0.0
    %2975 = vmatprep.subr.mxu0 0.0
    %2976 = vmatpush1.msra.mxu0 0.0
    %2977 = vmatprep.subr.mxu0 0.0
    %2978 = vmatpush1.msra.mxu0 0.0
    %2979 = vmatprep.subr.mxu0 0.0
    %2980 = vmatpush1.msra.mxu0 0.0
    %2981 = vmatprep.subr.mxu0 0.0
    %2982 = vmatpush1.msra.mxu0 0.0
    %2983 = vmatprep.subr.mxu0 0.0
    %2984 = vmatpush1.msra.mxu0 0.0
    %2985 = vmatprep.subr.mxu0 0.0
    %2986 = vmatpush1.msra.mxu0 0.0
    %2987 = vmatprep.subr.mxu0 0.0
    %2988 = vmatpush1.msra.mxu0 0.0
    %2989 = vmatprep.subr.mxu0 0.0
    %2990 = vmatpush1.msra.mxu0 0.0
    %2991 = vmatprep.subr.mxu0 0.0
    %2992 = vmatpush1.msra.mxu0 %v2953
    %2993 = vmatprep.subr.mxu0 0.0
    %2994 = vmatpush1.msra.mxu0 %v2952
    %2995 = vmatprep.subr.mxu0 0.0
    %2996 = vmatpush1.msra.mxu0 %v2951
    %2997 = vmatprep.subr.mxu0 0.0
    %2998 = vmatpush1.msra.mxu0 %v2950
    %2999 = vmatprep.subr.mxu0 0.0
    %3000 = vmatpush2.msra.mxu0 0.0
    %3001 = vmatprep.subr.mxu0 0.0
    %3002 = vmatpush2.msra.mxu0 0.0
    %3003 = vmatprep.subr.mxu0 0.0
    %3004 = vmatpush2.msra.mxu0 0.0
    %3005 = vmatprep.subr.mxu0 0.0
    %3006 = vmatpush2.msra.mxu0 0.0
    %3007 = vmatprep.subr.mxu0 0.0
    %3008 = vmatpush2.msra.mxu0 0.0
    %3009 = vmatprep.subr.mxu0 0.0
    %3010 = vmatpush2.msra.mxu0 0.0
    %3011 = vmatprep.subr.mxu0 0.0
    %3012 = vmatpush2.msra.mxu0 0.0
    %3013 = vmatprep.subr.mxu0 0.0
    %3014 = vmatpush2.msra.mxu0 0.0
    %3015 = vmatprep.subr.mxu0 0.0
    %3016 = vmatpush2.msra.mxu0 0.0
    %3017 = vmatprep.subr.mxu0 0.0
    %3018 = vmatpush2.msra.mxu0 0.0
    %3019 = vmatprep.subr.mxu0 0.0
    %3020 = vmatpush2.msra.mxu0 0.0
    %3021 = vmatprep.subr.mxu0 0.0
    %3022 = vmatpush2.msra.mxu0 0.0
    %3023 = vmatprep.subr.mxu0 0.0
    %3024 = vmatpush2.msra.mxu0 0.0
    %3025 = vmatprep.subr.mxu0 0.0
    %3026 = vmatpush2.msra.mxu0 0.0
    %3027 = vmatprep.subr.mxu0 0.0
    %3028 = vmatpush2.msra.mxu0 0.0
    %3029 = vmatprep.subr.mxu0 0.0
    %3030 = vmatpush2.msra.mxu0 0.0
    %3031 = vmatprep.mubr.f32.mxu0 0.0
    %3032 = vmatmul.mubr.f32.gmra.mxu0 %v2962
    %v3033 = vpop.f32.mrf.mxu0
    %v3034 = vadd.f32 %v2959, %v3033
    %v3035 = vpop.f32.mrf.mxu0
    %3036 = vmatprep.mubr.f32.mxu0 0.0
    %3037 = vmatmul.mubr.f32.gmra.mxu0 %v2965
    %v3038 = vpop.f32.mrf.mxu0
    %v3039 = vadd.f32 %v2959, %v3038
    %v3040 = vpop.f32.mrf.mxu0
    %3041 = vdwg.mxu0
    %v3042 = vmul.f32 %v3034, 0.5
    %v3043 = vmul.f32 %v3039, 0.5
    %v3044 = vmul.f32 %v3034, 0.70710677
    %v3045 = vmul.f32 %v3039, 0.70710677
    %v3046 = verf.f32.pop %v3044
    %v3047 = verf.f32.pop %v3045
    %v3048 = vadd.f32 %v3046, 1.0
    %v3049 = vadd.f32 %v3047, 1.0
    %v3050 = vmul.f32 %v3042, %v3048
    %v3051 = vmul.f32 %v3043, %v3049
    %3052 = vmatprep.subr.mxu0 0.0
    %3053 = vmatpush1.msra.mxu0 0.0
    %3054 = vmatprep.subr.mxu0 0.0
    %3055 = vmatpush1.msra.mxu0 0.0
    %3056 = vmatprep.subr.mxu0 0.0
    %3057 = vmatpush1.msra.mxu0 0.0
    %3058 = vmatprep.subr.mxu0 0.0
    %3059 = vmatpush1.msra.mxu0 0.0
    %3060 = vmatprep.subr.mxu0 0.0
    %3061 = vmatpush1.msra.mxu0 0.0
    %3062 = vmatprep.subr.mxu0 0.0
    %3063 = vmatpush1.msra.mxu0 0.0
    %3064 = vmatprep.subr.mxu0 0.0
    %3065 = vmatpush1.msra.mxu0 0.0
    %3066 = vmatprep.subr.mxu0 0.0
    %3067 = vmatpush1.msra.mxu0 0.0
    %3068 = vmatprep.subr.mxu0 0.0
    %3069 = vmatpush1.msra.mxu0 0.0
    %3070 = vmatprep.subr.mxu0 0.0
    %3071 = vmatpush1.msra.mxu0 0.0
    %3072 = vmatprep.subr.mxu0 0.0
    %3073 = vmatpush1.msra.mxu0 0.0
    %3074 = vmatprep.subr.mxu0 0.0
    %3075 = vmatpush1.msra.mxu0 0.0
    %3076 = vmatprep.subr.mxu0 0.0
    %3077 = vmatpush1.msra.mxu0 0.0
    %3078 = vmatprep.subr.mxu0 0.0
    %3079 = vmatpush1.msra.mxu0 0.0
    %3080 = vmatprep.subr.mxu0 0.0
    %3081 = vmatpush1.msra.mxu0 %v3051
    %3082 = vmatprep.subr.mxu0 0.0
    %3083 = vmatpush1.msra.mxu0 %v3050
    %3084 = vmatprep.subr.mxu0 0.0
    %3085 = vmatpush2.msra.mxu0 0.0
    %3086 = vmatprep.subr.mxu0 0.0
    %3087 = vmatpush2.msra.mxu0 0.0
    %3088 = vmatprep.subr.mxu0 0.0
    %3089 = vmatpush2.msra.mxu0 0.0
    %3090 = vmatprep.subr.mxu0 0.0
    %3091 = vmatpush2.msra.mxu0 0.0
    %3092 = vmatprep.subr.mxu0 0.0
    %3093 = vmatpush2.msra.mxu0 0.0
    %3094 = vmatprep.subr.mxu0 0.0
    %3095 = vmatpush2.msra.mxu0 0.0
    %3096 = vmatprep.subr.mxu0 0.0
    %3097 = vmatpush2.msra.mxu0 0.0
    %3098 = vmatprep.subr.mxu0 0.0
    %3099 = vmatpush2.msra.mxu0 0.0
    %3100 = vmatprep.subr.mxu0 0.0
    %3101 = vmatpush2.msra.mxu0 0.0
    %3102 = vmatprep.subr.mxu0 0.0
    %3103 = vmatpush2.msra.mxu0 0.0
    %3104 = vmatprep.subr.mxu0 0.0
    %3105 = vmatpush2.msra.mxu0 0.0
    %3106 = vmatprep.subr.mxu0 0.0
    %3107 = vmatpush2.msra.mxu0 0.0
    %3108 = vmatprep.subr.mxu0 0.0
    %3109 = vmatpush2.msra.mxu0 0.0
    %3110 = vmatprep.subr.mxu0 0.0
    %3111 = vmatpush2.msra.mxu0 0.0
    %3112 = vmatprep.subr.mxu0 0.0
    %3113 = vmatpush2.msra.mxu0 0.0
    %3114 = vmatprep.subr.mxu0 0.0
    %3115 = vmatpush2.msra.mxu0 0.0
    %3116 = vmatprep.mubr.f32.mxu0 0.0
    %3117 = vmatmul.mubr.f32.gmra.mxu0 %v2315
    %v3118 = vpop.f32.mrf.mxu0
    %v3119 = vadd.f32 0.0, %v3118
    %v3120 = vpop.f32.mrf.mxu0
    %3121 = vmatprep.mubr.f32.mxu0 0.0
    %3122 = vmatmul.mubr.f32.gmra.mxu0 %v2318
    %v3123 = vpop.f32.mrf.mxu0
    %v3124 = vadd.f32 0.0, %v3123
    %v3125 = vpop.f32.mrf.mxu0
    %3126 = vmatprep.mubr.f32.mxu0 0.0
    %3127 = vmatmul.mubr.f32.gmra.mxu0 %v2321
    %v3128 = vpop.f32.mrf.mxu0
    %v3129 = vadd.f32 0.0, %v3128
    %v3130 = vpop.f32.mrf.mxu0
    %3131 = vmatprep.mubr.f32.mxu0 0.0
    %3132 = vmatmul.mubr.f32.gmra.mxu0 %v2324
    %v3133 = vpop.f32.mrf.mxu0
    %v3134 = vadd.f32 0.0, %v3133
    %v3135 = vpop.f32.mrf.mxu0
    %3136 = vmatprep.mubr.f32.mxu0 0.0
    %3137 = vmatmul.mubr.f32.gmra.mxu0 %v2327
    %v3138 = vpop.f32.mrf.mxu0
    %v3139 = vadd.f32 0.0, %v3138
    %v3140 = vpop.f32.mrf.mxu0
    %3141 = vmatprep.mubr.f32.mxu0 0.0
    %3142 = vmatmul.mubr.f32.gmra.mxu0 %v2330
    %v3143 = vpop.f32.mrf.mxu0
    %v3144 = vadd.f32 0.0, %v3143
    %v3145 = vpop.f32.mrf.mxu0
    %3146 = vmatprep.mubr.f32.mxu0 0.0
    %3147 = vmatmul.mubr.f32.gmra.mxu0 %v2333
    %v3148 = vpop.f32.mrf.mxu0
    %v3149 = vadd.f32 0.0, %v3148
    %v3150 = vpop.f32.mrf.mxu0
    %3151 = vmatprep.mubr.f32.mxu0 0.0
    %3152 = vmatmul.mubr.f32.gmra.mxu0 %v2336
    %v3153 = vpop.f32.mrf.mxu0
    %v3154 = vadd.f32 0.0, %v3153
    %v3155 = vpop.f32.mrf.mxu0
    %3156 = vmatprep.mubr.f32.mxu0 0.0
    %3157 = vmatmul.mubr.f32.gmra.mxu0 %v2339
    %v3158 = vpop.f32.mrf.mxu0
    %v3159 = vadd.f32 0.0, %v3158
    %v3160 = vpop.f32.mrf.mxu0
    %3161 = vmatprep.mubr.f32.mxu0 0.0
    %3162 = vmatmul.mubr.f32.gmra.mxu0 %v2342
    %v3163 = vpop.f32.mrf.mxu0
    %v3164 = vadd.f32 0.0, %v3163
    %v3165 = vpop.f32.mrf.mxu0
    %3166 = vmatprep.mubr.f32.mxu0 0.0
    %3167 = vmatmul.mubr.f32.gmra.mxu0 %v2345
    %v3168 = vpop.f32.mrf.mxu0
    %v3169 = vadd.f32 0.0, %v3168
    %v3170 = vpop.f32.mrf.mxu0
    %3171 = vmatprep.mubr.f32.mxu0 0.0
    %3172 = vmatmul.mubr.f32.gmra.mxu0 %v2348
    %v3173 = vpop.f32.mrf.mxu0
    %v3174 = vadd.f32 0.0, %v3173
    %v3175 = vpop.f32.mrf.mxu0
    %3176 = vmatprep.mubr.f32.mxu0 0.0
    %3177 = vmatmul.mubr.f32.gmra.mxu0 %v2351
    %v3178 = vpop.f32.mrf.mxu0
    %v3179 = vadd.f32 0.0, %v3178
    %v3180 = vpop.f32.mrf.mxu0
    %3181 = vmatprep.mubr.f32.mxu0 0.0
    %3182 = vmatmul.mubr.f32.gmra.mxu0 %v2354
    %v3183 = vpop.f32.mrf.mxu0
    %v3184 = vadd.f32 0.0, %v3183
    %v3185 = vpop.f32.mrf.mxu0
    %3186 = vmatprep.mubr.f32.mxu0 0.0
    %3187 = vmatmul.mubr.f32.gmra.mxu0 %v2357
    %v3188 = vpop.f32.mrf.mxu0
    %v3189 = vadd.f32 0.0, %v3188
    %v3190 = vpop.f32.mrf.mxu0
    %3191 = vmatprep.mubr.f32.mxu0 0.0
    %3192 = vmatmul.mubr.f32.gmra.mxu0 %v2360
    %v3193 = vpop.f32.mrf.mxu0
    %v3194 = vadd.f32 0.0, %v3193
    %v3195 = vpop.f32.mrf.mxu0
    %3196 = vmatprep.mubr.f32.mxu0 0.0
    %3197 = vmatmul.mubr.f32.gmra.mxu0 %v2363
    %v3198 = vpop.f32.mrf.mxu0
    %v3199 = vadd.f32 0.0, %v3198
    %v3200 = vpop.f32.mrf.mxu0
    %3201 = vmatprep.mubr.f32.mxu0 0.0
    %3202 = vmatmul.mubr.f32.gmra.mxu0 %v2366
    %v3203 = vpop.f32.mrf.mxu0
    %v3204 = vadd.f32 0.0, %v3203
    %v3205 = vpop.f32.mrf.mxu0
    %3206 = vmatprep.mubr.f32.mxu0 0.0
    %3207 = vmatmul.mubr.f32.gmra.mxu0 %v2369
    %v3208 = vpop.f32.mrf.mxu0
    %v3209 = vadd.f32 0.0, %v3208
    %v3210 = vpop.f32.mrf.mxu0
    %3211 = vmatprep.mubr.f32.mxu0 0.0
    %3212 = vmatmul.mubr.f32.gmra.mxu0 %v2372
    %v3213 = vpop.f32.mrf.mxu0
    %v3214 = vadd.f32 0.0, %v3213
    %v3215 = vpop.f32.mrf.mxu0
    %3216 = vmatprep.mubr.f32.mxu0 0.0
    %3217 = vmatmul.mubr.f32.gmra.mxu0 %v2375
    %v3218 = vpop.f32.mrf.mxu0
    %v3219 = vadd.f32 0.0, %v3218
    %v3220 = vpop.f32.mrf.mxu0
    %3221 = vmatprep.mubr.f32.mxu0 0.0
    %3222 = vmatmul.mubr.f32.gmra.mxu0 %v2378
    %v3223 = vpop.f32.mrf.mxu0
    %v3224 = vadd.f32 0.0, %v3223
    %v3225 = vpop.f32.mrf.mxu0
    %3226 = vmatprep.mubr.f32.mxu0 0.0
    %3227 = vmatmul.mubr.f32.gmra.mxu0 %v2381
    %v3228 = vpop.f32.mrf.mxu0
    %v3229 = vadd.f32 0.0, %v3228
    %v3230 = vpop.f32.mrf.mxu0
    %3231 = vmatprep.mubr.f32.mxu0 0.0
    %3232 = vmatmul.mubr.f32.gmra.mxu0 %v2384
    %v3233 = vpop.f32.mrf.mxu0
    %v3234 = vadd.f32 0.0, %v3233
    %v3235 = vpop.f32.mrf.mxu0
    %3236 = vmatprep.mubr.f32.mxu0 0.0
    %3237 = vmatmul.mubr.f32.gmra.mxu0 %v2387
    %v3238 = vpop.f32.mrf.mxu0
    %v3239 = vadd.f32 0.0, %v3238
    %v3240 = vpop.f32.mrf.mxu0
    %3241 = vmatprep.mubr.f32.mxu0 0.0
    %3242 = vmatmul.mubr.f32.gmra.mxu0 %v2390
    %v3243 = vpop.f32.mrf.mxu0
    %v3244 = vadd.f32 0.0, %v3243
    %v3245 = vpop.f32.mrf.mxu0
    %3246 = vmatprep.mubr.f32.mxu0 0.0
    %3247 = vmatmul.mubr.f32.gmra.mxu0 %v2393
    %v3248 = vpop.f32.mrf.mxu0
    %v3249 = vadd.f32 0.0, %v3248
    %v3250 = vpop.f32.mrf.mxu0
    %3251 = vmatprep.mubr.f32.mxu0 0.0
    %3252 = vmatmul.mubr.f32.gmra.mxu0 %v2396
    %v3253 = vpop.f32.mrf.mxu0
    %v3254 = vadd.f32 0.0, %v3253
    %v3255 = vpop.f32.mrf.mxu0
    %3256 = vmatprep.mubr.f32.mxu0 0.0
    %3257 = vmatmul.mubr.f32.gmra.mxu0 %v2399
    %v3258 = vpop.f32.mrf.mxu0
    %v3259 = vadd.f32 0.0, %v3258
    %v3260 = vpop.f32.mrf.mxu0
    %3261 = vmatprep.mubr.f32.mxu0 0.0
    %3262 = vmatmul.mubr.f32.gmra.mxu0 %v2402
    %v3263 = vpop.f32.mrf.mxu0
    %v3264 = vadd.f32 0.0, %v3263
    %v3265 = vpop.f32.mrf.mxu0
    %3266 = vmatprep.mubr.f32.mxu0 0.0
    %3267 = vmatmul.mubr.f32.gmra.mxu0 %v2405
    %v3268 = vpop.f32.mrf.mxu0
    %v3269 = vadd.f32 0.0, %v3268
    %v3270 = vpop.f32.mrf.mxu0
    %3271 = vmatprep.mubr.f32.mxu0 0.0
    %3272 = vmatmul.mubr.f32.gmra.mxu0 %v2408
    %v3273 = vpop.f32.mrf.mxu0
    %v3274 = vadd.f32 0.0, %v3273
    %v3275 = vpop.f32.mrf.mxu0
    %3276 = vdwg.mxu0
    %3309 = vrot.lane.b32.xlu0 %v3119, 32
    %v3310 = vpop.permute.xlu0 %3309
    %3311 = vrot.lane.b32.xlu0 %v3124, 32
    %v3312 = vpop.permute.xlu0 %3311
    %3313 = vrot.lane.b32.xlu0 %v3129, 32
    %v3314 = vpop.permute.xlu0 %3313
    %3315 = vrot.lane.b32.xlu0 %v3134, 32
    %v3316 = vpop.permute.xlu0 %3315
    %3317 = vrot.lane.b32.xlu0 %v3139, 32
    %v3318 = vpop.permute.xlu0 %3317
    %3319 = vrot.lane.b32.xlu0 %v3144, 32
    %v3320 = vpop.permute.xlu0 %3319
    %3321 = vrot.lane.b32.xlu0 %v3149, 32
    %v3322 = vpop.permute.xlu0 %3321
    %3323 = vrot.lane.b32.xlu0 %v3154, 32
    %v3324 = vpop.permute.xlu0 %3323
    %3325 = vrot.lane.b32.xlu0 %v3159, 32
    %v3326 = vpop.permute.xlu0 %3325
    %3327 = vrot.lane.b32.xlu0 %v3164, 32
    %v3328 = vpop.permute.xlu0 %3327
    %3329 = vrot.lane.b32.xlu0 %v3169, 32
    %v3330 = vpop.permute.xlu0 %3329
    %3331 = vrot.lane.b32.xlu0 %v3174, 32
    %v3332 = vpop.permute.xlu0 %3331
    %3333 = vrot.lane.b32.xlu0 %v3179, 32
    %v3334 = vpop.permute.xlu0 %3333
    %3335 = vrot.lane.b32.xlu0 %v3184, 32
    %v3336 = vpop.permute.xlu0 %3335
    %3337 = vrot.lane.b32.xlu0 %v3189, 32
    %v3338 = vpop.permute.xlu0 %3337
    %3339 = vrot.lane.b32.xlu0 %v3194, 32
    %v3340 = vpop.permute.xlu0 %3339
    %3341 = vrot.lane.b32.xlu0 %v3199, 32
    %v3342 = vpop.permute.xlu0 %3341
    %3343 = vrot.lane.b32.xlu0 %v3204, 32
    %v3344 = vpop.permute.xlu0 %3343
    %3345 = vrot.lane.b32.xlu0 %v3209, 32
    %v3346 = vpop.permute.xlu0 %3345
    %3347 = vrot.lane.b32.xlu0 %v3214, 32
    %v3348 = vpop.permute.xlu0 %3347
    %3349 = vrot.lane.b32.xlu0 %v3219, 32
    %v3350 = vpop.permute.xlu0 %3349
    %3351 = vrot.lane.b32.xlu0 %v3224, 32
    %v3352 = vpop.permute.xlu0 %3351
    %3353 = vrot.lane.b32.xlu0 %v3229, 32
    %v3354 = vpop.permute.xlu0 %3353
    %3355 = vrot.lane.b32.xlu0 %v3234, 32
    %v3356 = vpop.permute.xlu0 %3355
    %3357 = vrot.lane.b32.xlu0 %v3239, 32
    %v3358 = vpop.permute.xlu0 %3357
    %3359 = vrot.lane.b32.xlu0 %v3244, 32
    %v3360 = vpop.permute.xlu0 %3359
    %3361 = vrot.lane.b32.xlu0 %v3249, 32
    %v3362 = vpop.permute.xlu0 %3361
    %3363 = vrot.lane.b32.xlu0 %v3254, 32
    %v3364 = vpop.permute.xlu0 %3363
    %3365 = vrot.lane.b32.xlu0 %v3259, 32
    %v3366 = vpop.permute.xlu0 %3365
    %3367 = vrot.lane.b32.xlu0 %v3264, 32
    %v3368 = vpop.permute.xlu0 %3367
    %3369 = vrot.lane.b32.xlu0 %v3269, 32
    %v3370 = vpop.permute.xlu0 %3369
    %3371 = vrot.lane.b32.xlu0 %v3274, 32
    %v3372 = vpop.permute.xlu0 %3371
    %v3405 = vmul.f32 %v2179, %v3310
    %v3406 = vmul.f32 %v2180, %v3312
    %v3407 = vmul.f32 %v2181, %v3314
    %v3408 = vmul.f32 %v2182, %v3316
    %v3409 = vmul.f32 %v2183, %v3318
    %v3410 = vmul.f32 %v2184, %v3320
    %v3411 = vmul.f32 %v2185, %v3322
    %v3412 = vmul.f32 %v2186, %v3324
    %v3413 = vmul.f32 %v2187, %v3326
    %v3414 = vmul.f32 %v2188, %v3328
    %v3415 = vmul.f32 %v2189, %v3330
    %v3416 = vmul.f32 %v2190, %v3332
    %v3417 = vmul.f32 %v2191, %v3334
    %v3418 = vmul.f32 %v2192, %v3336
    %v3419 = vmul.f32 %v2193, %v3338
    %v3420 = vmul.f32 %v2194, %v3340
    %v3421 = vmul.f32 %v2195, %v3342
    %v3422 = vmul.f32 %v2196, %v3344
    %v3423 = vmul.f32 %v2197, %v3346
    %v3424 = vmul.f32 %v2198, %v3348
    %v3425 = vmul.f32 %v2199, %v3350
    %v3426 = vmul.f32 %v2200, %v3352
    %v3427 = vmul.f32 %v2201, %v3354
    %v3428 = vmul.f32 %v2202, %v3356
    %v3429 = vmul.f32 %v2203, %v3358
    %v3430 = vmul.f32 %v2204, %v3360
    %v3431 = vmul.f32 %v2205, %v3362
    %v3432 = vmul.f32 %v2206, %v3364
    %v3433 = vmul.f32 %v2207, %v3366
    %v3434 = vmul.f32 %v2208, %v3368
    %v3435 = vmul.f32 %v2209, %v3370
    %v3436 = vmul.f32 %v2210, %v3372
    %3469 = vrot.lane.b32.xlu0 %v3405, 96
    %v3470 = vpop.permute.xlu0 %3469
    %3471 = vrot.lane.b32.xlu0 %v3406, 96
    %v3472 = vpop.permute.xlu0 %3471
    %3473 = vrot.lane.b32.xlu0 %v3407, 96
    %v3474 = vpop.permute.xlu0 %3473
    %3475 = vrot.lane.b32.xlu0 %v3408, 96
    %v3476 = vpop.permute.xlu0 %3475
    %3477 = vrot.lane.b32.xlu0 %v3409, 96
    %v3478 = vpop.permute.xlu0 %3477
    %3479 = vrot.lane.b32.xlu0 %v3410, 96
    %v3480 = vpop.permute.xlu0 %3479
    %3481 = vrot.lane.b32.xlu0 %v3411, 96
    %v3482 = vpop.permute.xlu0 %3481
    %3483 = vrot.lane.b32.xlu0 %v3412, 96
    %v3484 = vpop.permute.xlu0 %3483
    %3485 = vrot.lane.b32.xlu0 %v3413, 96
    %v3486 = vpop.permute.xlu0 %3485
    %3487 = vrot.lane.b32.xlu0 %v3414, 96
    %v3488 = vpop.permute.xlu0 %3487
    %3489 = vrot.lane.b32.xlu0 %v3415, 96
    %v3490 = vpop.permute.xlu0 %3489
    %3491 = vrot.lane.b32.xlu0 %v3416, 96
    %v3492 = vpop.permute.xlu0 %3491
    %3493 = vrot.lane.b32.xlu0 %v3417, 96
    %v3494 = vpop.permute.xlu0 %3493
    %3495 = vrot.lane.b32.xlu0 %v3418, 96
    %v3496 = vpop.permute.xlu0 %3495
    %3497 = vrot.lane.b32.xlu0 %v3419, 96
    %v3498 = vpop.permute.xlu0 %3497
    %3499 = vrot.lane.b32.xlu0 %v3420, 96
    %v3500 = vpop.permute.xlu0 %3499
    %3501 = vrot.lane.b32.xlu0 %v3421, 96
    %v3502 = vpop.permute.xlu0 %3501
    %3503 = vrot.lane.b32.xlu0 %v3422, 96
    %v3504 = vpop.permute.xlu0 %3503
    %3505 = vrot.lane.b32.xlu0 %v3423, 96
    %v3506 = vpop.permute.xlu0 %3505
    %3507 = vrot.lane.b32.xlu0 %v3424, 96
    %v3508 = vpop.permute.xlu0 %3507
    %3509 = vrot.lane.b32.xlu0 %v3425, 96
    %v3510 = vpop.permute.xlu0 %3509
    %3511 = vrot.lane.b32.xlu0 %v3426, 96
    %v3512 = vpop.permute.xlu0 %3511
    %3513 = vrot.lane.b32.xlu0 %v3427, 96
    %v3514 = vpop.permute.xlu0 %3513
    %3515 = vrot.lane.b32.xlu0 %v3428, 96
    %v3516 = vpop.permute.xlu0 %3515
    %3517 = vrot.lane.b32.xlu0 %v3429, 96
    %v3518 = vpop.permute.xlu0 %3517
    %3519 = vrot.lane.b32.xlu0 %v3430, 96
    %v3520 = vpop.permute.xlu0 %3519
    %3521 = vrot.lane.b32.xlu0 %v3431, 96
    %v3522 = vpop.permute.xlu0 %3521
    %3523 = vrot.lane.b32.xlu0 %v3432, 96
    %v3524 = vpop.permute.xlu0 %3523
    %3525 = vrot.lane.b32.xlu0 %v3433, 96
    %v3526 = vpop.permute.xlu0 %3525
    %3527 = vrot.lane.b32.xlu0 %v3434, 96
    %v3528 = vpop.permute.xlu0 %3527
    %3529 = vrot.lane.b32.xlu0 %v3435, 96
    %v3530 = vpop.permute.xlu0 %3529
    %3531 = vrot.lane.b32.xlu0 %v3436, 96
    %v3532 = vpop.permute.xlu0 %3531
    %3565 = vmatprep.subr.mxu0 0.0
    %3566 = vmatpush1.msra.mxu0 %v3500
    %3567 = vmatprep.subr.mxu0 0.0
    %3568 = vmatpush1.msra.mxu0 %v3498
    %3569 = vmatprep.subr.mxu0 0.0
    %3570 = vmatpush1.msra.mxu0 %v3496
    %3571 = vmatprep.subr.mxu0 0.0
    %3572 = vmatpush1.msra.mxu0 %v3494
    %3573 = vmatprep.subr.mxu0 0.0
    %3574 = vmatpush1.msra.mxu0 %v3492
    %3575 = vmatprep.subr.mxu0 0.0
    %3576 = vmatpush1.msra.mxu0 %v3490
    %3577 = vmatprep.subr.mxu0 0.0
    %3578 = vmatpush1.msra.mxu0 %v3488
    %3579 = vmatprep.subr.mxu0 0.0
    %3580 = vmatpush1.msra.mxu0 %v3486
    %3581 = vmatprep.subr.mxu0 0.0
    %3582 = vmatpush1.msra.mxu0 %v3484
    %3583 = vmatprep.subr.mxu0 0.0
    %3584 = vmatpush1.msra.mxu0 %v3482
    %3585 = vmatprep.subr.mxu0 0.0
    %3586 = vmatpush1.msra.mxu0 %v3480
    %3587 = vmatprep.subr.mxu0 0.0
    %3588 = vmatpush1.msra.mxu0 %v3478
    %3589 = vmatprep.subr.mxu0 0.0
    %3590 = vmatpush1.msra.mxu0 %v3476
    %3591 = vmatprep.subr.mxu0 0.0
    %3592 = vmatpush1.msra.mxu0 %v3474
    %3593 = vmatprep.subr.mxu0 0.0
    %3594 = vmatpush1.msra.mxu0 %v3472
    %3595 = vmatprep.subr.mxu0 0.0
    %3596 = vmatpush1.msra.mxu0 %v3470
    %3597 = vmatprep.subr.mxu0 0.0
    %3598 = vmatpush2.msra.mxu0 %v3532
    %3599 = vmatprep.subr.mxu0 0.0
    %3600 = vmatpush2.msra.mxu0 %v3530
    %3601 = vmatprep.subr.mxu0 0.0
    %3602 = vmatpush2.msra.mxu0 %v3528
    %3603 = vmatprep.subr.mxu0 0.0
    %3604 = vmatpush2.msra.mxu0 %v3526
    %3605 = vmatprep.subr.mxu0 0.0
    %3606 = vmatpush2.msra.mxu0 %v3524
    %3607 = vmatprep.subr.mxu0 0.0
    %3608 = vmatpush2.msra.mxu0 %v3522
    %3609 = vmatprep.subr.mxu0 0.0
    %3610 = vmatpush2.msra.mxu0 %v3520
    %3611 = vmatprep.subr.mxu0 0.0
    %3612 = vmatpush2.msra.mxu0 %v3518
    %3613 = vmatprep.subr.mxu0 0.0
    %3614 = vmatpush2.msra.mxu0 %v3516
    %3615 = vmatprep.subr.mxu0 0.0
    %3616 = vmatpush2.msra.mxu0 %v3514
    %3617 = vmatprep.subr.mxu0 0.0
    %3618 = vmatpush2.msra.mxu0 %v3512
    %3619 = vmatprep.subr.mxu0 0.0
    %3620 = vmatpush2.msra.mxu0 %v3510
    %3621 = vmatprep.subr.mxu0 0.0
    %3622 = vmatpush2.msra.mxu0 %v3508
    %3623 = vmatprep.subr.mxu0 0.0
    %3624 = vmatpush2.msra.mxu0 %v3506
    %3625 = vmatprep.subr.mxu0 0.0
    %3626 = vmatpush2.msra.mxu0 %v3504
    %3627 = vmatprep.subr.mxu0 0.0
    %3628 = vmatpush2.msra.mxu0 %v3502
    %3629 = vmatprep.mubr.f32.mxu0 %v154
    %3630 = vmatmul.mubr.f32.gmra.mxu0 %v153
    %v3631 = vpop.f32.mrf.mxu0
    %v3632 = vadd.f32 0.0, %v3631
    %v3633 = vpop.f32.mrf.mxu0
    %3634 = vmatprep.mubr.f32.mxu0 %v156
    %3635 = vmatmul.mubr.f32.gmra.mxu0 %v155
    %v3636 = vpop.f32.mrf.mxu0
    %v3637 = vadd.f32 0.0, %v3636
    %v3638 = vpop.f32.mrf.mxu0
    %3639 = vdwg.mxu0
    %v3640 = vadd.f32 %v2948, %v3632
    %v3641 = vadd.f32 %v2949, %v3637
    %v3642 = vld [vmem:[%s19] sm:$0xff]
    %v3643 = vld [vmem:[%s19 + $0x8] sm:$0xff]
    %v3644 = vld [vmem:[%s19 + $0x10] sm:$0xff]
    %v3645 = vld [vmem:[%s19 + $0x18] sm:$0xff]
    %v3646 = vld [vmem:[%s20] sm:$0x1]
    %v3648 = vlaneseq
    %v3649 = vshrl.u32 %v3648, 7
    %v3650 = vsub.s32 0, %v3649
    %v3651 = vrot.slane %v3646, %v3650
    %v3654 = vsel %vm2222, %v3640, 0
    %v3657 = vsel %vm2222, %v3641, 0
    %3659 = vmatprep.subr.mxu0 0.0
    %3660 = vmatpush1.msra.mxu0 0.0
    %3661 = vmatprep.subr.mxu0 0.0
    %3662 = vmatpush1.msra.mxu0 0.0
    %3663 = vmatprep.subr.mxu0 0.0
    %3664 = vmatpush1.msra.mxu0 0.0
    %3665 = vmatprep.subr.mxu0 0.0
    %3666 = vmatpush1.msra.mxu0 0.0
    %3667 = vmatprep.subr.mxu0 0.0
    %3668 = vmatpush1.msra.mxu0 0.0
    %3669 = vmatprep.subr.mxu0 0.0
    %3670 = vmatpush1.msra.mxu0 0.0
    %3671 = vmatprep.subr.mxu0 0.0
    %3672 = vmatpush1.msra.mxu0 0.0
    %3673 = vmatprep.subr.mxu0 0.0
    %3674 = vmatpush1.msra.mxu0 0.0
    %3675 = vmatprep.subr.mxu0 0.0
    %3676 = vmatpush1.msra.mxu0 0.0
    %3677 = vmatprep.subr.mxu0 0.0
    %3678 = vmatpush1.msra.mxu0 0.0
    %3679 = vmatprep.subr.mxu0 0.0
    %3680 = vmatpush1.msra.mxu0 0.0
    %3681 = vmatprep.subr.mxu0 0.0
    %3682 = vmatpush1.msra.mxu0 0.0
    %3683 = vmatprep.subr.mxu0 0.0
    %3684 = vmatpush1.msra.mxu0 %v3645
    %3685 = vmatprep.subr.mxu0 0.0
    %3686 = vmatpush1.msra.mxu0 %v3644
    %3687 = vmatprep.subr.mxu0 0.0
    %3688 = vmatpush1.msra.mxu0 %v3643
    %3689 = vmatprep.subr.mxu0 0.0
    %3690 = vmatpush1.msra.mxu0 %v3642
    %3691 = vmatprep.subr.mxu0 0.0
    %3692 = vmatpush2.msra.mxu0 0.0
    %3693 = vmatprep.subr.mxu0 0.0
    %3694 = vmatpush2.msra.mxu0 0.0
    %3695 = vmatprep.subr.mxu0 0.0
    %3696 = vmatpush2.msra.mxu0 0.0
    %3697 = vmatprep.subr.mxu0 0.0
    %3698 = vmatpush2.msra.mxu0 0.0
    %3699 = vmatprep.subr.mxu0 0.0
    %3700 = vmatpush2.msra.mxu0 0.0
    %3701 = vmatprep.subr.mxu0 0.0
    %3702 = vmatpush2.msra.mxu0 0.0
    %3703 = vmatprep.subr.mxu0 0.0
    %3704 = vmatpush2.msra.mxu0 0.0
    %3705 = vmatprep.subr.mxu0 0.0
    %3706 = vmatpush2.msra.mxu0 0.0
    %3707 = vmatprep.subr.mxu0 0.0
    %3708 = vmatpush2.msra.mxu0 0.0
    %3709 = vmatprep.subr.mxu0 0.0
    %3710 = vmatpush2.msra.mxu0 0.0
    %3711 = vmatprep.subr.mxu0 0.0
    %3712 = vmatpush2.msra.mxu0 0.0
    %3713 = vmatprep.subr.mxu0 0.0
    %3714 = vmatpush2.msra.mxu0 0.0
    %3715 = vmatprep.subr.mxu0 0.0
    %3716 = vmatpush2.msra.mxu0 0.0
    %3717 = vmatprep.subr.mxu0 0.0
    %3718 = vmatpush2.msra.mxu0 0.0
    %3719 = vmatprep.subr.mxu0 0.0
    %3720 = vmatpush2.msra.mxu0 0.0
    %3721 = vmatprep.subr.mxu0 0.0
    %3722 = vmatpush2.msra.mxu0 0.0
    %3723 = vmatprep.mubr.f32.mxu0 0.0
    %3724 = vmatmul.mubr.f32.gmra.mxu0 %v3654
    %v3725 = vpop.f32.mrf.mxu0
    %v3726 = vadd.f32 %v3651, %v3725
    %v3727 = vpop.f32.mrf.mxu0
    %3728 = vmatprep.mubr.f32.mxu0 0.0
    %3729 = vmatmul.mubr.f32.gmra.mxu0 %v3657
    %v3730 = vpop.f32.mrf.mxu0
    %v3731 = vadd.f32 %v3651, %v3730
    %v3732 = vpop.f32.mrf.mxu0
    %3733 = vdwg.mxu0
    %v3734 = vmul.f32 %v3726, 0.5
    %v3735 = vmul.f32 %v3731, 0.5
    %v3736 = vmul.f32 %v3726, 0.70710677
    %v3737 = vmul.f32 %v3731, 0.70710677
    %v3738 = verf.f32.pop %v3736
    %v3739 = verf.f32.pop %v3737
    %v3740 = vadd.f32 %v3738, 1.0
    %v3741 = vadd.f32 %v3739, 1.0
    %v3742 = vmul.f32 %v3734, %v3740
    %v3743 = vmul.f32 %v3735, %v3741
    %v3744 = vld [vmem:[%s21] sm:$0xff]
    %v3745 = vld [vmem:[%s21 + $0x8] sm:$0xff]
    %v3746 = vld [vmem:[%s21 + $0x10] sm:$0xff]
    %v3747 = vld [vmem:[%s21 + $0x18] sm:$0xff]
    %v3748 = vld [vmem:[%s22] sm:$0x1]
    %v3750 = vlaneseq
    %v3751 = vshrl.u32 %v3750, 7
    %v3752 = vsub.s32 0, %v3751
    %v3753 = vrot.slane %v3748, %v3752
    %v3756 = vsel %vm2222, %v3742, 0
    %v3759 = vsel %vm2222, %v3743, 0
    %3761 = vmatprep.subr.mxu0 0.0
    %3762 = vmatpush1.msra.mxu0 0.0
    %3763 = vmatprep.subr.mxu0 0.0
    %3764 = vmatpush1.msra.mxu0 0.0
    %3765 = vmatprep.subr.mxu0 0.0
    %3766 = vmatpush1.msra.mxu0 0.0
    %3767 = vmatprep.subr.mxu0 0.0
    %3768 = vmatpush1.msra.mxu0 0.0
    %3769 = vmatprep.subr.mxu0 0.0
    %3770 = vmatpush1.msra.mxu0 0.0
    %3771 = vmatprep.subr.mxu0 0.0
    %3772 = vmatpush1.msra.mxu0 0.0
    %3773 = vmatprep.subr.mxu0 0.0
    %3774 = vmatpush1.msra.mxu0 0.0
    %3775 = vmatprep.subr.mxu0 0.0
    %3776 = vmatpush1.msra.mxu0 0.0
    %3777 = vmatprep.subr.mxu0 0.0
    %3778 = vmatpush1.msra.mxu0 0.0
    %3779 = vmatprep.subr.mxu0 0.0
    %3780 = vmatpush1.msra.mxu0 0.0
    %3781 = vmatprep.subr.mxu0 0.0
    %3782 = vmatpush1.msra.mxu0 0.0
    %3783 = vmatprep.subr.mxu0 0.0
    %3784 = vmatpush1.msra.mxu0 0.0
    %3785 = vmatprep.subr.mxu0 0.0
    %3786 = vmatpush1.msra.mxu0 %v3747
    %3787 = vmatprep.subr.mxu0 0.0
    %3788 = vmatpush1.msra.mxu0 %v3746
    %3789 = vmatprep.subr.mxu0 0.0
    %3790 = vmatpush1.msra.mxu0 %v3745
    %3791 = vmatprep.subr.mxu0 0.0
    %3792 = vmatpush1.msra.mxu0 %v3744
    %3793 = vmatprep.subr.mxu0 0.0
    %3794 = vmatpush2.msra.mxu0 0.0
    %3795 = vmatprep.subr.mxu0 0.0
    %3796 = vmatpush2.msra.mxu0 0.0
    %3797 = vmatprep.subr.mxu0 0.0
    %3798 = vmatpush2.msra.mxu0 0.0
    %3799 = vmatprep.subr.mxu0 0.0
    %3800 = vmatpush2.msra.mxu0 0.0
    %3801 = vmatprep.subr.mxu0 0.0
    %3802 = vmatpush2.msra.mxu0 0.0
    %3803 = vmatprep.subr.mxu0 0.0
    %3804 = vmatpush2.msra.mxu0 0.0
    %3805 = vmatprep.subr.mxu0 0.0
    %3806 = vmatpush2.msra.mxu0 0.0
    %3807 = vmatprep.subr.mxu0 0.0
    %3808 = vmatpush2.msra.mxu0 0.0
    %3809 = vmatprep.subr.mxu0 0.0
    %3810 = vmatpush2.msra.mxu0 0.0
    %3811 = vmatprep.subr.mxu0 0.0
    %3812 = vmatpush2.msra.mxu0 0.0
    %3813 = vmatprep.subr.mxu0 0.0
    %3814 = vmatpush2.msra.mxu0 0.0
    %3815 = vmatprep.subr.mxu0 0.0
    %3816 = vmatpush2.msra.mxu0 0.0
    %3817 = vmatprep.subr.mxu0 0.0
    %3818 = vmatpush2.msra.mxu0 0.0
    %3819 = vmatprep.subr.mxu0 0.0
    %3820 = vmatpush2.msra.mxu0 0.0
    %3821 = vmatprep.subr.mxu0 0.0
    %3822 = vmatpush2.msra.mxu0 0.0
    %3823 = vmatprep.subr.mxu0 0.0
    %3824 = vmatpush2.msra.mxu0 0.0
    %3825 = vmatprep.mubr.f32.mxu0 0.0
    %3826 = vmatmul.mubr.f32.gmra.mxu0 %v3756
    %v3827 = vpop.f32.mrf.mxu0
    %v3828 = vadd.f32 %v3753, %v3827
    %v3829 = vpop.f32.mrf.mxu0
    %3830 = vmatprep.mubr.f32.mxu0 0.0
    %3831 = vmatmul.mubr.f32.gmra.mxu0 %v3759
    %v3832 = vpop.f32.mrf.mxu0
    %v3833 = vadd.f32 %v3753, %v3832
    %v3834 = vpop.f32.mrf.mxu0
    %3835 = vdwg.mxu0
    %v3836 = vmul.f32 %v3828, 0.5
    %v3837 = vmul.f32 %v3833, 0.5
    %v3838 = vmul.f32 %v3828, 0.70710677
    %v3839 = vmul.f32 %v3833, 0.70710677
    %v3840 = verf.f32.pop %v3838
    %v3841 = verf.f32.pop %v3839
    %v3842 = vadd.f32 %v3840, 1.0
    %v3843 = vadd.f32 %v3841, 1.0
    %v3844 = vmul.f32 %v3836, %v3842
    %v3845 = vmul.f32 %v3837, %v3843
    %v3846 = vadd.f32 %v3640, %v3844
    %v3847 = vadd.f32 %v3641, %v3845
    %v3848 = vsel %vm2222, %v3846, 0.0
    %v3849 = vsel %vm2222, %v3847, 0.0
    %v3850 = vadd.f32 %v3848, %v3849
    %v3851 = vrot.slane %v3850, 4
    %v3852 = vadd.f32 %v3850, %v3851
    %v3853 = vrot.slane %v3852, 2
    %v3854 = vadd.f32 %v3852, %v3853
    %v3855 = vrot.slane %v3854, 1
    %v3856 = vadd.f32 %v3854, %v3855
    %v3857 = vld [vmem:[%s23] sm:$0xff]
    %v3858 = vld [vmem:[%s23 + $0x8] sm:$0xff]
    %v3859 = vld [vmem:[%s23 + $0x10] sm:$0xff]
    %v3860 = vld [vmem:[%s23 + $0x18] sm:$0xff]
    %v3861 = vld [vmem:[%s24] sm:$0x1]
    %v3863 = vsel %vm2222, %v3856, 0
    %3865 = vmatprep.subr.mxu0 0.0
    %3866 = vmatpush1.msra.mxu0 0.0
    %3867 = vmatprep.subr.mxu0 0.0
    %3868 = vmatpush1.msra.mxu0 0.0
    %3869 = vmatprep.subr.mxu0 0.0
    %3870 = vmatpush1.msra.mxu0 0.0
    %3871 = vmatprep.subr.mxu0 0.0
    %3872 = vmatpush1.msra.mxu0 0.0
    %3873 = vmatprep.subr.mxu0 0.0
    %3874 = vmatpush1.msra.mxu0 0.0
    %3875 = vmatprep.subr.mxu0 0.0
    %3876 = vmatpush1.msra.mxu0 0.0
    %3877 = vmatprep.subr.mxu0 0.0
    %3878 = vmatpush1.msra.mxu0 0.0
    %3879 = vmatprep.subr.mxu0 0.0
    %3880 = vmatpush1.msra.mxu0 0.0
    %3881 = vmatprep.subr.mxu0 0.0
    %3882 = vmatpush1.msra.mxu0 0.0
    %3883 = vmatprep.subr.mxu0 0.0
    %3884 = vmatpush1.msra.mxu0 0.0
    %3885 = vmatprep.subr.mxu0 0.0
    %3886 = vmatpush1.msra.mxu0 0.0
    %3887 = vmatprep.subr.mxu0 0.0
    %3888 = vmatpush1.msra.mxu0 0.0
    %3889 = vmatprep.subr.mxu0 0.0
    %3890 = vmatpush1.msra.mxu0 %v3860
    %3891 = vmatprep.subr.mxu0 0.0
    %3892 = vmatpush1.msra.mxu0 %v3859
    %3893 = vmatprep.subr.mxu0 0.0
    %3894 = vmatpush1.msra.mxu0 %v3858
    %3895 = vmatprep.subr.mxu0 0.0
    %3896 = vmatpush1.msra.mxu0 %v3857
    %3897 = vmatprep.subr.mxu0 0.0
    %3898 = vmatpush2.msra.mxu0 0.0
    %3899 = vmatprep.subr.mxu0 0.0
    %3900 = vmatpush2.msra.mxu0 0.0
    %3901 = vmatprep.subr.mxu0 0.0
    %3902 = vmatpush2.msra.mxu0 0.0
    %3903 = vmatprep.subr.mxu0 0.0
    %3904 = vmatpush2.msra.mxu0 0.0
    %3905 = vmatprep.subr.mxu0 0.0
    %3906 = vmatpush2.msra.mxu0 0.0
    %3907 = vmatprep.subr.mxu0 0.0
    %3908 = vmatpush2.msra.mxu0 0.0
    %3909 = vmatprep.subr.mxu0 0.0
    %3910 = vmatpush2.msra.mxu0 0.0
    %3911 = vmatprep.subr.mxu0 0.0
    %3912 = vmatpush2.msra.mxu0 0.0
    %3913 = vmatprep.subr.mxu0 0.0
    %3914 = vmatpush2.msra.mxu0 0.0
    %3915 = vmatprep.subr.mxu0 0.0
    %3916 = vmatpush2.msra.mxu0 0.0
    %3917 = vmatprep.subr.mxu0 0.0
    %3918 = vmatpush2.msra.mxu0 0.0
    %3919 = vmatprep.subr.mxu0 0.0
    %3920 = vmatpush2.msra.mxu0 0.0
    %3921 = vmatprep.subr.mxu0 0.0
    %3922 = vmatpush2.msra.mxu0 0.0
    %3923 = vmatprep.subr.mxu0 0.0
    %3924 = vmatpush2.msra.mxu0 0.0
    %3925 = vmatprep.subr.mxu0 0.0
    %3926 = vmatpush2.msra.mxu0 0.0
    %3927 = vmatprep.subr.mxu0 0.0
    %3928 = vmatpush2.msra.mxu0 0.0
    %3929 = vmatprep.mubr.f32.mxu0 0.0
    %3930 = vmatmul.mubr.f32.gmra.mxu0 %v3863
    %v3931 = vpop.f32.mrf.mxu0
    %v3932 = vadd.f32 %v3861, %v3931
    %v3933 = vpop.f32.mrf.mxu0
    %3934 = vdwg.mxu0
    %v3935 = vmul.f32 %v3932, 0.5
    %v3936 = vmul.f32 %v3932, 0.70710677
    %v3937 = verf.f32.pop %v3936
    %v3938 = vadd.f32 %v3937, 1.0
    %v3939 = vmul.f32 %v3935, %v3938
    %v3940 = vld [vmem:[%s25] sm:$0xff]
    %v3941 = vld [vmem:[%s25 + $0x8] sm:$0xff]
    %v3942 = vld [vmem:[%s25 + $0x10] sm:$0xff]
    %v3943 = vld [vmem:[%s25 + $0x18] sm:$0xff]
    %v3944 = vld [vmem:[%s26] sm:$0x1]
    %v3946 = vsel %vm2222, %v3939, 0
    %3948 = vmatprep.subr.mxu0 0.0
    %3949 = vmatpush1.msra.mxu0 0.0
    %3950 = vmatprep.subr.mxu0 0.0
    %3951 = vmatpush1.msra.mxu0 0.0
    %3952 = vmatprep.subr.mxu0 0.0
    %3953 = vmatpush1.msra.mxu0 0.0
    %3954 = vmatprep.subr.mxu0 0.0
    %3955 = vmatpush1.msra.mxu0 0.0
    %3956 = vmatprep.subr.mxu0 0.0
    %3957 = vmatpush1.msra.mxu0 0.0
    %3958 = vmatprep.subr.mxu0 0.0
    %3959 = vmatpush1.msra.mxu0 0.0
    %3960 = vmatprep.subr.mxu0 0.0
    %3961 = vmatpush1.msra.mxu0 0.0
    %3962 = vmatprep.subr.mxu0 0.0
    %3963 = vmatpush1.msra.mxu0 0.0
    %3964 = vmatprep.subr.mxu0 0.0
    %3965 = vmatpush1.msra.mxu0 0.0
    %3966 = vmatprep.subr.mxu0 0.0
    %3967 = vmatpush1.msra.mxu0 0.0
    %3968 = vmatprep.subr.mxu0 0.0
    %3969 = vmatpush1.msra.mxu0 0.0
    %3970 = vmatprep.subr.mxu0 0.0
    %3971 = vmatpush1.msra.mxu0 0.0
    %3972 = vmatprep.subr.mxu0 0.0
    %3973 = vmatpush1.msra.mxu0 %v3943
    %3974 = vmatprep.subr.mxu0 0.0
    %3975 = vmatpush1.msra.mxu0 %v3942
    %3976 = vmatprep.subr.mxu0 0.0
    %3977 = vmatpush1.msra.mxu0 %v3941
    %3978 = vmatprep.subr.mxu0 0.0
    %3979 = vmatpush1.msra.mxu0 %v3940
    %3980 = vmatprep.subr.mxu0 0.0
    %3981 = vmatpush2.msra.mxu0 0.0
    %3982 = vmatprep.subr.mxu0 0.0
    %3983 = vmatpush2.msra.mxu0 0.0
    %3984 = vmatprep.subr.mxu0 0.0
    %3985 = vmatpush2.msra.mxu0 0.0
    %3986 = vmatprep.subr.mxu0 0.0
    %3987 = vmatpush2.msra.mxu0 0.0
    %3988 = vmatprep.subr.mxu0 0.0
    %3989 = vmatpush2.msra.mxu0 0.0
    %3990 = vmatprep.subr.mxu0 0.0
    %3991 = vmatpush2.msra.mxu0 0.0
    %3992 = vmatprep.subr.mxu0 0.0
    %3993 = vmatpush2.msra.mxu0 0.0
    %3994 = vmatprep.subr.mxu0 0.0
    %3995 = vmatpush2.msra.mxu0 0.0
    %3996 = vmatprep.subr.mxu0 0.0
    %3997 = vmatpush2.msra.mxu0 0.0
    %3998 = vmatprep.subr.mxu0 0.0
    %3999 = vmatpush2.msra.mxu0 0.0
    %4000 = vmatprep.subr.mxu0 0.0
    %4001 = vmatpush2.msra.mxu0 0.0
    %4002 = vmatprep.subr.mxu0 0.0
    %4003 = vmatpush2.msra.mxu0 0.0
    %4004 = vmatprep.subr.mxu0 0.0
    %4005 = vmatpush2.msra.mxu0 0.0
    %4006 = vmatprep.subr.mxu0 0.0
    %4007 = vmatpush2.msra.mxu0 0.0
    %4008 = vmatprep.subr.mxu0 0.0
    %4009 = vmatpush2.msra.mxu0 0.0
    %4010 = vmatprep.subr.mxu0 0.0
    %4011 = vmatpush2.msra.mxu0 0.0
    %4012 = vmatprep.mubr.f32.mxu0 0.0
    %4013 = vmatmul.mubr.f32.gmra.mxu0 %v3946
    %v4014 = vpop.f32.mrf.mxu0
    %v4015 = vadd.f32 %v3944, %v4014
    %v4016 = vpop.f32.mrf.mxu0
    %4017 = vdwg.mxu0
    %vm4018 = vcmask 24576
    %4019 = vst.msk [vmem:[#allocation2] sm:$0x1] %vm4018, %v4015
    // Predicated region
    $region110: #{tpu_custom_call.1} parent=1 // pred_check
      _
    $region111: #{tpu_custom_call.1} parent=1 // pred_check_branch
      %4021 = sbr.rel (0) target = $region113
    $region112: #{tpu_custom_call.1} parent=1 // pred_region
      %s4023 = ssub.s32 16, 16
      %4024 = vsyncadd [#allocation3], %s4023
      %s4026 = sshll.u32 [#allocation2], 4
      %s4027 = int_to_ptr.vmem [resolvable:$true] %s4026
      %4029 = dma.vmem_to_hbm [thread:$0]  %s4027, 16, %s27, [#allocation3]
    $region113: #{tpu_custom_call.1} parent=1 // pred_fallthru
      _
    // Predicated region
    $region114: #{tpu_custom_call.1} parent=1 // pred_check
      _
    $region115: #{tpu_custom_call.1} parent=1 // pred_check_branch
      %4031 = sbr.rel (0) target = $region117
    $region116: #{tpu_custom_call.1} parent=1 // pred_region
      %4032 = dma.done [#allocation3], 16
    $region117: #{tpu_custom_call.1} parent=1 // pred_fallthru
      _
    %4033 = vsyncpa [#allocation3], 1

</llo_original>
